<compile_context>
chip_gen: v6e
topology: v6e:2x2x1
jax: 0.10.0
libtpu: 0.0.40
codegen_flags: <defaults>
</compile_context>

<pallas_src>
import functools
import math
import numpy as np
import jax
import jax.numpy as jnp
from jax import lax
from jax.experimental import pallas as pl
from jax.experimental.pallas import tpu as pltpu

N_REGIONS = 116   # fixed by nn.BatchNorm1d(116) and w = Parameter(116, 116)
KSIZE1 = 10
KSIZE2 = 15
BN_EPS = 1e-5
LANE = 128        # lane-dense padded channel count (MXU / store efficiency)
SUB = 16          # sublane tile for bf16 operands (covers f32's 8 as well)


def _round_up(n, m):
    return ((n + m - 1) // m) * m


def _pad_rows(v, rows):
    """Zero-pad axis 1 of a (B, T, C) value up to `rows` rows (static).
    No-op when already long enough; when needed the pad offset is a multiple
    of the sublane tile, so it is a pure sublane-offset copy."""
    b, t, c = v.shape
    if t >= rows:
        return v
    return jnp.concatenate([v, jnp.zeros((b, rows - t, c), v.dtype)], axis=1)


def _conv1d_im2col(x_bf, w_ref, b_ref, ksize, l_out_p):
    """Valid stride-1 Conv1d as ONE MXU matmul (im2col, batch folded into M).

    x_bf  : (B, T, 128) bf16 channels-last, T >= l_out_p + ksize - 1
    w_ref : (ksize*128, 128) bf16, row k*128 + c  <->  tap k, in-channel c
    b_ref : (1, 128) f32
    Returns (B, l_out_p, 128) f32; rows >= the true output length are finite
    junk and must be ignored/masked by the caller.
    """
    B, _, cin = x_bf.shape
    cout = w_ref.shape[1]
    # im2col: concat the ksize shifted 128-lane windows along channels.
    a = jnp.concatenate([x_bf[:, k:k + l_out_p, :] for k in range(ksize)],
                        axis=-1)                       # (B, l_out_p, ksize*128)
    # l_out_p is a multiple of the sublane tile -> relayout-free (B, L) merge.
    a = a.reshape(B * l_out_p, ksize * cin)
    y = jnp.dot(a, w_ref[...], preferred_element_type=jnp.float32) + b_ref[...]
    return y.reshape(B, l_out_p, cout)


def _sigcnn_kernel(x_ref, w1_ref, b1_ref, w2_ref, b2_ref,
                   g1_ref, be1_ref, wmat_ref, g2_ref, be2_ref,
                   out_ref, l1_ref, *, L, C_real):
    # layouts (all channel dims pre-padded to 128 lanes, pads exactly zero):
    #   x_ref   (B, L1p+K1-1, 128) f32  channels-last; rows >= L are zero pad
    #   w1_ref  (K1*128, 128)      bf16 im2col conv1 weight
    #   b1_ref  (1, 128)           f32
    #   w2_ref  (K2*128, 128)      bf16 im2col conv2 weight
    #   b2_ref  (1, 128)           f32
    #   g1/be1  (1, 1, 128)        f32  BatchNorm1d(116) affine (zero-padded)
    #   wmat    (128, 128)         f32  learnable adjacency (zero-padded)
    #   g2/be2  (1, 128)           f32  bn2 affine (zero-padded)
    #   out_ref (B, 128, 128)      f32  tile-dense; wrapper slices to 116x116
    #   l1_ref  (1, 1)             f32
    x = x_ref[...]
    B, _, CP = x.shape
    K1 = w1_ref.shape[0] // CP
    K2 = w2_ref.shape[0] // CP
    L1 = L - K1 + 1
    L2 = L1 - K2 + 1
    L1p = _round_up(L1, SUB)
    L2p = _round_up(L2, SUB)

    # ---- self.bn : BatchNorm1d, training-mode batch stats (biased var) ----
    # Statistics over the real L rows only (pad rows excluded); fused single
    # pass.  Pad channels are all-zero with zero g1/be1 -> stay exactly 0.
    xr = x[:, :L, :]
    mu = jnp.mean(xr, axis=(0, 1), keepdims=True)                 # (1, 1, 128)
    ex2 = jnp.mean(xr * xr, axis=(0, 1), keepdims=True)
    var = ex2 - mu * mu
    xb = ((x - mu) * lax.rsqrt(var + BN_EPS) * g1_ref[...] + be1_ref[...]
          ).astype(jnp.bfloat16)          # bf16 only at the MXU boundary

    # ---- conv1 / conv2 : one im2col MXU matmul each, batch folded into M ----
    y1 = _conv1d_im2col(xb, w1_ref, b1_ref, K1, L1p)              # (B, L1p, 128)
    y1b = _pad_rows(y1.astype(jnp.bfloat16), L2p + K2 - 1)
    y2 = _conv1d_im2col(y1b, w2_ref, b2_ref, K2, L2p)             # (B, L2p, 128)

    # ---- cos_similar(y, y): masked-padded Gram + rsqrt normalization ----
    # Zero the junk pad rows (>= L2) instead of slicing: keeps the Gram
    # contraction dim tile-aligned (L2p multiple of 16).
    t_idx = lax.broadcasted_iota(jnp.int32, (L2p, 1), 0)
    y2m = jnp.where((t_idx < L2)[None], y2, 0.0)                  # (B, L2p, 128) f32
    normsq = jnp.sum(y2m * y2m, axis=1)                           # (B, 128) f32
    yb = y2m.astype(jnp.bfloat16)
    gram = jnp.einsum('btn,btm->bnm', yb, yb,
                      preferred_element_type=jnp.float32)         # (B, 128, 128)
    inv = jnp.where(normsq > 0.0, lax.rsqrt(normsq), 0.0)         # zero-norm -> 0
    sim = gram * inv[:, :, None] * inv[:, None, :]

    # ---- w path: _normalize -> bn2 (training stats) -> relu -> symmetrize ----
    wm = wmat_ref[...]                                            # (128, 128)
    rowsum = jnp.sum(wm, axis=1, keepdims=True)                   # (128, 1)
    r_inv = lax.rsqrt(rowsum)                                     # rowsum^-1/2
    r_inv = jnp.where(jnp.isinf(r_inv), 0.0, r_inv)               # pad rows -> 0
    wn = (r_inv * wm) * jnp.transpose(r_inv)                      # D^-1/2 W D^-1/2
    # bn2 batch stats over the 116 real rows (pad rows of wn are exactly 0).
    row_i = lax.broadcasted_iota(jnp.int32, (CP, 1), 0)
    rmask = (row_i < C_real).astype(jnp.float32)                  # (128, 1)
    inv_n = 1.0 / float(C_real)
    mu2 = jnp.sum(wn, axis=0, keepdims=True) * inv_n              # (1, 128)
    var2 = jnp.sum(((wn - mu2) ** 2) * rmask, axis=0, keepdims=True) * inv_n
    wb = (wn - mu2) * lax.rsqrt(var2 + BN_EPS) * g2_ref[...] + be2_ref[...]
    wb = jnp.maximum(wb, 0.0)                                     # relu
    wb = wb * rmask                        # zero the pad rows (affine junk)
    wf = (wb + jnp.transpose(wb)) * 0.5    # (128,128); pad rows & cols stay 0

    # l1 = mean over the 116 real rows of per-row L1 norm (pure f32 path)
    row_l1 = jnp.sum(jnp.abs(wf), axis=1, keepdims=True)          # (128, 1)
    l1_ref[...] = jnp.sum(row_l1, axis=0, keepdims=True) * inv_n  # (1, 1)

    # ---- out = w * sim, fully tile-dense store ----
    out_ref[...] = wf[None, :, :] * sim


def prepare_params(w1, b1, w2, b2, g1, be1, wmat, g2, be2):
    """One-time parameter layout prep (hoisted out of the per-call path):
    im2col weight layout, in/out-channels zero-padded to 128 lanes, bf16 for
    the MXU; BN/bias/adjacency params zero-padded & reshaped for in-kernel
    broadcasting."""
    o1, c_in, k1 = w1.shape
    o2, o1b, k2 = w2.shape
    assert c_in == N_REGIONS and o1b == o1
    # .reshape(B, in_channel, -1) after conv2 is only the identity when
    # conv2 out_channels == in_channel (the configuration BrainUSL uses).
    assert o2 == c_in, "SigCNN assumes out_channel == in_channel (=116)"
    op = LANE
    # conv1: (Cout, Cin, K) -> (K, Cin, Cout), pad Cin & Cout to 128 lanes.
    w1p = jnp.transpose(w1, (2, 1, 0))
    w1p = jnp.pad(w1p, ((0, 0), (0, op - c_in), (0, op - o1)))
    w1p = w1p.reshape(k1 * op, op).astype(jnp.bfloat16)           # [k*128+c, o]
    b1p = jnp.pad(b1, (0, op - o1)).reshape(1, op).astype(jnp.float32)
    w2p = jnp.transpose(w2, (2, 1, 0))                            # (K2, O1, O2)
    w2p = jnp.pad(w2p, ((0, 0), (0, op - o1), (0, op - o2)))
    w2p = w2p.reshape(k2 * op, op).astype(jnp.bfloat16)           # [k*128+c, o]
    b2p = jnp.pad(b2, (0, op - o2)).reshape(1, op).astype(jnp.float32)
    g1r = jnp.pad(g1, (0, op - c_in)).reshape(1, 1, op).astype(jnp.float32)
    be1r = jnp.pad(be1, (0, op - c_in)).reshape(1, 1, op).astype(jnp.float32)
    wmatp = jnp.pad(wmat, ((0, op - N_REGIONS), (0, op - N_REGIONS))
                    ).astype(jnp.float32)
    g2r = jnp.pad(g2, (0, op - N_REGIONS)).reshape(1, op).astype(jnp.float32)
    be2r = jnp.pad(be2, (0, op - N_REGIONS)).reshape(1, op).astype(jnp.float32)
    return (w1p, b1p, w2p, b2p, g1r, be1r, wmatp, g2r, be2r)


def sigcnn_forward(x, params):
    """x: (B, 116, L) NCW f32 (PyTorch layout); params from prepare_params.
    Returns ((B, 116, 116) f32, scalar l1)."""
    w1p, b1p, w2p, b2p, g1r, be1r, wmatp, g2r, be2r = params
    B, C, L = x.shape
    assert C == N_REGIONS
    L1 = L - KSIZE1 + 1
    L1p = _round_up(L1, SUB)
    rows = L1p + KSIZE1 - 1
    # NCW -> NLC, time padded to `rows`, channels padded to 128 lanes.
    # Done once in XLA (fused with the transpose) so the kernel's im2col
    # concat never pads at an unaligned sublane offset.
    x_cl = jnp.transpose(x, (0, 2, 1))
    x_cl = jnp.pad(x_cl, ((0, 0), (0, rows - L), (0, LANE - C)))

    kernel = functools.partial(_sigcnn_kernel, L=L, C_real=C)
    out_p, l1 = pl.pallas_call(
        kernel,
        out_shape=(jax.ShapeDtypeStruct((B, LANE, LANE), jnp.float32),
                   jax.ShapeDtypeStruct((1, 1), jnp.float32)),
        # Whole problem (~2.5 MiB live) fits VMEM on v5e/v6e/v7x -> single
        # invocation, full-array blocks, no grid.  (A per-batch "parallel"
        # grid only pays off at production batch sizes; see header TODO.)
        in_specs=[pl.BlockSpec(memory_space=pltpu.MemorySpace.VMEM)] * 10,
        out_specs=(pl.BlockSpec(memory_space=pltpu.MemorySpace.VMEM),
                   pl.BlockSpec(memory_space=pltpu.MemorySpace.VMEM)),
    )(x_cl, w1p, b1p, w2p, b2p, g1r, be1r, wmatp, g2r, be2r)
    return out_p[:, :C, :C], l1[0, 0]


def sigcnn_reference(x, w1, b1, w2, b2, g1, be1, wmat, g2, be2):
    """Pure-JAX (XLA, f32) reference of the same forward pass, for validation."""
    mu = x.mean(axis=(0, 2), keepdims=True)
    var = ((x - mu) ** 2).mean(axis=(0, 2), keepdims=True)
    xb = (x - mu) / jnp.sqrt(var + BN_EPS) * g1[None, :, None] + be1[None, :, None]
    y1 = lax.conv_general_dilated(xb, w1, (1,), 'VALID',
                                  dimension_numbers=('NCH', 'OIH', 'NCH'))
    y1 = y1 + b1[None, :, None]
    y2 = lax.conv_general_dilated(y1, w2, (1,), 'VALID',
                                  dimension_numbers=('NCH', 'OIH', 'NCH'))
    y2 = y2 + b2[None, :, None]
    y = y2.reshape(y2.shape[0], N_REGIONS, -1)
    sim = jnp.einsum('bnd,bmd->bnm', y, y)
    a = jnp.linalg.norm(y, axis=-1)
    sim = sim / a[:, :, None] / a[:, None, :]
    sim = jnp.where(jnp.isnan(sim), 0.0, sim)
    rowsum = wmat.sum(1)
    r_inv = rowsum ** -0.5
    r_inv = jnp.where(jnp.isinf(r_inv), 0.0, r_inv)
    wn = r_inv[:, None] * wmat * r_inv[None, :]
    mu2 = wn.mean(0, keepdims=True)
    var2 = ((wn - mu2) ** 2).mean(0, keepdims=True)
    wn = (wn - mu2) / jnp.sqrt(var2 + BN_EPS) * g2[None, :] + be2[None, :]
    wn = jnp.maximum(wn, 0.0)
    wf = (wn + wn.T) / 2
    l1 = jnp.abs(wf).sum(1).mean()
    return wf[None] * sim, l1


if __name__ == "__main__":
    B, C, L = 2, N_REGIONS, 64
    OC = N_REGIONS   # out_channel == in_channel so reshape(B, in_channel, -1) is valid

    key = jax.random.PRNGKey(0)
    k = jax.random.split(key, 6)
    bound1 = 1.0 / math.sqrt(C * KSIZE1)
    w1 = jax.random.uniform(k[0], (OC, C, KSIZE1), jnp.float32, -bound1, bound1)
    b1 = jax.random.uniform(k[1], (OC,), jnp.float32, -bound1, bound1)
    bound2 = 1.0 / math.sqrt(OC * KSIZE2)
    w2 = jax.random.uniform(k[2], (OC, OC, KSIZE2), jnp.float32, -bound2, bound2)
    b2 = jax.random.uniform(k[3], (OC,), jnp.float32, -bound2, bound2)
    wmat = jax.random.uniform(k[4], (N_REGIONS, N_REGIONS), jnp.float32, 0.0, 1.0)
    g1 = jnp.ones((C,), jnp.float32)
    be1 = jnp.zeros((C,), jnp.float32)
    g2 = jnp.ones((N_REGIONS,), jnp.float32)
    be2 = jnp.zeros((N_REGIONS,), jnp.float32)
    x = jax.random.normal(k[5], (B, C, L), jnp.float32)

    # one-time parameter prep (layout transforms hoisted off the per-call path)
    params = prepare_params(w1, b1, w2, b2, g1, be1, wmat, g2, be2)

    out, l1 = jax.jit(sigcnn_forward)(x, params)
    jax.block_until_ready((out, l1))

    ref_out, ref_l1 = sigcnn_reference(x, w1, b1, w2, b2, g1, be1, wmat, g2, be2)
    # bf16 MXU operands with f32 accumulation -> slightly looser atol on `out`;
    # the l1 path is pure f32.
    np.testing.assert_allclose(np.asarray(out), np.asarray(ref_out),
                               rtol=1e-2, atol=2e-2)
    np.testing.assert_allclose(float(l1), float(ref_l1), rtol=1e-2, atol=1e-2)

    print("KERNEL_OK")
</pallas_src>

<mosaic_0001>
module attributes {stable_mosaic.version = 11 : i64} {
  func.func @_sigcnn_kernel(%arg0: memref<2x73x128xf32, #tpu.memory_space<vmem>>, %arg1: memref<1280x128xbf16, #tpu.memory_space<vmem>>, %arg2: memref<1x128xf32, #tpu.memory_space<vmem>>, %arg3: memref<1920x128xbf16, #tpu.memory_space<vmem>>, %arg4: memref<1x128xf32, #tpu.memory_space<vmem>>, %arg5: memref<1x1x128xf32, #tpu.memory_space<vmem>>, %arg6: memref<1x1x128xf32, #tpu.memory_space<vmem>>, %arg7: memref<128x128xf32, #tpu.memory_space<vmem>>, %arg8: memref<1x128xf32, #tpu.memory_space<vmem>>, %arg9: memref<1x128xf32, #tpu.memory_space<vmem>>, %arg10: memref<2x128x128xf32, #tpu.memory_space<vmem>>, %arg11: memref<1x1xf32, #tpu.memory_space<vmem>>) attributes {dimension_semantics = [], scalar_prefetch = 0 : i64, scratch_operands = 0 : i64, tpu.core_type = #tpu.core_type<tc>} {
    %c0 = arith.constant 0 : index
    %c0_0 = arith.constant 0 : index
    %c0_1 = arith.constant 0 : index
    %0 = vector.load %arg0[%c0, %c0_0, %c0_1] : memref<2x73x128xf32, #tpu.memory_space<vmem>>, vector<2x73x128xf32>
    %1 = vector.extract_strided_slice %0 {offsets = [0, 0, 0], sizes = [2, 64, 128], strides = [1, 1, 1]} : vector<2x73x128xf32> to vector<2x64x128xf32>
    %cst = arith.constant dense<0.000000e+00> : vector<128xf32>
    %2 = vector.multi_reduction <add>, %1, %cst [0, 1] : vector<2x64x128xf32> to vector<128xf32>
    %3 = vector.shape_cast %2 : vector<128xf32> to vector<1x1x128xf32>
    %cst_2 = arith.constant 1.280000e+02 : f32
    %4 = vector.broadcast %cst_2 : f32 to vector<1x1x128xf32>
    %5 = arith.divf %3, %4 : vector<1x1x128xf32>
    %6 = arith.mulf %1, %1 : vector<2x64x128xf32>
    %cst_3 = arith.constant dense<0.000000e+00> : vector<128xf32>
    %7 = vector.multi_reduction <add>, %6, %cst_3 [0, 1] : vector<2x64x128xf32> to vector<128xf32>
    %8 = vector.shape_cast %7 : vector<128xf32> to vector<1x1x128xf32>
    %cst_4 = arith.constant 1.280000e+02 : f32
    %9 = vector.broadcast %cst_4 : f32 to vector<1x1x128xf32>
    %10 = arith.divf %8, %9 : vector<1x1x128xf32>
    %11 = arith.mulf %5, %5 : vector<1x1x128xf32>
    %12 = arith.subf %10, %11 : vector<1x1x128xf32>
    %13 = vector.broadcast %5 : vector<1x1x128xf32> to vector<2x73x128xf32>
    %14 = arith.subf %0, %13 : vector<2x73x128xf32>
    %cst_5 = arith.constant 9.99999974E-6 : f32
    %15 = vector.broadcast %cst_5 : f32 to vector<1x1x128xf32>
    %16 = arith.addf %12, %15 : vector<1x1x128xf32>
    %17 = math.rsqrt %16 : vector<1x1x128xf32>
    %18 = vector.broadcast %17 : vector<1x1x128xf32> to vector<2x73x128xf32>
    %19 = arith.mulf %14, %18 : vector<2x73x128xf32>
    %c0_6 = arith.constant 0 : index
    %c0_7 = arith.constant 0 : index
    %c0_8 = arith.constant 0 : index
    %20 = vector.load %arg5[%c0_6, %c0_7, %c0_8] : memref<1x1x128xf32, #tpu.memory_space<vmem>>, vector<1x1x128xf32>
    %21 = vector.broadcast %20 : vector<1x1x128xf32> to vector<2x73x128xf32>
    %22 = arith.mulf %19, %21 : vector<2x73x128xf32>
    %c0_9 = arith.constant 0 : index
    %c0_10 = arith.constant 0 : index
    %c0_11 = arith.constant 0 : index
    %23 = vector.load %arg6[%c0_9, %c0_10, %c0_11] : memref<1x1x128xf32, #tpu.memory_space<vmem>>, vector<1x1x128xf32>
    %24 = vector.broadcast %23 : vector<1x1x128xf32> to vector<2x73x128xf32>
    %25 = arith.addf %22, %24 : vector<2x73x128xf32>
    %26 = arith.truncf %25 : vector<2x73x128xf32> to vector<2x73x128xbf16>
    %27 = vector.extract_strided_slice %26 {offsets = [0, 0, 0], sizes = [2, 64, 128], strides = [1, 1, 1]} : vector<2x73x128xbf16> to vector<2x64x128xbf16>
    %28 = vector.extract_strided_slice %26 {offsets = [0, 1, 0], sizes = [2, 64, 128], strides = [1, 1, 1]} : vector<2x73x128xbf16> to vector<2x64x128xbf16>
    %29 = vector.extract_strided_slice %26 {offsets = [0, 2, 0], sizes = [2, 64, 128], strides = [1, 1, 1]} : vector<2x73x128xbf16> to vector<2x64x128xbf16>
    %30 = vector.extract_strided_slice %26 {offsets = [0, 3, 0], sizes = [2, 64, 128], strides = [1, 1, 1]} : vector<2x73x128xbf16> to vector<2x64x128xbf16>
    %31 = vector.extract_strided_slice %26 {offsets = [0, 4, 0], sizes = [2, 64, 128], strides = [1, 1, 1]} : vector<2x73x128xbf16> to vector<2x64x128xbf16>
    %32 = vector.extract_strided_slice %26 {offsets = [0, 5, 0], sizes = [2, 64, 128], strides = [1, 1, 1]} : vector<2x73x128xbf16> to vector<2x64x128xbf16>
    %33 = vector.extract_strided_slice %26 {offsets = [0, 6, 0], sizes = [2, 64, 128], strides = [1, 1, 1]} : vector<2x73x128xbf16> to vector<2x64x128xbf16>
    %34 = vector.extract_strided_slice %26 {offsets = [0, 7, 0], sizes = [2, 64, 128], strides = [1, 1, 1]} : vector<2x73x128xbf16> to vector<2x64x128xbf16>
    %35 = vector.extract_strided_slice %26 {offsets = [0, 8, 0], sizes = [2, 64, 128], strides = [1, 1, 1]} : vector<2x73x128xbf16> to vector<2x64x128xbf16>
    %36 = vector.extract_strided_slice %26 {offsets = [0, 9, 0], sizes = [2, 64, 128], strides = [1, 1, 1]} : vector<2x73x128xbf16> to vector<2x64x128xbf16>
    %37 = tpu.concatenate %27, %28, %29, %30, %31, %32, %33, %34, %35, %36 in 2 : vector<2x64x128xbf16>, vector<2x64x128xbf16>, vector<2x64x128xbf16>, vector<2x64x128xbf16>, vector<2x64x128xbf16>, vector<2x64x128xbf16>, vector<2x64x128xbf16>, vector<2x64x128xbf16>, vector<2x64x128xbf16>, vector<2x64x128xbf16> -> vector<2x64x1280xbf16>
    %38 = vector.shape_cast %37 : vector<2x64x1280xbf16> to vector<128x1280xbf16>
    %c0_12 = arith.constant 0 : index
    %c0_13 = arith.constant 0 : index
    %39 = vector.load %arg1[%c0_12, %c0_13] : memref<1280x128xbf16, #tpu.memory_space<vmem>>, vector<1280x128xbf16>
    %cst_14 = arith.constant dense<0.000000e+00> : vector<128x128xf32>
    %40 = tpu.matmul %38, %39, %cst_14 {dimension_numbers = #tpu.dot_dimension_numbers<[1], [0], [0], [1], [0, 0, 1, 1], [], []>} : vector<128x1280xbf16>, vector<1280x128xbf16>, vector<128x128xf32> -> vector<128x128xf32>
    %c0_15 = arith.constant 0 : index
    %c0_16 = arith.constant 0 : index
    %41 = vector.load %arg2[%c0_15, %c0_16] : memref<1x128xf32, #tpu.memory_space<vmem>>, vector<1x128xf32>
    %42 = vector.broadcast %41 : vector<1x128xf32> to vector<128x128xf32>
    %43 = arith.addf %40, %42 : vector<128x128xf32>
    %44 = vector.shape_cast %43 : vector<128x128xf32> to vector<2x64x128xf32>
    %45 = arith.truncf %44 : vector<2x64x128xf32> to vector<2x64x128xbf16>
    %46 = vector.extract_strided_slice %45 {offsets = [0, 0, 0], sizes = [2, 48, 128], strides = [1, 1, 1]} : vector<2x64x128xbf16> to vector<2x48x128xbf16>
    %47 = vector.extract_strided_slice %45 {offsets = [0, 1, 0], sizes = [2, 48, 128], strides = [1, 1, 1]} : vector<2x64x128xbf16> to vector<2x48x128xbf16>
    %48 = vector.extract_strided_slice %45 {offsets = [0, 2, 0], sizes = [2, 48, 128], strides = [1, 1, 1]} : vector<2x64x128xbf16> to vector<2x48x128xbf16>
    %49 = vector.extract_strided_slice %45 {offsets = [0, 3, 0], sizes = [2, 48, 128], strides = [1, 1, 1]} : vector<2x64x128xbf16> to vector<2x48x128xbf16>
    %50 = vector.extract_strided_slice %45 {offsets = [0, 4, 0], sizes = [2, 48, 128], strides = [1, 1, 1]} : vector<2x64x128xbf16> to vector<2x48x128xbf16>
    %51 = vector.extract_strided_slice %45 {offsets = [0, 5, 0], sizes = [2, 48, 128], strides = [1, 1, 1]} : vector<2x64x128xbf16> to vector<2x48x128xbf16>
    %52 = vector.extract_strided_slice %45 {offsets = [0, 6, 0], sizes = [2, 48, 128], strides = [1, 1, 1]} : vector<2x64x128xbf16> to vector<2x48x128xbf16>
    %53 = vector.extract_strided_slice %45 {offsets = [0, 7, 0], sizes = [2, 48, 128], strides = [1, 1, 1]} : vector<2x64x128xbf16> to vector<2x48x128xbf16>
    %54 = vector.extract_strided_slice %45 {offsets = [0, 8, 0], sizes = [2, 48, 128], strides = [1, 1, 1]} : vector<2x64x128xbf16> to vector<2x48x128xbf16>
    %55 = vector.extract_strided_slice %45 {offsets = [0, 9, 0], sizes = [2, 48, 128], strides = [1, 1, 1]} : vector<2x64x128xbf16> to vector<2x48x128xbf16>
    %56 = vector.extract_strided_slice %45 {offsets = [0, 10, 0], sizes = [2, 48, 128], strides = [1, 1, 1]} : vector<2x64x128xbf16> to vector<2x48x128xbf16>
    %57 = vector.extract_strided_slice %45 {offsets = [0, 11, 0], sizes = [2, 48, 128], strides = [1, 1, 1]} : vector<2x64x128xbf16> to vector<2x48x128xbf16>
    %58 = vector.extract_strided_slice %45 {offsets = [0, 12, 0], sizes = [2, 48, 128], strides = [1, 1, 1]} : vector<2x64x128xbf16> to vector<2x48x128xbf16>
    %59 = vector.extract_strided_slice %45 {offsets = [0, 13, 0], sizes = [2, 48, 128], strides = [1, 1, 1]} : vector<2x64x128xbf16> to vector<2x48x128xbf16>
    %60 = vector.extract_strided_slice %45 {offsets = [0, 14, 0], sizes = [2, 48, 128], strides = [1, 1, 1]} : vector<2x64x128xbf16> to vector<2x48x128xbf16>
    %61 = tpu.concatenate %46, %47, %48, %49, %50, %51, %52, %53, %54, %55, %56, %57, %58, %59, %60 in 2 : vector<2x48x128xbf16>, vector<2x48x128xbf16>, vector<2x48x128xbf16>, vector<2x48x128xbf16>, vector<2x48x128xbf16>, vector<2x48x128xbf16>, vector<2x48x128xbf16>, vector<2x48x128xbf16>, vector<2x48x128xbf16>, vector<2x48x128xbf16>, vector<2x48x128xbf16>, vector<2x48x128xbf16>, vector<2x48x128xbf16>, vector<2x48x128xbf16>, vector<2x48x128xbf16> -> vector<2x48x1920xbf16>
    %62 = vector.shape_cast %61 : vector<2x48x1920xbf16> to vector<96x1920xbf16>
    %c0_17 = arith.constant 0 : index
    %c0_18 = arith.constant 0 : index
    %63 = vector.load %arg3[%c0_17, %c0_18] : memref<1920x128xbf16, #tpu.memory_space<vmem>>, vector<1920x128xbf16>
    %cst_19 = arith.constant dense<0.000000e+00> : vector<96x128xf32>
    %64 = tpu.matmul %62, %63, %cst_19 {dimension_numbers = #tpu.dot_dimension_numbers<[1], [0], [0], [1], [0, 0, 1, 1], [], []>} : vector<96x1920xbf16>, vector<1920x128xbf16>, vector<96x128xf32> -> vector<96x128xf32>
    %c0_20 = arith.constant 0 : index
    %c0_21 = arith.constant 0 : index
    %65 = vector.load %arg4[%c0_20, %c0_21] : memref<1x128xf32, #tpu.memory_space<vmem>>, vector<1x128xf32>
    %66 = vector.broadcast %65 : vector<1x128xf32> to vector<96x128xf32>
    %67 = arith.addf %64, %66 : vector<96x128xf32>
    %68 = vector.shape_cast %67 : vector<96x128xf32> to vector<2x48x128xf32>
    %69 = tpu.iota {dimensions = array<i32: 0>} : vector<48x1xi32>
    %c41_i32 = arith.constant 41 : i32
    %70 = vector.broadcast %c41_i32 : i32 to vector<48x1xi32>
    %71 = arith.cmpi slt, %69, %70 : vector<48x1xi32>
    %72 = vector.shape_cast %71 : vector<48x1xi1> to vector<1x48x1xi1>
    %cst_22 = arith.constant 0.000000e+00 : f32
    %73 = vector.shape_cast %72 : vector<1x48x1xi1> to vector<1x48x1xi1>
    %74 = vector.broadcast %73 : vector<1x48x1xi1> to vector<2x48x128xi1>
    %75 = vector.broadcast %cst_22 : f32 to vector<2x48x128xf32>
    %76 = arith.select %74, %68, %75 : vector<2x48x128xi1>, vector<2x48x128xf32>
    %77 = arith.mulf %76, %76 : vector<2x48x128xf32>
    %cst_23 = arith.constant dense<0.000000e+00> : vector<2x128xf32>
    %78 = vector.multi_reduction <add>, %77, %cst_23 [1] : vector<2x48x128xf32> to vector<2x128xf32>
    %79 = arith.truncf %76 : vector<2x48x128xf32> to vector<2x48x128xbf16>
    "tpu.trace_start"() <{level = 10 : i32, message = "btn,btm->bnm"}> : () -> ()
    %cst_24 = arith.constant dense<0.000000e+00> : vector<2x128x128xf32>
    %80 = tpu.matmul %79, %79, %cst_24 {dimension_numbers = #tpu.dot_dimension_numbers<[1], [1], [2], [2], [0, 0, 0, 2, 1, 2], [0], [0]>} : vector<2x48x128xbf16>, vector<2x48x128xbf16>, vector<2x128x128xf32> -> vector<2x128x128xf32>
    %cst_25 = arith.constant 0.000000e+00 : f32
    "tpu.trace_stop"() : () -> ()
    %81 = vector.broadcast %cst_25 : f32 to vector<2x128xf32>
    %82 = arith.cmpf ogt, %78, %81 : vector<2x128xf32>
    %83 = math.rsqrt %78 : vector<2x128xf32>
    %cst_26 = arith.constant 0.000000e+00 : f32
    %84 = vector.broadcast %cst_26 : f32 to vector<2x128xf32>
    %85 = arith.select %82, %83, %84 : vector<2x128xi1>, vector<2x128xf32>
    %86 = vector.shape_cast %85 : vector<2x128xf32> to vector<2x128x1xf32>
    %87 = vector.broadcast %86 : vector<2x128x1xf32> to vector<2x128x128xf32>
    %88 = arith.mulf %80, %87 : vector<2x128x128xf32>
    %89 = vector.shape_cast %85 : vector<2x128xf32> to vector<2x1x128xf32>
    %90 = vector.broadcast %89 : vector<2x1x128xf32> to vector<2x128x128xf32>
    %91 = arith.mulf %88, %90 : vector<2x128x128xf32>
    %c0_27 = arith.constant 0 : index
    %c0_28 = arith.constant 0 : index
    %92 = vector.load %arg7[%c0_27, %c0_28] : memref<128x128xf32, #tpu.memory_space<vmem>>, vector<128x128xf32>
    %cst_29 = arith.constant dense<0.000000e+00> : vector<128xf32>
    %93 = vector.multi_reduction <add>, %92, %cst_29 [1] : vector<128x128xf32> to vector<128xf32>
    %94 = vector.shape_cast %93 : vector<128xf32> to vector<128x1xf32>
    %95 = math.rsqrt %94 : vector<128x1xf32>
    %96 = math.absf %95 : vector<128x1xf32>
    %cst_30 = arith.constant 0x7F800000 : f32
    %97 = vector.broadcast %cst_30 : f32 to vector<128x1xf32>
    %98 = arith.cmpf oeq, %96, %97 : vector<128x1xf32>
    %cst_31 = arith.constant 0.000000e+00 : f32
    %99 = vector.broadcast %cst_31 : f32 to vector<128x1xf32>
    %100 = arith.select %98, %99, %95 : vector<128x1xi1>, vector<128x1xf32>
    %101 = vector.broadcast %100 : vector<128x1xf32> to vector<128x128xf32>
    %102 = arith.mulf %101, %92 : vector<128x128xf32>
    %103 = tpu.transpose %100, [1, 0] : vector<128x1xf32> -> vector<1x128xf32>
    %104 = vector.broadcast %103 : vector<1x128xf32> to vector<128x128xf32>
    %105 = arith.mulf %102, %104 : vector<128x128xf32>
    %106 = tpu.iota {dimensions = array<i32: 0>} : vector<128x1xi32>
    %c116_i32 = arith.constant 116 : i32
    %107 = vector.broadcast %c116_i32 : i32 to vector<128x1xi32>
    %108 = arith.cmpi slt, %106, %107 : vector<128x1xi32>
    %109 = arith.extui %108 : vector<128x1xi1> to vector<128x1xi32>
    %110 = arith.sitofp %109 : vector<128x1xi32> to vector<128x1xf32>
    %cst_32 = arith.constant dense<0.000000e+00> : vector<128xf32>
    %111 = vector.multi_reduction <add>, %105, %cst_32 [0] : vector<128x128xf32> to vector<128xf32>
    %112 = vector.shape_cast %111 : vector<128xf32> to vector<1x128xf32>
    %cst_33 = arith.constant 8.620690e-03 : f32
    %113 = vector.broadcast %cst_33 : f32 to vector<1x128xf32>
    %114 = arith.mulf %112, %113 : vector<1x128xf32>
    %115 = vector.broadcast %114 : vector<1x128xf32> to vector<128x128xf32>
    %116 = arith.subf %105, %115 : vector<128x128xf32>
    %117 = arith.mulf %116, %116 : vector<128x128xf32>
    %118 = vector.broadcast %110 : vector<128x1xf32> to vector<128x128xf32>
    %119 = arith.mulf %117, %118 : vector<128x128xf32>
    %cst_34 = arith.constant dense<0.000000e+00> : vector<128xf32>
    %120 = vector.multi_reduction <add>, %119, %cst_34 [0] : vector<128x128xf32> to vector<128xf32>
    %121 = vector.shape_cast %120 : vector<128xf32> to vector<1x128xf32>
    %cst_35 = arith.constant 8.620690e-03 : f32
    %122 = vector.broadcast %cst_35 : f32 to vector<1x128xf32>
    %123 = arith.mulf %121, %122 : vector<1x128xf32>
    %124 = vector.broadcast %114 : vector<1x128xf32> to vector<128x128xf32>
    %125 = arith.subf %105, %124 : vector<128x128xf32>
    %cst_36 = arith.constant 9.99999974E-6 : f32
    %126 = vector.broadcast %cst_36 : f32 to vector<1x128xf32>
    %127 = arith.addf %123, %126 : vector<1x128xf32>
    %128 = math.rsqrt %127 : vector<1x128xf32>
    %129 = vector.broadcast %128 : vector<1x128xf32> to vector<128x128xf32>
    %130 = arith.mulf %125, %129 : vector<128x128xf32>
    %c0_37 = arith.constant 0 : index
    %c0_38 = arith.constant 0 : index
    %131 = vector.load %arg8[%c0_37, %c0_38] : memref<1x128xf32, #tpu.memory_space<vmem>>, vector<1x128xf32>
    %132 = vector.broadcast %131 : vector<1x128xf32> to vector<128x128xf32>
    %133 = arith.mulf %130, %132 : vector<128x128xf32>
    %c0_39 = arith.constant 0 : index
    %c0_40 = arith.constant 0 : index
    %134 = vector.load %arg9[%c0_39, %c0_40] : memref<1x128xf32, #tpu.memory_space<vmem>>, vector<1x128xf32>
    %135 = vector.broadcast %134 : vector<1x128xf32> to vector<128x128xf32>
    %136 = arith.addf %133, %135 : vector<128x128xf32>
    %cst_41 = arith.constant 0.000000e+00 : f32
    %137 = vector.broadcast %cst_41 : f32 to vector<128x128xf32>
    %138 = arith.maximumf %136, %137 : vector<128x128xf32>
    %139 = vector.broadcast %110 : vector<128x1xf32> to vector<128x128xf32>
    %140 = arith.mulf %138, %139 : vector<128x128xf32>
    %141 = tpu.transpose %140, [1, 0] : vector<128x128xf32> -> vector<128x128xf32>
    %142 = arith.addf %140, %141 : vector<128x128xf32>
    %cst_42 = arith.constant 5.000000e-01 : f32
    %143 = vector.broadcast %cst_42 : f32 to vector<128x128xf32>
    %144 = arith.mulf %142, %143 : vector<128x128xf32>
    %145 = math.absf %144 : vector<128x128xf32>
    %cst_43 = arith.constant dense<0.000000e+00> : vector<128xf32>
    %146 = vector.multi_reduction <add>, %145, %cst_43 [1] : vector<128x128xf32> to vector<128xf32>
    %147 = vector.shape_cast %146 : vector<128xf32> to vector<128x1xf32>
    %cst_44 = arith.constant dense<0.000000e+00> : vector<1xf32>
    %148 = vector.multi_reduction <add>, %147, %cst_44 [0] : vector<128x1xf32> to vector<1xf32>
    %149 = vector.shape_cast %148 : vector<1xf32> to vector<1x1xf32>
    %cst_45 = arith.constant 8.620690e-03 : f32
    %150 = vector.broadcast %cst_45 : f32 to vector<1x1xf32>
    %151 = arith.mulf %149, %150 : vector<1x1xf32>
    %c0_46 = arith.constant 0 : index
    %c0_47 = arith.constant 0 : index
    %152 = vector.load %arg11[%c0_46, %c0_47] : memref<1x1xf32, #tpu.memory_space<vmem>>, vector<1x1xf32>
    tpu.vector_store %arg11[%c0_46, %c0_47], %151 {strides = array<i32>} : memref<1x1xf32, #tpu.memory_space<vmem>>, vector<1x1xf32>,
    %153 = vector.shape_cast %144 : vector<128x128xf32> to vector<1x128x128xf32>
    %154 = vector.broadcast %153 : vector<1x128x128xf32> to vector<2x128x128xf32>
    %155 = arith.mulf %154, %91 : vector<2x128x128xf32>
    %c0_48 = arith.constant 0 : index
    %c0_49 = arith.constant 0 : index
    %c0_50 = arith.constant 0 : index
    %156 = vector.load %arg10[%c0_48, %c0_49, %c0_50] : memref<2x128x128xf32, #tpu.memory_space<vmem>>, vector<2x128x128xf32>
    tpu.vector_store %arg10[%c0_48, %c0_49, %c0_50], %155 {strides = array<i32>} : memref<2x128x128xf32, #tpu.memory_space<vmem>>, vector<2x128x128xf32>,
    return
  }
}

</mosaic_0001>

<llo_original>
// kernel: sigcnn_forward.1
$region0: #{sigcnn_forward.1}
  #allocation0 [shape = 'u32[]', space=smem, size = 0x4, offset = 0x4, fixed_abs, tag = 'smem constant byte address 0x4 - core index']
  #allocation1 [shape = 'u32[144,128]{1,0:T(1,128)}', space=vmem, size = 0x12000, scoped, tag = 'internal scratch']
  %s0 = inlined_call_operand.vmem [shape: f32[2,73,128], index: 0, kind: input, shape index: {}]
  %s1 = inlined_call_operand.hbm [shape: bf16[1280,128], index: 1, kind: input, shape index: {}]
  %s2 = inlined_call_operand.vmem [shape: f32[1,128], index: 2, kind: input, shape index: {}]
  %s3 = inlined_call_operand.hbm [shape: bf16[1920,128], index: 3, kind: input, shape index: {}]
  %s4 = inlined_call_operand.vmem [shape: f32[1,128], index: 4, kind: input, shape index: {}]
  %s5 = inlined_call_operand.vmem [shape: f32[1,1,128], index: 5, kind: input, shape index: {}]
  %s6 = inlined_call_operand.vmem [shape: f32[1,1,128], index: 6, kind: input, shape index: {}]
  %s7 = inlined_call_operand.vmem [shape: f32[128,128], index: 7, kind: input, shape index: {}]
  %s8 = inlined_call_operand.vmem [shape: f32[1,128], index: 8, kind: input, shape index: {}]
  %s9 = inlined_call_operand.vmem [shape: f32[1,128], index: 9, kind: input, shape index: {}]
  %s10 = inlined_call_operand.vmem [shape: f32[2,128,128], index: 10, kind: output, shape index: {0}]
  %s11 = inlined_call_operand.hbm [shape: f32[1,1], index: 11, kind: output, shape index: {1}]
  %12 = xla_tuple %s10, %s11
  %s13 = sld [smem:[#allocation0]]
  $region66: #{sigcnn_forward.1} parent=0
    _
  %s15 = ssub.s32 1, %s13
  %s16 = scalar_select 0, %s15, %s13
  $region1: #{sigcnn_forward.1} parent=0
    #allocation2 [shape = 'u8[327680]{0}', space=vmem, size = 0x50000, scoped, tag = 'input window, operand 1, single buffered']
    #allocation3 [shape = 's32[1]{0}', space=sflag, size = 0x4, scoped, tag = 'scoped memory for sigcnn_forward.1']
    #allocation4 [shape = 's32[1]{0}', space=sflag, size = 0x4, scoped, tag = 'scoped memory for sigcnn_forward.1']
    #allocation5 [shape = 'u8[491520]{0}', space=vmem, size = 0x78000, scoped, tag = 'input window, operand 3, single buffered']
    #allocation6 [shape = 's32[1]{0}', space=sflag, size = 0x4, scoped, tag = 'scoped memory for sigcnn_forward.1']
    #allocation7 [shape = 'u8[512]{0}', space=vmem, size = 0x400, scoped, tag = 'output window, operand 1, single buffered']
    %17 = vsyncpa [#allocation3], 0
    %18 = vsyncpa [#allocation6], 0
    %19 = vsyncpa [#allocation4], 0
    // Predicated region
    $region2: #{sigcnn_forward.1} parent=1 // pred_check
      _
    $region3: #{sigcnn_forward.1} parent=1 // pred_check_branch
      %21 = sbr.rel (0) target = $region5
    $region4: #{sigcnn_forward.1} parent=1 // pred_region
      _
    $region5: #{sigcnn_forward.1} parent=1 // pred_fallthru
      _
    // Predicated region
    $region6: #{sigcnn_forward.1} parent=1 // pred_check
      _
    $region7: #{sigcnn_forward.1} parent=1 // pred_check_branch
      %23 = sbr.rel (0) target = $region9
    $region8: #{sigcnn_forward.1} parent=1 // pred_region
      %s25 = ssub.s32 10240, 10240
      %26 = vsyncadd [#allocation3], %s25
      %s27 = sshll.u32 [#allocation2], 4
      %s28 = int_to_ptr.vmem [resolvable:$true] %s27
      %33 = dma.hbm_to_vmem [thread:$0]  %s1, 10240, %s28, [#allocation3], 64, 64, 4
    $region9: #{sigcnn_forward.1} parent=1 // pred_fallthru
      _
    // Predicated region
    $region10: #{sigcnn_forward.1} parent=1 // pred_check
      _
    $region11: #{sigcnn_forward.1} parent=1 // pred_check_branch
      %35 = sbr.rel (0) target = $region13
    $region12: #{sigcnn_forward.1} parent=1 // pred_region
      _
    $region13: #{sigcnn_forward.1} parent=1 // pred_fallthru
      _
    // Predicated region
    $region14: #{sigcnn_forward.1} parent=1 // pred_check
      _
    $region15: #{sigcnn_forward.1} parent=1 // pred_check_branch
      %37 = sbr.rel (0) target = $region17
    $region16: #{sigcnn_forward.1} parent=1 // pred_region
      %s39 = ssub.s32 15360, 15360
      %40 = vsyncadd [#allocation6], %s39
      %s41 = sshll.u32 [#allocation5], 4
      %s42 = int_to_ptr.vmem [resolvable:$true] %s41
      %47 = dma.hbm_to_vmem [thread:$0]  %s3, 15360, %s42, [#allocation6], 64, 64, 4
    $region17: #{sigcnn_forward.1} parent=1 // pred_fallthru
      _
    // Predicated region
    $region18: #{sigcnn_forward.1} parent=1 // pred_check
      _
    $region19: #{sigcnn_forward.1} parent=1 // pred_check_branch
      %49 = sbr.rel (0) target = $region21
    $region20: #{sigcnn_forward.1} parent=1 // pred_region
      _
    $region21: #{sigcnn_forward.1} parent=1 // pred_fallthru
      _
    // Predicated region
    $region22: #{sigcnn_forward.1} parent=1 // pred_check
      _
    $region23: #{sigcnn_forward.1} parent=1 // pred_check_branch
      %51 = sbr.rel (0) target = $region25
    $region24: #{sigcnn_forward.1} parent=1 // pred_region
      _
    $region25: #{sigcnn_forward.1} parent=1 // pred_fallthru
      _
    // Predicated region
    $region26: #{sigcnn_forward.1} parent=1 // pred_check
      _
    $region27: #{sigcnn_forward.1} parent=1 // pred_check_branch
      %53 = sbr.rel (0) target = $region29
    $region28: #{sigcnn_forward.1} parent=1 // pred_region
      _
    $region29: #{sigcnn_forward.1} parent=1 // pred_fallthru
      _
    // Predicated region
    $region30: #{sigcnn_forward.1} parent=1 // pred_check
      _
    $region31: #{sigcnn_forward.1} parent=1 // pred_check_branch
      %55 = sbr.rel (0) target = $region33
    $region32: #{sigcnn_forward.1} parent=1 // pred_region
      _
    $region33: #{sigcnn_forward.1} parent=1 // pred_fallthru
      _
    // Predicated region
    $region34: #{sigcnn_forward.1} parent=1 // pred_check
      _
    $region35: #{sigcnn_forward.1} parent=1 // pred_check_branch
      %57 = sbr.rel (0) target = $region37
    $region36: #{sigcnn_forward.1} parent=1 // pred_region
      _
    $region37: #{sigcnn_forward.1} parent=1 // pred_fallthru
      _
    // Predicated region
    $region38: #{sigcnn_forward.1} parent=1 // pred_check
      _
    $region39: #{sigcnn_forward.1} parent=1 // pred_check_branch
      %59 = sbr.rel (0) target = $region41
    $region40: #{sigcnn_forward.1} parent=1 // pred_region
      _
    $region41: #{sigcnn_forward.1} parent=1 // pred_fallthru
      _
    // Predicated region
    $region42: #{sigcnn_forward.1} parent=1 // pred_check
      _
    $region43: #{sigcnn_forward.1} parent=1 // pred_check_branch
      %61 = sbr.rel (0) target = $region45
    $region44: #{sigcnn_forward.1} parent=1 // pred_region
      %62 = dma.done [#allocation3], 10240
    $region45: #{sigcnn_forward.1} parent=1 // pred_fallthru
      _
    // Predicated region
    $region46: #{sigcnn_forward.1} parent=1 // pred_check
      _
    $region47: #{sigcnn_forward.1} parent=1 // pred_check_branch
      %64 = sbr.rel (0) target = $region49
    $region48: #{sigcnn_forward.1} parent=1 // pred_region
      %65 = dma.done [#allocation6], 15360
    $region49: #{sigcnn_forward.1} parent=1 // pred_fallthru
      _
    %v67 = vld [vmem:[%s0] sm:$0xff]
    %v68 = vld [vmem:[%s0 + $0x8] sm:$0xff]
    %v69 = vld [vmem:[%s0 + $0x10] sm:$0xff]
    %v70 = vld [vmem:[%s0 + $0x18] sm:$0xff]
    %v71 = vld [vmem:[%s0 + $0x20] sm:$0xff]
    %v72 = vld [vmem:[%s0 + $0x28] sm:$0xff]
    %v73 = vld [vmem:[%s0 + $0x30] sm:$0xff]
    %v74 = vld [vmem:[%s0 + $0x38] sm:$0xff]
    %v75 = vld [vmem:[%s0 + $0x40] sm:$0xff]
    %v76 = vld [vmem:[%s0 + $0x48] sm:$0x1]
    %v77 = vld [vmem:[%s0 + $0x50] sm:$0xff]
    %v78 = vld [vmem:[%s0 + $0x58] sm:$0xff]
    %v79 = vld [vmem:[%s0 + $0x60] sm:$0xff]
    %v80 = vld [vmem:[%s0 + $0x68] sm:$0xff]
    %v81 = vld [vmem:[%s0 + $0x70] sm:$0xff]
    %v82 = vld [vmem:[%s0 + $0x78] sm:$0xff]
    %v83 = vld [vmem:[%s0 + $0x80] sm:$0xff]
    %v84 = vld [vmem:[%s0 + $0x88] sm:$0xff]
    %v85 = vld [vmem:[%s0 + $0x90] sm:$0xff]
    %v86 = vld [vmem:[%s0 + $0x98] sm:$0x1]
    %v87 = vadd.f32 %v67, %v68
    %v88 = vadd.f32 %v87, %v69
    %v89 = vadd.f32 %v88, %v70
    %v90 = vadd.f32 %v89, %v71
    %v91 = vadd.f32 %v90, %v72
    %v92 = vadd.f32 %v91, %v73
    %v93 = vadd.f32 %v92, %v74
    %v94 = vadd.f32 %v93, %v77
    %v95 = vadd.f32 %v94, %v78
    %v96 = vadd.f32 %v95, %v79
    %v97 = vadd.f32 %v96, %v80
    %v98 = vadd.f32 %v97, %v81
    %v99 = vadd.f32 %v98, %v82
    %v100 = vadd.f32 %v99, %v83
    %v101 = vadd.f32 %v100, %v84
    %v102 = vrot.slane %v101, 4
    %v103 = vadd.f32 %v101, %v102
    %v104 = vrot.slane %v103, 2
    %v105 = vadd.f32 %v103, %v104
    %v106 = vrot.slane %v105, 1
    %v107 = vadd.f32 %v105, %v106
    %v108 = vrcp.pop 128.0
    %v109 = vmul.f32 %v107, %v108
    %v110 = vmul.f32 %v67, %v67
    %v111 = vmul.f32 %v68, %v68
    %v112 = vmul.f32 %v69, %v69
    %v113 = vmul.f32 %v70, %v70
    %v114 = vmul.f32 %v71, %v71
    %v115 = vmul.f32 %v72, %v72
    %v116 = vmul.f32 %v73, %v73
    %v117 = vmul.f32 %v74, %v74
    %v118 = vmul.f32 %v77, %v77
    %v119 = vmul.f32 %v78, %v78
    %v120 = vmul.f32 %v79, %v79
    %v121 = vmul.f32 %v80, %v80
    %v122 = vmul.f32 %v81, %v81
    %v123 = vmul.f32 %v82, %v82
    %v124 = vmul.f32 %v83, %v83
    %v125 = vmul.f32 %v84, %v84
    %v126 = vadd.f32 %v110, %v111
    %v127 = vadd.f32 %v126, %v112
    %v128 = vadd.f32 %v127, %v113
    %v129 = vadd.f32 %v128, %v114
    %v130 = vadd.f32 %v129, %v115
    %v131 = vadd.f32 %v130, %v116
    %v132 = vadd.f32 %v131, %v117
    %v133 = vadd.f32 %v132, %v118
    %v134 = vadd.f32 %v133, %v119
    %v135 = vadd.f32 %v134, %v120
    %v136 = vadd.f32 %v135, %v121
    %v137 = vadd.f32 %v136, %v122
    %v138 = vadd.f32 %v137, %v123
    %v139 = vadd.f32 %v138, %v124
    %v140 = vadd.f32 %v139, %v125
    %v141 = vrot.slane %v140, 4
    %v142 = vadd.f32 %v140, %v141
    %v143 = vrot.slane %v142, 2
    %v144 = vadd.f32 %v142, %v143
    %v145 = vrot.slane %v144, 1
    %v146 = vadd.f32 %v144, %v145
    %v147 = vmul.f32 %v146, %v108
    %v148 = vmul.f32 %v109, %v109
    %v149 = vsub.f32 %v147, %v148
    %v150 = vsub.f32 %v67, %v109
    %v151 = vsub.f32 %v68, %v109
    %v152 = vsub.f32 %v69, %v109
    %v153 = vsub.f32 %v70, %v109
    %v154 = vsub.f32 %v71, %v109
    %v155 = vsub.f32 %v72, %v109
    %v156 = vsub.f32 %v73, %v109
    %v157 = vsub.f32 %v74, %v109
    %v158 = vsub.f32 %v75, %v109
    %v159 = vsub.f32 %v76, %v109
    %v160 = vsub.f32 %v77, %v109
    %v161 = vsub.f32 %v78, %v109
    %v162 = vsub.f32 %v79, %v109
    %v163 = vsub.f32 %v80, %v109
    %v164 = vsub.f32 %v81, %v109
    %v165 = vsub.f32 %v82, %v109
    %v166 = vsub.f32 %v83, %v109
    %v167 = vsub.f32 %v84, %v109
    %v168 = vsub.f32 %v85, %v109
    %v169 = vsub.f32 %v86, %v109
    %v170 = vadd.f32 %v149, 1e-05
    %v171 = vrsqrt.pop %v170
    %v172 = vmul.f32 %v150, %v171
    %v173 = vmul.f32 %v151, %v171
    %v174 = vmul.f32 %v152, %v171
    %v175 = vmul.f32 %v153, %v171
    %v176 = vmul.f32 %v154, %v171
    %v177 = vmul.f32 %v155, %v171
    %v178 = vmul.f32 %v156, %v171
    %v179 = vmul.f32 %v157, %v171
    %v180 = vmul.f32 %v158, %v171
    %v181 = vmul.f32 %v159, %v171
    %v182 = vmul.f32 %v160, %v171
    %v183 = vmul.f32 %v161, %v171
    %v184 = vmul.f32 %v162, %v171
    %v185 = vmul.f32 %v163, %v171
    %v186 = vmul.f32 %v164, %v171
    %v187 = vmul.f32 %v165, %v171
    %v188 = vmul.f32 %v166, %v171
    %v189 = vmul.f32 %v167, %v171
    %v190 = vmul.f32 %v168, %v171
    %v191 = vmul.f32 %v169, %v171
    %v192 = vld [vmem:[%s5] sm:$0x1]
    %v194 = vlaneseq
    %v195 = vshrl.u32 %v194, 7
    %v196 = vsub.s32 0, %v195
    %v197 = vrot.slane %v192, %v196
    %v199 = vmul.f32 %v172, %v197
    %v200 = vmul.f32 %v173, %v197
    %v201 = vmul.f32 %v174, %v197
    %v202 = vmul.f32 %v175, %v197
    %v203 = vmul.f32 %v176, %v197
    %v204 = vmul.f32 %v177, %v197
    %v205 = vmul.f32 %v178, %v197
    %v206 = vmul.f32 %v179, %v197
    %v207 = vmul.f32 %v180, %v197
    %v208 = vmul.f32 %v181, %v197
    %v209 = vmul.f32 %v182, %v197
    %v210 = vmul.f32 %v183, %v197
    %v211 = vmul.f32 %v184, %v197
    %v212 = vmul.f32 %v185, %v197
    %v213 = vmul.f32 %v186, %v197
    %v214 = vmul.f32 %v187, %v197
    %v215 = vmul.f32 %v188, %v197
    %v216 = vmul.f32 %v189, %v197
    %v217 = vmul.f32 %v190, %v197
    %v218 = vmul.f32 %v191, %v197
    %v219 = vld [vmem:[%s6] sm:$0x1]
    %v221 = vlaneseq
    %v222 = vshrl.u32 %v221, 7
    %v223 = vsub.s32 0, %v222
    %v224 = vrot.slane %v219, %v223
    %v226 = vadd.f32 %v199, %v224
    %v227 = vadd.f32 %v200, %v224
    %v228 = vadd.f32 %v201, %v224
    %v229 = vadd.f32 %v202, %v224
    %v230 = vadd.f32 %v203, %v224
    %v231 = vadd.f32 %v204, %v224
    %v232 = vadd.f32 %v205, %v224
    %v233 = vadd.f32 %v206, %v224
    %v234 = vadd.f32 %v207, %v224
    %v235 = vadd.f32 %v208, %v224
    %v236 = vadd.f32 %v209, %v224
    %v237 = vadd.f32 %v210, %v224
    %v238 = vadd.f32 %v211, %v224
    %v239 = vadd.f32 %v212, %v224
    %v240 = vadd.f32 %v213, %v224
    %v241 = vadd.f32 %v214, %v224
    %v242 = vadd.f32 %v215, %v224
    %v243 = vadd.f32 %v216, %v224
    %v244 = vadd.f32 %v217, %v224
    %v245 = vadd.f32 %v218, %v224
    %v246 = vpack.c.bf16 %v227, %v226
    %v247 = vpack.c.bf16 %v229, %v228
    %v248 = vpack.c.bf16 %v231, %v230
    %v249 = vpack.c.bf16 %v233, %v232
    %v250 = vpack.c.bf16 %v235, %v234
    %v251 = vpack.c.bf16 %v237, %v236
    %v252 = vpack.c.bf16 %v239, %v238
    %v253 = vpack.c.bf16 %v241, %v240
    %v254 = vpack.c.bf16 %v243, %v242
    %v255 = vpack.c.bf16 %v245, %v244
    %vm256 = vsmask.f32 7424
    %v258 = vshrl.u32 %v246, 16
    %v260 = vshll.u32 %v246, 16
    %v262 = vrot.slane %v260, 1
    %v263 = vor.u32 %v258, %v262
    %v265 = vshll.u32 %v247, 16
    %v267 = vrot.slane %v265, 1
    %v268 = vsel %vm256, %v263, %v267
    %v269 = vshrl.u32 %v247, 16
    %v271 = vor.u32 %v269, %v267
    %v273 = vshll.u32 %v248, 16
    %v275 = vrot.slane %v273, 1
    %v276 = vsel %vm256, %v271, %v275
    %v277 = vshrl.u32 %v248, 16
    %v279 = vor.u32 %v277, %v275
    %v281 = vshll.u32 %v249, 16
    %v283 = vrot.slane %v281, 1
    %v284 = vsel %vm256, %v279, %v283
    %v285 = vshrl.u32 %v249, 16
    %v287 = vor.u32 %v285, %v283
    %v289 = vshll.u32 %v250, 16
    %v291 = vrot.slane %v289, 1
    %v292 = vsel %vm256, %v287, %v291
    %v294 = vshrl.u32 %v251, 16
    %v296 = vshll.u32 %v251, 16
    %v298 = vrot.slane %v296, 1
    %v299 = vor.u32 %v294, %v298
    %v301 = vshll.u32 %v252, 16
    %v303 = vrot.slane %v301, 1
    %v304 = vsel %vm256, %v299, %v303
    %v305 = vshrl.u32 %v252, 16
    %v307 = vor.u32 %v305, %v303
    %v309 = vshll.u32 %v253, 16
    %v311 = vrot.slane %v309, 1
    %v312 = vsel %vm256, %v307, %v311
    %v313 = vshrl.u32 %v253, 16
    %v315 = vor.u32 %v313, %v311
    %v317 = vshll.u32 %v254, 16
    %v319 = vrot.slane %v317, 1
    %v320 = vsel %vm256, %v315, %v319
    %v321 = vshrl.u32 %v254, 16
    %v323 = vor.u32 %v321, %v319
    %v325 = vshll.u32 %v255, 16
    %v327 = vrot.slane %v325, 1
    %v328 = vsel %vm256, %v323, %v327
    %vm347 = vcmask 1046528
    %v348 = vrot.slane %v246, 1
    %v349 = vrot.slane %v247, 1
    %v350 = vsel %vm347, %v348, %v349
    %v351 = vrot.slane %v248, 1
    %v352 = vsel %vm347, %v349, %v351
    %v353 = vrot.slane %v249, 1
    %v354 = vsel %vm347, %v351, %v353
    %v355 = vrot.slane %v250, 1
    %v356 = vsel %vm347, %v353, %v355
    %v357 = vrot.slane %v251, 1
    %v358 = vrot.slane %v252, 1
    %v359 = vsel %vm347, %v357, %v358
    %v360 = vrot.slane %v253, 1
    %v361 = vsel %vm347, %v358, %v360
    %v362 = vrot.slane %v254, 1
    %v363 = vsel %vm347, %v360, %v362
    %v364 = vrot.slane %v255, 1
    %v365 = vsel %vm347, %v362, %v364
    %vm374 = vsmask.f32 6400
    %v375 = vrot.slane %v258, 1
    %v376 = vrot.slane %v260, 2
    %v377 = vor.u32 %v375, %v376
    %v378 = vrot.slane %v269, 1
    %v379 = vrot.slane %v265, 2
    %v380 = vor.u32 %v378, %v379
    %v381 = vsel %vm374, %v377, %v380
    %v382 = vrot.slane %v277, 1
    %v383 = vrot.slane %v273, 2
    %v384 = vor.u32 %v382, %v383
    %v385 = vsel %vm374, %v380, %v384
    %v386 = vrot.slane %v285, 1
    %v387 = vrot.slane %v281, 2
    %v388 = vor.u32 %v386, %v387
    %v389 = vsel %vm374, %v384, %v388
    %v390 = vshrl.u32 %v250, 16
    %v392 = vrot.slane %v390, 1
    %v393 = vrot.slane %v289, 2
    %v394 = vor.u32 %v392, %v393
    %v395 = vsel %vm374, %v388, %v394
    %v396 = vrot.slane %v294, 1
    %v397 = vrot.slane %v296, 2
    %v398 = vor.u32 %v396, %v397
    %v399 = vrot.slane %v305, 1
    %v400 = vrot.slane %v301, 2
    %v401 = vor.u32 %v399, %v400
    %v402 = vsel %vm374, %v398, %v401
    %v403 = vrot.slane %v313, 1
    %v404 = vrot.slane %v309, 2
    %v405 = vor.u32 %v403, %v404
    %v406 = vsel %vm374, %v401, %v405
    %v407 = vrot.slane %v321, 1
    %v408 = vrot.slane %v317, 2
    %v409 = vor.u32 %v407, %v408
    %v410 = vsel %vm374, %v405, %v409
    %v411 = vshrl.u32 %v255, 16
    %v413 = vrot.slane %v411, 1
    %v414 = vrot.slane %v325, 2
    %v415 = vor.u32 %v413, %v414
    %v416 = vsel %vm374, %v409, %v415
    %vm425 = vcmask 1045504
    %v426 = vrot.slane %v246, 2
    %v427 = vrot.slane %v247, 2
    %v428 = vsel %vm425, %v426, %v427
    %v429 = vrot.slane %v248, 2
    %v430 = vsel %vm425, %v427, %v429
    %v431 = vrot.slane %v249, 2
    %v432 = vsel %vm425, %v429, %v431
    %v433 = vrot.slane %v250, 2
    %v434 = vsel %vm425, %v431, %v433
    %v435 = vrot.slane %v251, 2
    %v436 = vrot.slane %v252, 2
    %v437 = vsel %vm425, %v435, %v436
    %v438 = vrot.slane %v253, 2
    %v439 = vsel %vm425, %v436, %v438
    %v440 = vrot.slane %v254, 2
    %v441 = vsel %vm425, %v438, %v440
    %v442 = vrot.slane %v255, 2
    %v443 = vsel %vm425, %v440, %v442
    %vm452 = vsmask.f32 5376
    %v453 = vrot.slane %v258, 2
    %v454 = vrot.slane %v260, 3
    %v455 = vor.u32 %v453, %v454
    %v456 = vrot.slane %v269, 2
    %v457 = vrot.slane %v265, 3
    %v458 = vor.u32 %v456, %v457
    %v459 = vsel %vm452, %v455, %v458
    %v460 = vrot.slane %v277, 2
    %v461 = vrot.slane %v273, 3
    %v462 = vor.u32 %v460, %v461
    %v463 = vsel %vm452, %v458, %v462
    %v464 = vrot.slane %v285, 2
    %v465 = vrot.slane %v281, 3
    %v466 = vor.u32 %v464, %v465
    %v467 = vsel %vm452, %v462, %v466
    %v468 = vrot.slane %v390, 2
    %v469 = vrot.slane %v289, 3
    %v470 = vor.u32 %v468, %v469
    %v471 = vsel %vm452, %v466, %v470
    %v472 = vrot.slane %v294, 2
    %v473 = vrot.slane %v296, 3
    %v474 = vor.u32 %v472, %v473
    %v475 = vrot.slane %v305, 2
    %v476 = vrot.slane %v301, 3
    %v477 = vor.u32 %v475, %v476
    %v478 = vsel %vm452, %v474, %v477
    %v479 = vrot.slane %v313, 2
    %v480 = vrot.slane %v309, 3
    %v481 = vor.u32 %v479, %v480
    %v482 = vsel %vm452, %v477, %v481
    %v483 = vrot.slane %v321, 2
    %v484 = vrot.slane %v317, 3
    %v485 = vor.u32 %v483, %v484
    %v486 = vsel %vm452, %v481, %v485
    %v487 = vrot.slane %v411, 2
    %v488 = vrot.slane %v325, 3
    %v489 = vor.u32 %v487, %v488
    %v490 = vsel %vm452, %v485, %v489
    %vm499 = vcmask 1044480
    %v500 = vrot.slane %v246, 3
    %v501 = vrot.slane %v247, 3
    %v502 = vsel %vm499, %v500, %v501
    %v503 = vrot.slane %v248, 3
    %v504 = vsel %vm499, %v501, %v503
    %v505 = vrot.slane %v249, 3
    %v506 = vsel %vm499, %v503, %v505
    %v507 = vrot.slane %v250, 3
    %v508 = vsel %vm499, %v505, %v507
    %v509 = vrot.slane %v251, 3
    %v510 = vrot.slane %v252, 3
    %v511 = vsel %vm499, %v509, %v510
    %v512 = vrot.slane %v253, 3
    %v513 = vsel %vm499, %v510, %v512
    %v514 = vrot.slane %v254, 3
    %v515 = vsel %vm499, %v512, %v514
    %v516 = vrot.slane %v255, 3
    %v517 = vsel %vm499, %v514, %v516
    %vm526 = vsmask.f32 4352
    %v527 = vrot.slane %v258, 3
    %v528 = vrot.slane %v260, 4
    %v529 = vor.u32 %v527, %v528
    %v530 = vrot.slane %v269, 3
    %v531 = vrot.slane %v265, 4
    %v532 = vor.u32 %v530, %v531
    %v533 = vsel %vm526, %v529, %v532
    %v534 = vrot.slane %v277, 3
    %v535 = vrot.slane %v273, 4
    %v536 = vor.u32 %v534, %v535
    %v537 = vsel %vm526, %v532, %v536
    %v538 = vrot.slane %v285, 3
    %v539 = vrot.slane %v281, 4
    %v540 = vor.u32 %v538, %v539
    %v541 = vsel %vm526, %v536, %v540
    %v542 = vrot.slane %v390, 3
    %v543 = vrot.slane %v289, 4
    %v544 = vor.u32 %v542, %v543
    %v545 = vsel %vm526, %v540, %v544
    %v546 = vrot.slane %v294, 3
    %v547 = vrot.slane %v296, 4
    %v548 = vor.u32 %v546, %v547
    %v549 = vrot.slane %v305, 3
    %v550 = vrot.slane %v301, 4
    %v551 = vor.u32 %v549, %v550
    %v552 = vsel %vm526, %v548, %v551
    %v553 = vrot.slane %v313, 3
    %v554 = vrot.slane %v309, 4
    %v555 = vor.u32 %v553, %v554
    %v556 = vsel %vm526, %v551, %v555
    %v557 = vrot.slane %v321, 3
    %v558 = vrot.slane %v317, 4
    %v559 = vor.u32 %v557, %v558
    %v560 = vsel %vm526, %v555, %v559
    %v561 = vrot.slane %v411, 3
    %v562 = vrot.slane %v325, 4
    %v563 = vor.u32 %v561, %v562
    %v564 = vsel %vm526, %v559, %v563
    %vm573 = vcmask 1043456
    %v574 = vrot.slane %v246, 4
    %v575 = vrot.slane %v247, 4
    %v576 = vsel %vm573, %v574, %v575
    %v577 = vrot.slane %v248, 4
    %v578 = vsel %vm573, %v575, %v577
    %v579 = vrot.slane %v249, 4
    %v580 = vsel %vm573, %v577, %v579
    %v581 = vrot.slane %v250, 4
    %v582 = vsel %vm573, %v579, %v581
    %v583 = vrot.slane %v251, 4
    %v584 = vrot.slane %v252, 4
    %v585 = vsel %vm573, %v583, %v584
    %v586 = vrot.slane %v253, 4
    %v587 = vsel %vm573, %v584, %v586
    %v588 = vrot.slane %v254, 4
    %v589 = vsel %vm573, %v586, %v588
    %v590 = vrot.slane %v255, 4
    %v591 = vsel %vm573, %v588, %v590
    %vm600 = vsmask.f32 3328
    %v601 = vrot.slane %v258, 4
    %v602 = vrot.slane %v260, 5
    %v603 = vor.u32 %v601, %v602
    %v604 = vrot.slane %v269, 4
    %v605 = vrot.slane %v265, 5
    %v606 = vor.u32 %v604, %v605
    %v607 = vsel %vm600, %v603, %v606
    %v608 = vrot.slane %v277, 4
    %v609 = vrot.slane %v273, 5
    %v610 = vor.u32 %v608, %v609
    %v611 = vsel %vm600, %v606, %v610
    %v612 = vrot.slane %v285, 4
    %v613 = vrot.slane %v281, 5
    %v614 = vor.u32 %v612, %v613
    %v615 = vsel %vm600, %v610, %v614
    %v616 = vrot.slane %v390, 4
    %v617 = vrot.slane %v289, 5
    %v618 = vor.u32 %v616, %v617
    %v619 = vsel %vm600, %v614, %v618
    %v620 = vrot.slane %v294, 4
    %v621 = vrot.slane %v296, 5
    %v622 = vor.u32 %v620, %v621
    %v623 = vrot.slane %v305, 4
    %v624 = vrot.slane %v301, 5
    %v625 = vor.u32 %v623, %v624
    %v626 = vsel %vm600, %v622, %v625
    %v627 = vrot.slane %v313, 4
    %v628 = vrot.slane %v309, 5
    %v629 = vor.u32 %v627, %v628
    %v630 = vsel %vm600, %v625, %v629
    %v631 = vrot.slane %v321, 4
    %v632 = vrot.slane %v317, 5
    %v633 = vor.u32 %v631, %v632
    %v634 = vsel %vm600, %v629, %v633
    %v635 = vrot.slane %v411, 4
    %v636 = vrot.slane %v325, 5
    %v637 = vor.u32 %v635, %v636
    %v638 = vsel %vm600, %v633, %v637
    %v647 = vld [vmem:[#allocation2] sm:$0xf]
    %v648 = vld [vmem:[#allocation2 + $0x4] sm:$0xf]
    %v649 = vld [vmem:[#allocation2 + $0x8] sm:$0xf]
    %v650 = vld [vmem:[#allocation2 + $0xc] sm:$0xf]
    %v651 = vld [vmem:[#allocation2 + $0x10] sm:$0xf]
    %v652 = vld [vmem:[#allocation2 + $0x14] sm:$0xf]
    %v653 = vld [vmem:[#allocation2 + $0x18] sm:$0xf]
    %v654 = vld [vmem:[#allocation2 + $0x1c] sm:$0xf]
    %v655 = vld [vmem:[#allocation2 + $0x20] sm:$0xf]
    %v656 = vld [vmem:[#allocation2 + $0x24] sm:$0xf]
    %v657 = vld [vmem:[#allocation2 + $0x28] sm:$0xf]
    %v658 = vld [vmem:[#allocation2 + $0x2c] sm:$0xf]
    %v659 = vld [vmem:[#allocation2 + $0x30] sm:$0xf]
    %v660 = vld [vmem:[#allocation2 + $0x34] sm:$0xf]
    %v661 = vld [vmem:[#allocation2 + $0x38] sm:$0xf]
    %v662 = vld [vmem:[#allocation2 + $0x3c] sm:$0xf]
    %v663 = vld [vmem:[#allocation2 + $0x40] sm:$0xf]
    %v664 = vld [vmem:[#allocation2 + $0x44] sm:$0xf]
    %v665 = vld [vmem:[#allocation2 + $0x48] sm:$0xf]
    %v666 = vld [vmem:[#allocation2 + $0x4c] sm:$0xf]
    %v667 = vld [vmem:[#allocation2 + $0x50] sm:$0xf]
    %v668 = vld [vmem:[#allocation2 + $0x54] sm:$0xf]
    %v669 = vld [vmem:[#allocation2 + $0x58] sm:$0xf]
    %v670 = vld [vmem:[#allocation2 + $0x5c] sm:$0xf]
    %v671 = vld [vmem:[#allocation2 + $0x60] sm:$0xf]
    %v672 = vld [vmem:[#allocation2 + $0x64] sm:$0xf]
    %v673 = vld [vmem:[#allocation2 + $0x68] sm:$0xf]
    %v674 = vld [vmem:[#allocation2 + $0x6c] sm:$0xf]
    %v675 = vld [vmem:[#allocation2 + $0x70] sm:$0xf]
    %v676 = vld [vmem:[#allocation2 + $0x74] sm:$0xf]
    %v677 = vld [vmem:[#allocation2 + $0x78] sm:$0xf]
    %v678 = vld [vmem:[#allocation2 + $0x7c] sm:$0xf]
    %v679 = vld [vmem:[#allocation2 + $0x80] sm:$0xf]
    %v680 = vld [vmem:[#allocation2 + $0x84] sm:$0xf]
    %v681 = vld [vmem:[#allocation2 + $0x88] sm:$0xf]
    %v682 = vld [vmem:[#allocation2 + $0x8c] sm:$0xf]
    %v683 = vld [vmem:[#allocation2 + $0x90] sm:$0xf]
    %v684 = vld [vmem:[#allocation2 + $0x94] sm:$0xf]
    %v685 = vld [vmem:[#allocation2 + $0x98] sm:$0xf]
    %v686 = vld [vmem:[#allocation2 + $0x9c] sm:$0xf]
    %v687 = vld [vmem:[#allocation2 + $0xa0] sm:$0xf]
    %v688 = vld [vmem:[#allocation2 + $0xa4] sm:$0xf]
    %v689 = vld [vmem:[#allocation2 + $0xa8] sm:$0xf]
    %v690 = vld [vmem:[#allocation2 + $0xac] sm:$0xf]
    %v691 = vld [vmem:[#allocation2 + $0xb0] sm:$0xf]
    %v692 = vld [vmem:[#allocation2 + $0xb4] sm:$0xf]
    %v693 = vld [vmem:[#allocation2 + $0xb8] sm:$0xf]
    %v694 = vld [vmem:[#allocation2 + $0xbc] sm:$0xf]
    %v695 = vld [vmem:[#allocation2 + $0xc0] sm:$0xf]
    %v696 = vld [vmem:[#allocation2 + $0xc4] sm:$0xf]
    %v697 = vld [vmem:[#allocation2 + $0xc8] sm:$0xf]
    %v698 = vld [vmem:[#allocation2 + $0xcc] sm:$0xf]
    %v699 = vld [vmem:[#allocation2 + $0xd0] sm:$0xf]
    %v700 = vld [vmem:[#allocation2 + $0xd4] sm:$0xf]
    %v701 = vld [vmem:[#allocation2 + $0xd8] sm:$0xf]
    %v702 = vld [vmem:[#allocation2 + $0xdc] sm:$0xf]
    %v703 = vld [vmem:[#allocation2 + $0xe0] sm:$0xf]
    %v704 = vld [vmem:[#allocation2 + $0xe4] sm:$0xf]
    %v705 = vld [vmem:[#allocation2 + $0xe8] sm:$0xf]
    %v706 = vld [vmem:[#allocation2 + $0xec] sm:$0xf]
    %v707 = vld [vmem:[#allocation2 + $0xf0] sm:$0xf]
    %v708 = vld [vmem:[#allocation2 + $0xf4] sm:$0xf]
    %v709 = vld [vmem:[#allocation2 + $0xf8] sm:$0xf]
    %v710 = vld [vmem:[#allocation2 + $0xfc] sm:$0xf]
    %v711 = vld [vmem:[#allocation2 + $0x100] sm:$0xf]
    %v712 = vld [vmem:[#allocation2 + $0x104] sm:$0xf]
    %v713 = vld [vmem:[#allocation2 + $0x108] sm:$0xf]
    %v714 = vld [vmem:[#allocation2 + $0x10c] sm:$0xf]
    %v715 = vld [vmem:[#allocation2 + $0x110] sm:$0xf]
    %v716 = vld [vmem:[#allocation2 + $0x114] sm:$0xf]
    %v717 = vld [vmem:[#allocation2 + $0x118] sm:$0xf]
    %v718 = vld [vmem:[#allocation2 + $0x11c] sm:$0xf]
    %v719 = vld [vmem:[#allocation2 + $0x120] sm:$0xf]
    %v720 = vld [vmem:[#allocation2 + $0x124] sm:$0xf]
    %v721 = vld [vmem:[#allocation2 + $0x128] sm:$0xf]
    %v722 = vld [vmem:[#allocation2 + $0x12c] sm:$0xf]
    %v723 = vld [vmem:[#allocation2 + $0x130] sm:$0xf]
    %v724 = vld [vmem:[#allocation2 + $0x134] sm:$0xf]
    %v725 = vld [vmem:[#allocation2 + $0x138] sm:$0xf]
    %v726 = vld [vmem:[#allocation2 + $0x13c] sm:$0xf]
    %v727 = vld [vmem:[#allocation2 + $0x140] sm:$0xf]
    %v728 = vld [vmem:[#allocation2 + $0x144] sm:$0xf]
    %v729 = vld [vmem:[#allocation2 + $0x148] sm:$0xf]
    %v730 = vld [vmem:[#allocation2 + $0x14c] sm:$0xf]
    %v731 = vld [vmem:[#allocation2 + $0x150] sm:$0xf]
    %v732 = vld [vmem:[#allocation2 + $0x154] sm:$0xf]
    %v733 = vld [vmem:[#allocation2 + $0x158] sm:$0xf]
    %v734 = vld [vmem:[#allocation2 + $0x15c] sm:$0xf]
    %v735 = vld [vmem:[#allocation2 + $0x160] sm:$0xf]
    %v736 = vld [vmem:[#allocation2 + $0x164] sm:$0xf]
    %v737 = vld [vmem:[#allocation2 + $0x168] sm:$0xf]
    %v738 = vld [vmem:[#allocation2 + $0x16c] sm:$0xf]
    %v739 = vld [vmem:[#allocation2 + $0x170] sm:$0xf]
    %v740 = vld [vmem:[#allocation2 + $0x174] sm:$0xf]
    %v741 = vld [vmem:[#allocation2 + $0x178] sm:$0xf]
    %v742 = vld [vmem:[#allocation2 + $0x17c] sm:$0xf]
    %v743 = vld [vmem:[#allocation2 + $0x180] sm:$0xf]
    %v744 = vld [vmem:[#allocation2 + $0x184] sm:$0xf]
    %v745 = vld [vmem:[#allocation2 + $0x188] sm:$0xf]
    %v746 = vld [vmem:[#allocation2 + $0x18c] sm:$0xf]
    %v747 = vld [vmem:[#allocation2 + $0x190] sm:$0xf]
    %v748 = vld [vmem:[#allocation2 + $0x194] sm:$0xf]
    %v749 = vld [vmem:[#allocation2 + $0x198] sm:$0xf]
    %v750 = vld [vmem:[#allocation2 + $0x19c] sm:$0xf]
    %v751 = vld [vmem:[#allocation2 + $0x1a0] sm:$0xf]
    %v752 = vld [vmem:[#allocation2 + $0x1a4] sm:$0xf]
    %v753 = vld [vmem:[#allocation2 + $0x1a8] sm:$0xf]
    %v754 = vld [vmem:[#allocation2 + $0x1ac] sm:$0xf]
    %v755 = vld [vmem:[#allocation2 + $0x1b0] sm:$0xf]
    %v756 = vld [vmem:[#allocation2 + $0x1b4] sm:$0xf]
    %v757 = vld [vmem:[#allocation2 + $0x1b8] sm:$0xf]
    %v758 = vld [vmem:[#allocation2 + $0x1bc] sm:$0xf]
    %v759 = vld [vmem:[#allocation2 + $0x1c0] sm:$0xf]
    %v760 = vld [vmem:[#allocation2 + $0x1c4] sm:$0xf]
    %v761 = vld [vmem:[#allocation2 + $0x1c8] sm:$0xf]
    %v762 = vld [vmem:[#allocation2 + $0x1cc] sm:$0xf]
    %v763 = vld [vmem:[#allocation2 + $0x1d0] sm:$0xf]
    %v764 = vld [vmem:[#allocation2 + $0x1d4] sm:$0xf]
    %v765 = vld [vmem:[#allocation2 + $0x1d8] sm:$0xf]
    %v766 = vld [vmem:[#allocation2 + $0x1dc] sm:$0xf]
    %v767 = vld [vmem:[#allocation2 + $0x1e0] sm:$0xf]
    %v768 = vld [vmem:[#allocation2 + $0x1e4] sm:$0xf]
    %v769 = vld [vmem:[#allocation2 + $0x1e8] sm:$0xf]
    %v770 = vld [vmem:[#allocation2 + $0x1ec] sm:$0xf]
    %v771 = vld [vmem:[#allocation2 + $0x1f0] sm:$0xf]
    %v772 = vld [vmem:[#allocation2 + $0x1f4] sm:$0xf]
    %v773 = vld [vmem:[#allocation2 + $0x1f8] sm:$0xf]
    %v774 = vld [vmem:[#allocation2 + $0x1fc] sm:$0xf]
    %v775 = vld [vmem:[#allocation2 + $0x200] sm:$0xf]
    %v776 = vld [vmem:[#allocation2 + $0x204] sm:$0xf]
    %v777 = vld [vmem:[#allocation2 + $0x208] sm:$0xf]
    %v778 = vld [vmem:[#allocation2 + $0x20c] sm:$0xf]
    %v779 = vld [vmem:[#allocation2 + $0x210] sm:$0xf]
    %v780 = vld [vmem:[#allocation2 + $0x214] sm:$0xf]
    %v781 = vld [vmem:[#allocation2 + $0x218] sm:$0xf]
    %v782 = vld [vmem:[#allocation2 + $0x21c] sm:$0xf]
    %v783 = vld [vmem:[#allocation2 + $0x220] sm:$0xf]
    %v784 = vld [vmem:[#allocation2 + $0x224] sm:$0xf]
    %v785 = vld [vmem:[#allocation2 + $0x228] sm:$0xf]
    %v786 = vld [vmem:[#allocation2 + $0x22c] sm:$0xf]
    %v787 = vld [vmem:[#allocation2 + $0x230] sm:$0xf]
    %v788 = vld [vmem:[#allocation2 + $0x234] sm:$0xf]
    %v789 = vld [vmem:[#allocation2 + $0x238] sm:$0xf]
    %v790 = vld [vmem:[#allocation2 + $0x23c] sm:$0xf]
    %v791 = vld [vmem:[#allocation2 + $0x240] sm:$0xf]
    %v792 = vld [vmem:[#allocation2 + $0x244] sm:$0xf]
    %v793 = vld [vmem:[#allocation2 + $0x248] sm:$0xf]
    %v794 = vld [vmem:[#allocation2 + $0x24c] sm:$0xf]
    %v795 = vld [vmem:[#allocation2 + $0x250] sm:$0xf]
    %v796 = vld [vmem:[#allocation2 + $0x254] sm:$0xf]
    %v797 = vld [vmem:[#allocation2 + $0x258] sm:$0xf]
    %v798 = vld [vmem:[#allocation2 + $0x25c] sm:$0xf]
    %v799 = vld [vmem:[#allocation2 + $0x260] sm:$0xf]
    %v800 = vld [vmem:[#allocation2 + $0x264] sm:$0xf]
    %v801 = vld [vmem:[#allocation2 + $0x268] sm:$0xf]
    %v802 = vld [vmem:[#allocation2 + $0x26c] sm:$0xf]
    %v803 = vld [vmem:[#allocation2 + $0x270] sm:$0xf]
    %v804 = vld [vmem:[#allocation2 + $0x274] sm:$0xf]
    %v805 = vld [vmem:[#allocation2 + $0x278] sm:$0xf]
    %v806 = vld [vmem:[#allocation2 + $0x27c] sm:$0xf]
    %v807 = vld [vmem:[%s2] sm:$0x1]
    %v809 = vlaneseq
    %v810 = vshrl.u32 %v809, 7
    %v811 = vsub.s32 0, %v810
    %v812 = vrot.slane %v807, %v811
    %v974 = vunpack.c.l.b16 %v647
    %v975 = vunpack.c.l.b16 %v648
    %v976 = vunpack.c.l.b16 %v649
    %v977 = vunpack.c.l.b16 %v650
    %v978 = vunpack.c.l.b16 %v651
    %v979 = vunpack.c.l.b16 %v652
    %v980 = vunpack.c.l.b16 %v653
    %v981 = vunpack.c.l.b16 %v654
    %v982 = vunpack.c.l.b16 %v655
    %v983 = vunpack.c.l.b16 %v656
    %v984 = vunpack.c.l.b16 %v657
    %v985 = vunpack.c.l.b16 %v658
    %v986 = vunpack.c.l.b16 %v659
    %v987 = vunpack.c.l.b16 %v660
    %v988 = vunpack.c.l.b16 %v661
    %v989 = vunpack.c.l.b16 %v662
    %v990 = vunpack.c.l.b16 %v663
    %v991 = vunpack.c.l.b16 %v664
    %v992 = vunpack.c.l.b16 %v665
    %v993 = vunpack.c.l.b16 %v666
    %v994 = vunpack.c.l.b16 %v667
    %v995 = vunpack.c.l.b16 %v668
    %v996 = vunpack.c.l.b16 %v669
    %v997 = vunpack.c.l.b16 %v670
    %v998 = vunpack.c.l.b16 %v671
    %v999 = vunpack.c.l.b16 %v672
    %v1000 = vunpack.c.l.b16 %v673
    %v1001 = vunpack.c.l.b16 %v674
    %v1002 = vunpack.c.l.b16 %v675
    %v1003 = vunpack.c.l.b16 %v676
    %v1004 = vunpack.c.l.b16 %v677
    %v1005 = vunpack.c.l.b16 %v678
    %v1006 = vunpack.c.l.b16 %v679
    %v1007 = vunpack.c.l.b16 %v680
    %v1008 = vunpack.c.l.b16 %v681
    %v1009 = vunpack.c.l.b16 %v682
    %v1010 = vunpack.c.l.b16 %v683
    %v1011 = vunpack.c.l.b16 %v684
    %v1012 = vunpack.c.l.b16 %v685
    %v1013 = vunpack.c.l.b16 %v686
    %v1014 = vunpack.c.l.b16 %v687
    %v1015 = vunpack.c.l.b16 %v688
    %v1016 = vunpack.c.l.b16 %v689
    %v1017 = vunpack.c.l.b16 %v690
    %v1018 = vunpack.c.l.b16 %v691
    %v1019 = vunpack.c.l.b16 %v692
    %v1020 = vunpack.c.l.b16 %v693
    %v1021 = vunpack.c.l.b16 %v694
    %v1022 = vunpack.c.l.b16 %v695
    %v1023 = vunpack.c.l.b16 %v696
    %v1024 = vunpack.c.l.b16 %v697
    %v1025 = vunpack.c.l.b16 %v698
    %v1026 = vunpack.c.l.b16 %v699
    %v1027 = vunpack.c.l.b16 %v700
    %v1028 = vunpack.c.l.b16 %v701
    %v1029 = vunpack.c.l.b16 %v702
    %v1030 = vunpack.c.l.b16 %v703
    %v1031 = vunpack.c.l.b16 %v704
    %v1032 = vunpack.c.l.b16 %v705
    %v1033 = vunpack.c.l.b16 %v706
    %v1034 = vunpack.c.l.b16 %v707
    %v1035 = vunpack.c.l.b16 %v708
    %v1036 = vunpack.c.l.b16 %v709
    %v1037 = vunpack.c.l.b16 %v710
    %v1038 = vunpack.c.l.b16 %v711
    %v1039 = vunpack.c.l.b16 %v712
    %v1040 = vunpack.c.l.b16 %v713
    %v1041 = vunpack.c.l.b16 %v714
    %v1042 = vunpack.c.l.b16 %v715
    %v1043 = vunpack.c.l.b16 %v716
    %v1044 = vunpack.c.l.b16 %v717
    %v1045 = vunpack.c.l.b16 %v718
    %v1046 = vunpack.c.l.b16 %v719
    %v1047 = vunpack.c.l.b16 %v720
    %v1048 = vunpack.c.l.b16 %v721
    %v1049 = vunpack.c.l.b16 %v722
    %v1050 = vunpack.c.l.b16 %v723
    %v1051 = vunpack.c.l.b16 %v724
    %v1052 = vunpack.c.l.b16 %v725
    %v1053 = vunpack.c.l.b16 %v726
    %v1054 = vunpack.c.l.b16 %v727
    %v1055 = vunpack.c.l.b16 %v728
    %v1056 = vunpack.c.l.b16 %v729
    %v1057 = vunpack.c.l.b16 %v730
    %v1058 = vunpack.c.l.b16 %v731
    %v1059 = vunpack.c.l.b16 %v732
    %v1060 = vunpack.c.l.b16 %v733
    %v1061 = vunpack.c.l.b16 %v734
    %v1062 = vunpack.c.l.b16 %v735
    %v1063 = vunpack.c.l.b16 %v736
    %v1064 = vunpack.c.l.b16 %v737
    %v1065 = vunpack.c.l.b16 %v738
    %v1066 = vunpack.c.l.b16 %v739
    %v1067 = vunpack.c.l.b16 %v740
    %v1068 = vunpack.c.l.b16 %v741
    %v1069 = vunpack.c.l.b16 %v742
    %v1070 = vunpack.c.l.b16 %v743
    %v1071 = vunpack.c.l.b16 %v744
    %v1072 = vunpack.c.l.b16 %v745
    %v1073 = vunpack.c.l.b16 %v746
    %v1074 = vunpack.c.l.b16 %v747
    %v1075 = vunpack.c.l.b16 %v748
    %v1076 = vunpack.c.l.b16 %v749
    %v1077 = vunpack.c.l.b16 %v750
    %v1078 = vunpack.c.l.b16 %v751
    %v1079 = vunpack.c.l.b16 %v752
    %v1080 = vunpack.c.l.b16 %v753
    %v1081 = vunpack.c.l.b16 %v754
    %v1082 = vunpack.c.l.b16 %v755
    %v1083 = vunpack.c.l.b16 %v756
    %v1084 = vunpack.c.l.b16 %v757
    %v1085 = vunpack.c.l.b16 %v758
    %v1086 = vunpack.c.l.b16 %v759
    %v1087 = vunpack.c.l.b16 %v760
    %v1088 = vunpack.c.l.b16 %v761
    %v1089 = vunpack.c.l.b16 %v762
    %v1090 = vunpack.c.l.b16 %v763
    %v1091 = vunpack.c.l.b16 %v764
    %v1092 = vunpack.c.l.b16 %v765
    %v1093 = vunpack.c.l.b16 %v766
    %v1094 = vunpack.c.l.b16 %v767
    %v1095 = vunpack.c.l.b16 %v768
    %v1096 = vunpack.c.l.b16 %v769
    %v1097 = vunpack.c.l.b16 %v770
    %v1098 = vunpack.c.l.b16 %v771
    %v1099 = vunpack.c.l.b16 %v772
    %v1100 = vunpack.c.l.b16 %v773
    %v1101 = vunpack.c.l.b16 %v774
    %v1102 = vunpack.c.l.b16 %v775
    %v1103 = vunpack.c.l.b16 %v776
    %v1104 = vunpack.c.l.b16 %v777
    %v1105 = vunpack.c.l.b16 %v778
    %v1106 = vunpack.c.l.b16 %v779
    %v1107 = vunpack.c.l.b16 %v780
    %v1108 = vunpack.c.l.b16 %v781
    %v1109 = vunpack.c.l.b16 %v782
    %v1110 = vunpack.c.l.b16 %v783
    %v1111 = vunpack.c.l.b16 %v784
    %v1112 = vunpack.c.l.b16 %v785
    %v1113 = vunpack.c.l.b16 %v786
    %v1114 = vunpack.c.l.b16 %v787
    %v1115 = vunpack.c.l.b16 %v788
    %v1116 = vunpack.c.l.b16 %v789
    %v1117 = vunpack.c.l.b16 %v790
    %v1118 = vunpack.c.l.b16 %v791
    %v1119 = vunpack.c.l.b16 %v792
    %v1120 = vunpack.c.l.b16 %v793
    %v1121 = vunpack.c.l.b16 %v794
    %v1122 = vunpack.c.l.b16 %v795
    %v1123 = vunpack.c.l.b16 %v796
    %v1124 = vunpack.c.l.b16 %v797
    %v1125 = vunpack.c.l.b16 %v798
    %v1126 = vunpack.c.l.b16 %v799
    %v1127 = vunpack.c.l.b16 %v800
    %v1128 = vunpack.c.l.b16 %v801
    %v1129 = vunpack.c.l.b16 %v802
    %v1130 = vunpack.c.l.b16 %v803
    %v1131 = vunpack.c.l.b16 %v804
    %v1132 = vunpack.c.l.b16 %v805
    %v1133 = vunpack.c.l.b16 %v806
    %v1134 = vpack.c.b16 %v975, %v974
    %v1135 = vpack.c.b16 %v977, %v976
    %v1136 = vpack.c.b16 %v979, %v978
    %v1137 = vpack.c.b16 %v981, %v980
    %v1138 = vpack.c.b16 %v983, %v982
    %v1139 = vpack.c.b16 %v985, %v984
    %v1140 = vpack.c.b16 %v987, %v986
    %v1141 = vpack.c.b16 %v989, %v988
    %v1142 = vpack.c.b16 %v991, %v990
    %v1143 = vpack.c.b16 %v993, %v992
    %v1144 = vpack.c.b16 %v995, %v994
    %v1145 = vpack.c.b16 %v997, %v996
    %v1146 = vpack.c.b16 %v999, %v998
    %v1147 = vpack.c.b16 %v1001, %v1000
    %v1148 = vpack.c.b16 %v1003, %v1002
    %v1149 = vpack.c.b16 %v1005, %v1004
    %v1150 = vpack.c.b16 %v1007, %v1006
    %v1151 = vpack.c.b16 %v1009, %v1008
    %v1152 = vpack.c.b16 %v1011, %v1010
    %v1153 = vpack.c.b16 %v1013, %v1012
    %v1154 = vpack.c.b16 %v1015, %v1014
    %v1155 = vpack.c.b16 %v1017, %v1016
    %v1156 = vpack.c.b16 %v1019, %v1018
    %v1157 = vpack.c.b16 %v1021, %v1020
    %v1158 = vpack.c.b16 %v1023, %v1022
    %v1159 = vpack.c.b16 %v1025, %v1024
    %v1160 = vpack.c.b16 %v1027, %v1026
    %v1161 = vpack.c.b16 %v1029, %v1028
    %v1162 = vpack.c.b16 %v1031, %v1030
    %v1163 = vpack.c.b16 %v1033, %v1032
    %v1164 = vpack.c.b16 %v1035, %v1034
    %v1165 = vpack.c.b16 %v1037, %v1036
    %v1166 = vpack.c.b16 %v1039, %v1038
    %v1167 = vpack.c.b16 %v1041, %v1040
    %v1168 = vpack.c.b16 %v1043, %v1042
    %v1169 = vpack.c.b16 %v1045, %v1044
    %v1170 = vpack.c.b16 %v1047, %v1046
    %v1171 = vpack.c.b16 %v1049, %v1048
    %v1172 = vpack.c.b16 %v1051, %v1050
    %v1173 = vpack.c.b16 %v1053, %v1052
    %v1174 = vpack.c.b16 %v1055, %v1054
    %v1175 = vpack.c.b16 %v1057, %v1056
    %v1176 = vpack.c.b16 %v1059, %v1058
    %v1177 = vpack.c.b16 %v1061, %v1060
    %v1178 = vpack.c.b16 %v1063, %v1062
    %v1179 = vpack.c.b16 %v1065, %v1064
    %v1180 = vpack.c.b16 %v1067, %v1066
    %v1181 = vpack.c.b16 %v1069, %v1068
    %v1182 = vpack.c.b16 %v1071, %v1070
    %v1183 = vpack.c.b16 %v1073, %v1072
    %v1184 = vpack.c.b16 %v1075, %v1074
    %v1185 = vpack.c.b16 %v1077, %v1076
    %v1186 = vpack.c.b16 %v1079, %v1078
    %v1187 = vpack.c.b16 %v1081, %v1080
    %v1188 = vpack.c.b16 %v1083, %v1082
    %v1189 = vpack.c.b16 %v1085, %v1084
    %v1190 = vpack.c.b16 %v1087, %v1086
    %v1191 = vpack.c.b16 %v1089, %v1088
    %v1192 = vpack.c.b16 %v1091, %v1090
    %v1193 = vpack.c.b16 %v1093, %v1092
    %v1194 = vpack.c.b16 %v1095, %v1094
    %v1195 = vpack.c.b16 %v1097, %v1096
    %v1196 = vpack.c.b16 %v1099, %v1098
    %v1197 = vpack.c.b16 %v1101, %v1100
    %v1198 = vpack.c.b16 %v1103, %v1102
    %v1199 = vpack.c.b16 %v1105, %v1104
    %v1200 = vpack.c.b16 %v1107, %v1106
    %v1201 = vpack.c.b16 %v1109, %v1108
    %v1202 = vpack.c.b16 %v1111, %v1110
    %v1203 = vpack.c.b16 %v1113, %v1112
    %v1204 = vpack.c.b16 %v1115, %v1114
    %v1205 = vpack.c.b16 %v1117, %v1116
    %v1206 = vpack.c.b16 %v1119, %v1118
    %v1207 = vpack.c.b16 %v1121, %v1120
    %v1208 = vpack.c.b16 %v1123, %v1122
    %v1209 = vpack.c.b16 %v1125, %v1124
    %v1210 = vpack.c.b16 %v1127, %v1126
    %v1211 = vpack.c.b16 %v1129, %v1128
    %v1212 = vpack.c.b16 %v1131, %v1130
    %v1213 = vpack.c.b16 %v1133, %v1132
    %1294 = vmatprep.subr.bf16.mxu0 0
    %1295 = vmatpush1.bf16.msra.mxu0 %v1141
    %1296 = vmatprep.subr.bf16.mxu0 0
    %1297 = vmatpush1.bf16.msra.mxu0 %v1140
    %1298 = vmatprep.subr.bf16.mxu0 0
    %1299 = vmatpush1.bf16.msra.mxu0 %v1139
    %1300 = vmatprep.subr.bf16.mxu0 0
    %1301 = vmatpush1.bf16.msra.mxu0 %v1138
    %1302 = vmatprep.subr.bf16.mxu0 0
    %1303 = vmatpush1.bf16.msra.mxu0 %v1137
    %1304 = vmatprep.subr.bf16.mxu0 0
    %1305 = vmatpush1.bf16.msra.mxu0 %v1136
    %1306 = vmatprep.subr.bf16.mxu0 0
    %1307 = vmatpush1.bf16.msra.mxu0 %v1135
    %1308 = vmatprep.subr.bf16.mxu0 0
    %1309 = vmatpush1.bf16.msra.mxu0 %v1134
    %1310 = vmatprep.subr.bf16.mxu0 0
    %1311 = vmatpush2.bf16.msra.mxu0 %v1149
    %1312 = vmatprep.subr.bf16.mxu0 0
    %1313 = vmatpush2.bf16.msra.mxu0 %v1148
    %1314 = vmatprep.subr.bf16.mxu0 0
    %1315 = vmatpush2.bf16.msra.mxu0 %v1147
    %1316 = vmatprep.subr.bf16.mxu0 0
    %1317 = vmatpush2.bf16.msra.mxu0 %v1146
    %1318 = vmatprep.subr.bf16.mxu0 0
    %1319 = vmatpush2.bf16.msra.mxu0 %v1145
    %1320 = vmatprep.subr.bf16.mxu0 0
    %1321 = vmatpush2.bf16.msra.mxu0 %v1144
    %1322 = vmatprep.subr.bf16.mxu0 0
    %1323 = vmatpush2.bf16.msra.mxu0 %v1143
    %1324 = vmatprep.subr.bf16.mxu0 0
    %1325 = vmatpush2.bf16.msra.mxu0 %v1142
    %1326 = vmatprep.mubr.bf16.mxu0 %v268
    %1327 = vmatmul.mubr.bf16.gmra.mxu0 %v246
    %v1328 = vpop.f32.mrf.mxu0
    %v1329 = vadd.f32 %v812, %v1328
    %v1330 = vpop.f32.mrf.mxu0
    %v1331 = vpop.f32.mrf.mxu0
    %v1332 = vadd.f32 %v812, %v1331
    %v1333 = vpop.f32.mrf.mxu0
    %1334 = vmatprep.mubr.bf16.mxu0 %v276
    %1335 = vmatmul.mubr.bf16.gmra.mxu0 %v247
    %v1336 = vpop.f32.mrf.mxu0
    %v1337 = vadd.f32 %v812, %v1336
    %v1338 = vpop.f32.mrf.mxu0
    %v1339 = vpop.f32.mrf.mxu0
    %v1340 = vadd.f32 %v812, %v1339
    %v1341 = vpop.f32.mrf.mxu0
    %1342 = vmatprep.mubr.bf16.mxu0 %v284
    %1343 = vmatmul.mubr.bf16.gmra.mxu0 %v248
    %v1344 = vpop.f32.mrf.mxu0
    %v1345 = vadd.f32 %v812, %v1344
    %v1346 = vpop.f32.mrf.mxu0
    %v1347 = vpop.f32.mrf.mxu0
    %v1348 = vadd.f32 %v812, %v1347
    %v1349 = vpop.f32.mrf.mxu0
    %1350 = vmatprep.mubr.bf16.mxu0 %v292
    %1351 = vmatmul.mubr.bf16.gmra.mxu0 %v249
    %v1352 = vpop.f32.mrf.mxu0
    %v1353 = vadd.f32 %v812, %v1352
    %v1354 = vpop.f32.mrf.mxu0
    %v1355 = vpop.f32.mrf.mxu0
    %v1356 = vadd.f32 %v812, %v1355
    %v1357 = vpop.f32.mrf.mxu0
    %1358 = vmatprep.mubr.bf16.mxu0 %v304
    %1359 = vmatmul.mubr.bf16.gmra.mxu0 %v251
    %v1360 = vpop.f32.mrf.mxu0
    %v1361 = vadd.f32 %v812, %v1360
    %v1362 = vpop.f32.mrf.mxu0
    %v1363 = vpop.f32.mrf.mxu0
    %v1364 = vadd.f32 %v812, %v1363
    %v1365 = vpop.f32.mrf.mxu0
    %1366 = vmatprep.mubr.bf16.mxu0 %v312
    %1367 = vmatmul.mubr.bf16.gmra.mxu0 %v252
    %v1368 = vpop.f32.mrf.mxu0
    %v1369 = vadd.f32 %v812, %v1368
    %v1370 = vpop.f32.mrf.mxu0
    %v1371 = vpop.f32.mrf.mxu0
    %v1372 = vadd.f32 %v812, %v1371
    %v1373 = vpop.f32.mrf.mxu0
    %1374 = vmatprep.mubr.bf16.mxu0 %v320
    %1375 = vmatmul.mubr.bf16.gmra.mxu0 %v253
    %v1376 = vpop.f32.mrf.mxu0
    %v1377 = vadd.f32 %v812, %v1376
    %v1378 = vpop.f32.mrf.mxu0
    %v1379 = vpop.f32.mrf.mxu0
    %v1380 = vadd.f32 %v812, %v1379
    %v1381 = vpop.f32.mrf.mxu0
    %1382 = vmatprep.mubr.bf16.mxu0 %v328
    %1383 = vmatmul.mubr.bf16.gmra.mxu0 %v254
    %v1384 = vpop.f32.mrf.mxu0
    %v1385 = vadd.f32 %v812, %v1384
    %v1386 = vpop.f32.mrf.mxu0
    %v1387 = vpop.f32.mrf.mxu0
    %v1388 = vadd.f32 %v812, %v1387
    %v1389 = vpop.f32.mrf.mxu0
    %1390 = vdwg.mxu0
    %1391 = vmatprep.subr.bf16.mxu0 0
    %1392 = vmatpush1.bf16.msra.mxu0 %v1157
    %1393 = vmatprep.subr.bf16.mxu0 0
    %1394 = vmatpush1.bf16.msra.mxu0 %v1156
    %1395 = vmatprep.subr.bf16.mxu0 0
    %1396 = vmatpush1.bf16.msra.mxu0 %v1155
    %1397 = vmatprep.subr.bf16.mxu0 0
    %1398 = vmatpush1.bf16.msra.mxu0 %v1154
    %1399 = vmatprep.subr.bf16.mxu0 0
    %1400 = vmatpush1.bf16.msra.mxu0 %v1153
    %1401 = vmatprep.subr.bf16.mxu0 0
    %1402 = vmatpush1.bf16.msra.mxu0 %v1152
    %1403 = vmatprep.subr.bf16.mxu0 0
    %1404 = vmatpush1.bf16.msra.mxu0 %v1151
    %1405 = vmatprep.subr.bf16.mxu0 0
    %1406 = vmatpush1.bf16.msra.mxu0 %v1150
    %1407 = vmatprep.subr.bf16.mxu0 0
    %1408 = vmatpush2.bf16.msra.mxu0 %v1165
    %1409 = vmatprep.subr.bf16.mxu0 0
    %1410 = vmatpush2.bf16.msra.mxu0 %v1164
    %1411 = vmatprep.subr.bf16.mxu0 0
    %1412 = vmatpush2.bf16.msra.mxu0 %v1163
    %1413 = vmatprep.subr.bf16.mxu0 0
    %1414 = vmatpush2.bf16.msra.mxu0 %v1162
    %1415 = vmatprep.subr.bf16.mxu0 0
    %1416 = vmatpush2.bf16.msra.mxu0 %v1161
    %1417 = vmatprep.subr.bf16.mxu0 0
    %1418 = vmatpush2.bf16.msra.mxu0 %v1160
    %1419 = vmatprep.subr.bf16.mxu0 0
    %1420 = vmatpush2.bf16.msra.mxu0 %v1159
    %1421 = vmatprep.subr.bf16.mxu0 0
    %1422 = vmatpush2.bf16.msra.mxu0 %v1158
    %1423 = vmatprep.mubr.bf16.mxu0 %v381
    %1424 = vmatmul.mubr.bf16.gmra.mxu0 %v350
    %v1425 = vpop.f32.mrf.mxu0
    %v1426 = vadd.f32 %v1329, %v1425
    %v1427 = vpop.f32.mrf.mxu0
    %v1428 = vpop.f32.mrf.mxu0
    %v1429 = vadd.f32 %v1332, %v1428
    %v1430 = vpop.f32.mrf.mxu0
    %1431 = vmatprep.mubr.bf16.mxu0 %v385
    %1432 = vmatmul.mubr.bf16.gmra.mxu0 %v352
    %v1433 = vpop.f32.mrf.mxu0
    %v1434 = vadd.f32 %v1337, %v1433
    %v1435 = vpop.f32.mrf.mxu0
    %v1436 = vpop.f32.mrf.mxu0
    %v1437 = vadd.f32 %v1340, %v1436
    %v1438 = vpop.f32.mrf.mxu0
    %1439 = vmatprep.mubr.bf16.mxu0 %v389
    %1440 = vmatmul.mubr.bf16.gmra.mxu0 %v354
    %v1441 = vpop.f32.mrf.mxu0
    %v1442 = vadd.f32 %v1345, %v1441
    %v1443 = vpop.f32.mrf.mxu0
    %v1444 = vpop.f32.mrf.mxu0
    %v1445 = vadd.f32 %v1348, %v1444
    %v1446 = vpop.f32.mrf.mxu0
    %1447 = vmatprep.mubr.bf16.mxu0 %v395
    %1448 = vmatmul.mubr.bf16.gmra.mxu0 %v356
    %v1449 = vpop.f32.mrf.mxu0
    %v1450 = vadd.f32 %v1353, %v1449
    %v1451 = vpop.f32.mrf.mxu0
    %v1452 = vpop.f32.mrf.mxu0
    %v1453 = vadd.f32 %v1356, %v1452
    %v1454 = vpop.f32.mrf.mxu0
    %1455 = vmatprep.mubr.bf16.mxu0 %v402
    %1456 = vmatmul.mubr.bf16.gmra.mxu0 %v359
    %v1457 = vpop.f32.mrf.mxu0
    %v1458 = vadd.f32 %v1361, %v1457
    %v1459 = vpop.f32.mrf.mxu0
    %v1460 = vpop.f32.mrf.mxu0
    %v1461 = vadd.f32 %v1364, %v1460
    %v1462 = vpop.f32.mrf.mxu0
    %1463 = vmatprep.mubr.bf16.mxu0 %v406
    %1464 = vmatmul.mubr.bf16.gmra.mxu0 %v361
    %v1465 = vpop.f32.mrf.mxu0
    %v1466 = vadd.f32 %v1369, %v1465
    %v1467 = vpop.f32.mrf.mxu0
    %v1468 = vpop.f32.mrf.mxu0
    %v1469 = vadd.f32 %v1372, %v1468
    %v1470 = vpop.f32.mrf.mxu0
    %1471 = vmatprep.mubr.bf16.mxu0 %v410
    %1472 = vmatmul.mubr.bf16.gmra.mxu0 %v363
    %v1473 = vpop.f32.mrf.mxu0
    %v1474 = vadd.f32 %v1377, %v1473
    %v1475 = vpop.f32.mrf.mxu0
    %v1476 = vpop.f32.mrf.mxu0
    %v1477 = vadd.f32 %v1380, %v1476
    %v1478 = vpop.f32.mrf.mxu0
    %1479 = vmatprep.mubr.bf16.mxu0 %v416
    %1480 = vmatmul.mubr.bf16.gmra.mxu0 %v365
    %v1481 = vpop.f32.mrf.mxu0
    %v1482 = vadd.f32 %v1385, %v1481
    %v1483 = vpop.f32.mrf.mxu0
    %v1484 = vpop.f32.mrf.mxu0
    %v1485 = vadd.f32 %v1388, %v1484
    %v1486 = vpop.f32.mrf.mxu0
    %1487 = vdwg.mxu0
    %1488 = vmatprep.subr.bf16.mxu0 0
    %1489 = vmatpush1.bf16.msra.mxu0 %v1173
    %1490 = vmatprep.subr.bf16.mxu0 0
    %1491 = vmatpush1.bf16.msra.mxu0 %v1172
    %1492 = vmatprep.subr.bf16.mxu0 0
    %1493 = vmatpush1.bf16.msra.mxu0 %v1171
    %1494 = vmatprep.subr.bf16.mxu0 0
    %1495 = vmatpush1.bf16.msra.mxu0 %v1170
    %1496 = vmatprep.subr.bf16.mxu0 0
    %1497 = vmatpush1.bf16.msra.mxu0 %v1169
    %1498 = vmatprep.subr.bf16.mxu0 0
    %1499 = vmatpush1.bf16.msra.mxu0 %v1168
    %1500 = vmatprep.subr.bf16.mxu0 0
    %1501 = vmatpush1.bf16.msra.mxu0 %v1167
    %1502 = vmatprep.subr.bf16.mxu0 0
    %1503 = vmatpush1.bf16.msra.mxu0 %v1166
    %1504 = vmatprep.subr.bf16.mxu0 0
    %1505 = vmatpush2.bf16.msra.mxu0 %v1181
    %1506 = vmatprep.subr.bf16.mxu0 0
    %1507 = vmatpush2.bf16.msra.mxu0 %v1180
    %1508 = vmatprep.subr.bf16.mxu0 0
    %1509 = vmatpush2.bf16.msra.mxu0 %v1179
    %1510 = vmatprep.subr.bf16.mxu0 0
    %1511 = vmatpush2.bf16.msra.mxu0 %v1178
    %1512 = vmatprep.subr.bf16.mxu0 0
    %1513 = vmatpush2.bf16.msra.mxu0 %v1177
    %1514 = vmatprep.subr.bf16.mxu0 0
    %1515 = vmatpush2.bf16.msra.mxu0 %v1176
    %1516 = vmatprep.subr.bf16.mxu0 0
    %1517 = vmatpush2.bf16.msra.mxu0 %v1175
    %1518 = vmatprep.subr.bf16.mxu0 0
    %1519 = vmatpush2.bf16.msra.mxu0 %v1174
    %1520 = vmatprep.mubr.bf16.mxu0 %v459
    %1521 = vmatmul.mubr.bf16.gmra.mxu0 %v428
    %v1522 = vpop.f32.mrf.mxu0
    %v1523 = vadd.f32 %v1426, %v1522
    %v1524 = vpop.f32.mrf.mxu0
    %v1525 = vpop.f32.mrf.mxu0
    %v1526 = vadd.f32 %v1429, %v1525
    %v1527 = vpop.f32.mrf.mxu0
    %1528 = vmatprep.mubr.bf16.mxu0 %v463
    %1529 = vmatmul.mubr.bf16.gmra.mxu0 %v430
    %v1530 = vpop.f32.mrf.mxu0
    %v1531 = vadd.f32 %v1434, %v1530
    %v1532 = vpop.f32.mrf.mxu0
    %v1533 = vpop.f32.mrf.mxu0
    %v1534 = vadd.f32 %v1437, %v1533
    %v1535 = vpop.f32.mrf.mxu0
    %1536 = vmatprep.mubr.bf16.mxu0 %v467
    %1537 = vmatmul.mubr.bf16.gmra.mxu0 %v432
    %v1538 = vpop.f32.mrf.mxu0
    %v1539 = vadd.f32 %v1442, %v1538
    %v1540 = vpop.f32.mrf.mxu0
    %v1541 = vpop.f32.mrf.mxu0
    %v1542 = vadd.f32 %v1445, %v1541
    %v1543 = vpop.f32.mrf.mxu0
    %1544 = vmatprep.mubr.bf16.mxu0 %v471
    %1545 = vmatmul.mubr.bf16.gmra.mxu0 %v434
    %v1546 = vpop.f32.mrf.mxu0
    %v1547 = vadd.f32 %v1450, %v1546
    %v1548 = vpop.f32.mrf.mxu0
    %v1549 = vpop.f32.mrf.mxu0
    %v1550 = vadd.f32 %v1453, %v1549
    %v1551 = vpop.f32.mrf.mxu0
    %1552 = vmatprep.mubr.bf16.mxu0 %v478
    %1553 = vmatmul.mubr.bf16.gmra.mxu0 %v437
    %v1554 = vpop.f32.mrf.mxu0
    %v1555 = vadd.f32 %v1458, %v1554
    %v1556 = vpop.f32.mrf.mxu0
    %v1557 = vpop.f32.mrf.mxu0
    %v1558 = vadd.f32 %v1461, %v1557
    %v1559 = vpop.f32.mrf.mxu0
    %1560 = vmatprep.mubr.bf16.mxu0 %v482
    %1561 = vmatmul.mubr.bf16.gmra.mxu0 %v439
    %v1562 = vpop.f32.mrf.mxu0
    %v1563 = vadd.f32 %v1466, %v1562
    %v1564 = vpop.f32.mrf.mxu0
    %v1565 = vpop.f32.mrf.mxu0
    %v1566 = vadd.f32 %v1469, %v1565
    %v1567 = vpop.f32.mrf.mxu0
    %1568 = vmatprep.mubr.bf16.mxu0 %v486
    %1569 = vmatmul.mubr.bf16.gmra.mxu0 %v441
    %v1570 = vpop.f32.mrf.mxu0
    %v1571 = vadd.f32 %v1474, %v1570
    %v1572 = vpop.f32.mrf.mxu0
    %v1573 = vpop.f32.mrf.mxu0
    %v1574 = vadd.f32 %v1477, %v1573
    %v1575 = vpop.f32.mrf.mxu0
    %1576 = vmatprep.mubr.bf16.mxu0 %v490
    %1577 = vmatmul.mubr.bf16.gmra.mxu0 %v443
    %v1578 = vpop.f32.mrf.mxu0
    %v1579 = vadd.f32 %v1482, %v1578
    %v1580 = vpop.f32.mrf.mxu0
    %v1581 = vpop.f32.mrf.mxu0
    %v1582 = vadd.f32 %v1485, %v1581
    %v1583 = vpop.f32.mrf.mxu0
    %1584 = vdwg.mxu0
    %1585 = vmatprep.subr.bf16.mxu0 0
    %1586 = vmatpush1.bf16.msra.mxu0 %v1189
    %1587 = vmatprep.subr.bf16.mxu0 0
    %1588 = vmatpush1.bf16.msra.mxu0 %v1188
    %1589 = vmatprep.subr.bf16.mxu0 0
    %1590 = vmatpush1.bf16.msra.mxu0 %v1187
    %1591 = vmatprep.subr.bf16.mxu0 0
    %1592 = vmatpush1.bf16.msra.mxu0 %v1186
    %1593 = vmatprep.subr.bf16.mxu0 0
    %1594 = vmatpush1.bf16.msra.mxu0 %v1185
    %1595 = vmatprep.subr.bf16.mxu0 0
    %1596 = vmatpush1.bf16.msra.mxu0 %v1184
    %1597 = vmatprep.subr.bf16.mxu0 0
    %1598 = vmatpush1.bf16.msra.mxu0 %v1183
    %1599 = vmatprep.subr.bf16.mxu0 0
    %1600 = vmatpush1.bf16.msra.mxu0 %v1182
    %1601 = vmatprep.subr.bf16.mxu0 0
    %1602 = vmatpush2.bf16.msra.mxu0 %v1197
    %1603 = vmatprep.subr.bf16.mxu0 0
    %1604 = vmatpush2.bf16.msra.mxu0 %v1196
    %1605 = vmatprep.subr.bf16.mxu0 0
    %1606 = vmatpush2.bf16.msra.mxu0 %v1195
    %1607 = vmatprep.subr.bf16.mxu0 0
    %1608 = vmatpush2.bf16.msra.mxu0 %v1194
    %1609 = vmatprep.subr.bf16.mxu0 0
    %1610 = vmatpush2.bf16.msra.mxu0 %v1193
    %1611 = vmatprep.subr.bf16.mxu0 0
    %1612 = vmatpush2.bf16.msra.mxu0 %v1192
    %1613 = vmatprep.subr.bf16.mxu0 0
    %1614 = vmatpush2.bf16.msra.mxu0 %v1191
    %1615 = vmatprep.subr.bf16.mxu0 0
    %1616 = vmatpush2.bf16.msra.mxu0 %v1190
    %1617 = vmatprep.mubr.bf16.mxu0 %v533
    %1618 = vmatmul.mubr.bf16.gmra.mxu0 %v502
    %v1619 = vpop.f32.mrf.mxu0
    %v1620 = vadd.f32 %v1523, %v1619
    %v1621 = vpop.f32.mrf.mxu0
    %v1622 = vpop.f32.mrf.mxu0
    %v1623 = vadd.f32 %v1526, %v1622
    %v1624 = vpop.f32.mrf.mxu0
    %1625 = vmatprep.mubr.bf16.mxu0 %v537
    %1626 = vmatmul.mubr.bf16.gmra.mxu0 %v504
    %v1627 = vpop.f32.mrf.mxu0
    %v1628 = vadd.f32 %v1531, %v1627
    %v1629 = vpop.f32.mrf.mxu0
    %v1630 = vpop.f32.mrf.mxu0
    %v1631 = vadd.f32 %v1534, %v1630
    %v1632 = vpop.f32.mrf.mxu0
    %1633 = vmatprep.mubr.bf16.mxu0 %v541
    %1634 = vmatmul.mubr.bf16.gmra.mxu0 %v506
    %v1635 = vpop.f32.mrf.mxu0
    %v1636 = vadd.f32 %v1539, %v1635
    %v1637 = vpop.f32.mrf.mxu0
    %v1638 = vpop.f32.mrf.mxu0
    %v1639 = vadd.f32 %v1542, %v1638
    %v1640 = vpop.f32.mrf.mxu0
    %1641 = vmatprep.mubr.bf16.mxu0 %v545
    %1642 = vmatmul.mubr.bf16.gmra.mxu0 %v508
    %v1643 = vpop.f32.mrf.mxu0
    %v1644 = vadd.f32 %v1547, %v1643
    %v1645 = vpop.f32.mrf.mxu0
    %v1646 = vpop.f32.mrf.mxu0
    %v1647 = vadd.f32 %v1550, %v1646
    %v1648 = vpop.f32.mrf.mxu0
    %1649 = vmatprep.mubr.bf16.mxu0 %v552
    %1650 = vmatmul.mubr.bf16.gmra.mxu0 %v511
    %v1651 = vpop.f32.mrf.mxu0
    %v1652 = vadd.f32 %v1555, %v1651
    %v1653 = vpop.f32.mrf.mxu0
    %v1654 = vpop.f32.mrf.mxu0
    %v1655 = vadd.f32 %v1558, %v1654
    %v1656 = vpop.f32.mrf.mxu0
    %1657 = vmatprep.mubr.bf16.mxu0 %v556
    %1658 = vmatmul.mubr.bf16.gmra.mxu0 %v513
    %v1659 = vpop.f32.mrf.mxu0
    %v1660 = vadd.f32 %v1563, %v1659
    %v1661 = vpop.f32.mrf.mxu0
    %v1662 = vpop.f32.mrf.mxu0
    %v1663 = vadd.f32 %v1566, %v1662
    %v1664 = vpop.f32.mrf.mxu0
    %1665 = vmatprep.mubr.bf16.mxu0 %v560
    %1666 = vmatmul.mubr.bf16.gmra.mxu0 %v515
    %v1667 = vpop.f32.mrf.mxu0
    %v1668 = vadd.f32 %v1571, %v1667
    %v1669 = vpop.f32.mrf.mxu0
    %v1670 = vpop.f32.mrf.mxu0
    %v1671 = vadd.f32 %v1574, %v1670
    %v1672 = vpop.f32.mrf.mxu0
    %1673 = vmatprep.mubr.bf16.mxu0 %v564
    %1674 = vmatmul.mubr.bf16.gmra.mxu0 %v517
    %v1675 = vpop.f32.mrf.mxu0
    %v1676 = vadd.f32 %v1579, %v1675
    %v1677 = vpop.f32.mrf.mxu0
    %v1678 = vpop.f32.mrf.mxu0
    %v1679 = vadd.f32 %v1582, %v1678
    %v1680 = vpop.f32.mrf.mxu0
    %1681 = vdwg.mxu0
    %1682 = vmatprep.subr.bf16.mxu0 0
    %1683 = vmatpush1.bf16.msra.mxu0 %v1205
    %1684 = vmatprep.subr.bf16.mxu0 0
    %1685 = vmatpush1.bf16.msra.mxu0 %v1204
    %1686 = vmatprep.subr.bf16.mxu0 0
    %1687 = vmatpush1.bf16.msra.mxu0 %v1203
    %1688 = vmatprep.subr.bf16.mxu0 0
    %1689 = vmatpush1.bf16.msra.mxu0 %v1202
    %1690 = vmatprep.subr.bf16.mxu0 0
    %1691 = vmatpush1.bf16.msra.mxu0 %v1201
    %1692 = vmatprep.subr.bf16.mxu0 0
    %1693 = vmatpush1.bf16.msra.mxu0 %v1200
    %1694 = vmatprep.subr.bf16.mxu0 0
    %1695 = vmatpush1.bf16.msra.mxu0 %v1199
    %1696 = vmatprep.subr.bf16.mxu0 0
    %1697 = vmatpush1.bf16.msra.mxu0 %v1198
    %1698 = vmatprep.subr.bf16.mxu0 0
    %1699 = vmatpush2.bf16.msra.mxu0 %v1213
    %1700 = vmatprep.subr.bf16.mxu0 0
    %1701 = vmatpush2.bf16.msra.mxu0 %v1212
    %1702 = vmatprep.subr.bf16.mxu0 0
    %1703 = vmatpush2.bf16.msra.mxu0 %v1211
    %1704 = vmatprep.subr.bf16.mxu0 0
    %1705 = vmatpush2.bf16.msra.mxu0 %v1210
    %1706 = vmatprep.subr.bf16.mxu0 0
    %1707 = vmatpush2.bf16.msra.mxu0 %v1209
    %1708 = vmatprep.subr.bf16.mxu0 0
    %1709 = vmatpush2.bf16.msra.mxu0 %v1208
    %1710 = vmatprep.subr.bf16.mxu0 0
    %1711 = vmatpush2.bf16.msra.mxu0 %v1207
    %1712 = vmatprep.subr.bf16.mxu0 0
    %1713 = vmatpush2.bf16.msra.mxu0 %v1206
    %1714 = vmatprep.mubr.bf16.mxu0 %v607
    %1715 = vmatmul.mubr.bf16.gmra.mxu0 %v576
    %v1716 = vpop.f32.mrf.mxu0
    %v1717 = vadd.f32 %v1620, %v1716
    %v1718 = vpop.f32.mrf.mxu0
    %v1719 = vpop.f32.mrf.mxu0
    %v1720 = vadd.f32 %v1623, %v1719
    %v1721 = vpop.f32.mrf.mxu0
    %1722 = vmatprep.mubr.bf16.mxu0 %v611
    %1723 = vmatmul.mubr.bf16.gmra.mxu0 %v578
    %v1724 = vpop.f32.mrf.mxu0
    %v1725 = vadd.f32 %v1628, %v1724
    %v1726 = vpop.f32.mrf.mxu0
    %v1727 = vpop.f32.mrf.mxu0
    %v1728 = vadd.f32 %v1631, %v1727
    %v1729 = vpop.f32.mrf.mxu0
    %1730 = vmatprep.mubr.bf16.mxu0 %v615
    %1731 = vmatmul.mubr.bf16.gmra.mxu0 %v580
    %v1732 = vpop.f32.mrf.mxu0
    %v1733 = vadd.f32 %v1636, %v1732
    %v1734 = vpop.f32.mrf.mxu0
    %v1735 = vpop.f32.mrf.mxu0
    %v1736 = vadd.f32 %v1639, %v1735
    %v1737 = vpop.f32.mrf.mxu0
    %1738 = vmatprep.mubr.bf16.mxu0 %v619
    %1739 = vmatmul.mubr.bf16.gmra.mxu0 %v582
    %v1740 = vpop.f32.mrf.mxu0
    %v1741 = vadd.f32 %v1644, %v1740
    %v1742 = vpop.f32.mrf.mxu0
    %v1743 = vpop.f32.mrf.mxu0
    %v1744 = vadd.f32 %v1647, %v1743
    %v1745 = vpop.f32.mrf.mxu0
    %1746 = vmatprep.mubr.bf16.mxu0 %v626
    %1747 = vmatmul.mubr.bf16.gmra.mxu0 %v585
    %v1748 = vpop.f32.mrf.mxu0
    %v1749 = vadd.f32 %v1652, %v1748
    %v1750 = vpop.f32.mrf.mxu0
    %v1751 = vpop.f32.mrf.mxu0
    %v1752 = vadd.f32 %v1655, %v1751
    %v1753 = vpop.f32.mrf.mxu0
    %1754 = vmatprep.mubr.bf16.mxu0 %v630
    %1755 = vmatmul.mubr.bf16.gmra.mxu0 %v587
    %v1756 = vpop.f32.mrf.mxu0
    %v1757 = vadd.f32 %v1660, %v1756
    %v1758 = vpop.f32.mrf.mxu0
    %v1759 = vpop.f32.mrf.mxu0
    %v1760 = vadd.f32 %v1663, %v1759
    %v1761 = vpop.f32.mrf.mxu0
    %1762 = vmatprep.mubr.bf16.mxu0 %v634
    %1763 = vmatmul.mubr.bf16.gmra.mxu0 %v589
    %v1764 = vpop.f32.mrf.mxu0
    %v1765 = vadd.f32 %v1668, %v1764
    %v1766 = vpop.f32.mrf.mxu0
    %v1767 = vpop.f32.mrf.mxu0
    %v1768 = vadd.f32 %v1671, %v1767
    %v1769 = vpop.f32.mrf.mxu0
    %1770 = vmatprep.mubr.bf16.mxu0 %v638
    %1771 = vmatmul.mubr.bf16.gmra.mxu0 %v591
    %v1772 = vpop.f32.mrf.mxu0
    %v1773 = vadd.f32 %v1676, %v1772
    %v1774 = vpop.f32.mrf.mxu0
    %v1775 = vpop.f32.mrf.mxu0
    %v1776 = vadd.f32 %v1679, %v1775
    %v1777 = vpop.f32.mrf.mxu0
    %1778 = vdwg.mxu0
    %v1779 = vpack.c.bf16 %v1720, %v1717
    %v1780 = vpack.c.bf16 %v1728, %v1725
    %v1781 = vpack.c.bf16 %v1736, %v1733
    %v1782 = vpack.c.bf16 %v1744, %v1741
    %v1783 = vpack.c.bf16 %v1752, %v1749
    %v1784 = vpack.c.bf16 %v1760, %v1757
    %v1785 = vpack.c.bf16 %v1768, %v1765
    %v1786 = vpack.c.bf16 %v1776, %v1773
    %v1788 = vshrl.u32 %v1779, 16
    %v1790 = vshll.u32 %v1779, 16
    %v1792 = vrot.slane %v1790, 1
    %v1793 = vor.u32 %v1788, %v1792
    %v1795 = vshll.u32 %v1780, 16
    %v1797 = vrot.slane %v1795, 1
    %v1798 = vsel %vm256, %v1793, %v1797
    %v1799 = vshrl.u32 %v1780, 16
    %v1801 = vor.u32 %v1799, %v1797
    %v1803 = vshll.u32 %v1781, 16
    %v1805 = vrot.slane %v1803, 1
    %v1806 = vsel %vm256, %v1801, %v1805
    %v1807 = vshrl.u32 %v1781, 16
    %v1809 = vor.u32 %v1807, %v1805
    %v1811 = vshll.u32 %v1782, 16
    %v1813 = vrot.slane %v1811, 1
    %v1814 = vsel %vm256, %v1809, %v1813
    %v1816 = vshrl.u32 %v1783, 16
    %v1818 = vshll.u32 %v1783, 16
    %v1820 = vrot.slane %v1818, 1
    %v1821 = vor.u32 %v1816, %v1820
    %v1823 = vshll.u32 %v1784, 16
    %v1825 = vrot.slane %v1823, 1
    %v1826 = vsel %vm256, %v1821, %v1825
    %v1827 = vshrl.u32 %v1784, 16
    %v1829 = vor.u32 %v1827, %v1825
    %v1831 = vshll.u32 %v1785, 16
    %v1833 = vrot.slane %v1831, 1
    %v1834 = vsel %vm256, %v1829, %v1833
    %v1835 = vshrl.u32 %v1785, 16
    %v1837 = vor.u32 %v1835, %v1833
    %v1839 = vshll.u32 %v1786, 16
    %v1841 = vrot.slane %v1839, 1
    %v1842 = vsel %vm256, %v1837, %v1841
    %v1857 = vrot.slane %v1779, 1
    %v1858 = vrot.slane %v1780, 1
    %v1859 = vsel %vm347, %v1857, %v1858
    %v1860 = vrot.slane %v1781, 1
    %v1861 = vsel %vm347, %v1858, %v1860
    %v1862 = vrot.slane %v1782, 1
    %v1863 = vsel %vm347, %v1860, %v1862
    %v1864 = vrot.slane %v1783, 1
    %v1865 = vrot.slane %v1784, 1
    %v1866 = vsel %vm347, %v1864, %v1865
    %v1867 = vrot.slane %v1785, 1
    %v1868 = vsel %vm347, %v1865, %v1867
    %v1869 = vrot.slane %v1786, 1
    %v1870 = vsel %vm347, %v1867, %v1869
    %v1877 = vrot.slane %v1788, 1
    %v1878 = vrot.slane %v1790, 2
    %v1879 = vor.u32 %v1877, %v1878
    %v1880 = vrot.slane %v1799, 1
    %v1881 = vrot.slane %v1795, 2
    %v1882 = vor.u32 %v1880, %v1881
    %v1883 = vsel %vm374, %v1879, %v1882
    %v1884 = vrot.slane %v1807, 1
    %v1885 = vrot.slane %v1803, 2
    %v1886 = vor.u32 %v1884, %v1885
    %v1887 = vsel %vm374, %v1882, %v1886
    %v1888 = vshrl.u32 %v1782, 16
    %v1890 = vrot.slane %v1888, 1
    %v1891 = vrot.slane %v1811, 2
    %v1892 = vor.u32 %v1890, %v1891
    %v1893 = vsel %vm374, %v1886, %v1892
    %v1894 = vrot.slane %v1816, 1
    %v1895 = vrot.slane %v1818, 2
    %v1896 = vor.u32 %v1894, %v1895
    %v1897 = vrot.slane %v1827, 1
    %v1898 = vrot.slane %v1823, 2
    %v1899 = vor.u32 %v1897, %v1898
    %v1900 = vsel %vm374, %v1896, %v1899
    %v1901 = vrot.slane %v1835, 1
    %v1902 = vrot.slane %v1831, 2
    %v1903 = vor.u32 %v1901, %v1902
    %v1904 = vsel %vm374, %v1899, %v1903
    %v1905 = vshrl.u32 %v1786, 16
    %v1907 = vrot.slane %v1905, 1
    %v1908 = vrot.slane %v1839, 2
    %v1909 = vor.u32 %v1907, %v1908
    %v1910 = vsel %vm374, %v1903, %v1909
    %v1917 = vrot.slane %v1779, 2
    %v1918 = vrot.slane %v1780, 2
    %v1919 = vsel %vm425, %v1917, %v1918
    %v1920 = vrot.slane %v1781, 2
    %v1921 = vsel %vm425, %v1918, %v1920
    %v1922 = vrot.slane %v1782, 2
    %v1923 = vsel %vm425, %v1920, %v1922
    %v1924 = vrot.slane %v1783, 2
    %v1925 = vrot.slane %v1784, 2
    %v1926 = vsel %vm425, %v1924, %v1925
    %v1927 = vrot.slane %v1785, 2
    %v1928 = vsel %vm425, %v1925, %v1927
    %v1929 = vrot.slane %v1786, 2
    %v1930 = vsel %vm425, %v1927, %v1929
    %v1937 = vrot.slane %v1788, 2
    %v1938 = vrot.slane %v1790, 3
    %v1939 = vor.u32 %v1937, %v1938
    %v1940 = vrot.slane %v1799, 2
    %v1941 = vrot.slane %v1795, 3
    %v1942 = vor.u32 %v1940, %v1941
    %v1943 = vsel %vm452, %v1939, %v1942
    %v1944 = vrot.slane %v1807, 2
    %v1945 = vrot.slane %v1803, 3
    %v1946 = vor.u32 %v1944, %v1945
    %v1947 = vsel %vm452, %v1942, %v1946
    %v1948 = vrot.slane %v1888, 2
    %v1949 = vrot.slane %v1811, 3
    %v1950 = vor.u32 %v1948, %v1949
    %v1951 = vsel %vm452, %v1946, %v1950
    %v1952 = vrot.slane %v1816, 2
    %v1953 = vrot.slane %v1818, 3
    %v1954 = vor.u32 %v1952, %v1953
    %v1955 = vrot.slane %v1827, 2
    %v1956 = vrot.slane %v1823, 3
    %v1957 = vor.u32 %v1955, %v1956
    %v1958 = vsel %vm452, %v1954, %v1957
    %v1959 = vrot.slane %v1835, 2
    %v1960 = vrot.slane %v1831, 3
    %v1961 = vor.u32 %v1959, %v1960
    %v1962 = vsel %vm452, %v1957, %v1961
    %v1963 = vrot.slane %v1905, 2
    %v1964 = vrot.slane %v1839, 3
    %v1965 = vor.u32 %v1963, %v1964
    %v1966 = vsel %vm452, %v1961, %v1965
    %v1973 = vrot.slane %v1779, 3
    %v1974 = vrot.slane %v1780, 3
    %v1975 = vsel %vm499, %v1973, %v1974
    %v1976 = vrot.slane %v1781, 3
    %v1977 = vsel %vm499, %v1974, %v1976
    %v1978 = vrot.slane %v1782, 3
    %v1979 = vsel %vm499, %v1976, %v1978
    %v1980 = vrot.slane %v1783, 3
    %v1981 = vrot.slane %v1784, 3
    %v1982 = vsel %vm499, %v1980, %v1981
    %v1983 = vrot.slane %v1785, 3
    %v1984 = vsel %vm499, %v1981, %v1983
    %v1985 = vrot.slane %v1786, 3
    %v1986 = vsel %vm499, %v1983, %v1985
    %v1993 = vrot.slane %v1788, 3
    %v1994 = vrot.slane %v1790, 4
    %v1995 = vor.u32 %v1993, %v1994
    %v1996 = vrot.slane %v1799, 3
    %v1997 = vrot.slane %v1795, 4
    %v1998 = vor.u32 %v1996, %v1997
    %v1999 = vsel %vm526, %v1995, %v1998
    %v2000 = vrot.slane %v1807, 3
    %v2001 = vrot.slane %v1803, 4
    %v2002 = vor.u32 %v2000, %v2001
    %v2003 = vsel %vm526, %v1998, %v2002
    %v2004 = vrot.slane %v1888, 3
    %v2005 = vrot.slane %v1811, 4
    %v2006 = vor.u32 %v2004, %v2005
    %v2007 = vsel %vm526, %v2002, %v2006
    %v2008 = vrot.slane %v1816, 3
    %v2009 = vrot.slane %v1818, 4
    %v2010 = vor.u32 %v2008, %v2009
    %v2011 = vrot.slane %v1827, 3
    %v2012 = vrot.slane %v1823, 4
    %v2013 = vor.u32 %v2011, %v2012
    %v2014 = vsel %vm526, %v2010, %v2013
    %v2015 = vrot.slane %v1835, 3
    %v2016 = vrot.slane %v1831, 4
    %v2017 = vor.u32 %v2015, %v2016
    %v2018 = vsel %vm526, %v2013, %v2017
    %v2019 = vrot.slane %v1905, 3
    %v2020 = vrot.slane %v1839, 4
    %v2021 = vor.u32 %v2019, %v2020
    %v2022 = vsel %vm526, %v2017, %v2021
    %v2029 = vrot.slane %v1779, 4
    %v2030 = vrot.slane %v1780, 4
    %v2031 = vsel %vm573, %v2029, %v2030
    %v2032 = vrot.slane %v1781, 4
    %v2033 = vsel %vm573, %v2030, %v2032
    %v2034 = vrot.slane %v1782, 4
    %v2035 = vsel %vm573, %v2032, %v2034
    %v2036 = vrot.slane %v1783, 4
    %v2037 = vrot.slane %v1784, 4
    %v2038 = vsel %vm573, %v2036, %v2037
    %v2039 = vrot.slane %v1785, 4
    %v2040 = vsel %vm573, %v2037, %v2039
    %v2041 = vrot.slane %v1786, 4
    %v2042 = vsel %vm573, %v2039, %v2041
    %v2049 = vrot.slane %v1788, 4
    %v2050 = vrot.slane %v1790, 5
    %v2051 = vor.u32 %v2049, %v2050
    %v2052 = vrot.slane %v1799, 4
    %v2053 = vrot.slane %v1795, 5
    %v2054 = vor.u32 %v2052, %v2053
    %v2055 = vsel %vm600, %v2051, %v2054
    %v2056 = vrot.slane %v1807, 4
    %v2057 = vrot.slane %v1803, 5
    %v2058 = vor.u32 %v2056, %v2057
    %v2059 = vsel %vm600, %v2054, %v2058
    %v2060 = vrot.slane %v1888, 4
    %v2061 = vrot.slane %v1811, 5
    %v2062 = vor.u32 %v2060, %v2061
    %v2063 = vsel %vm600, %v2058, %v2062
    %v2064 = vrot.slane %v1816, 4
    %v2065 = vrot.slane %v1818, 5
    %v2066 = vor.u32 %v2064, %v2065
    %v2067 = vrot.slane %v1827, 4
    %v2068 = vrot.slane %v1823, 5
    %v2069 = vor.u32 %v2067, %v2068
    %v2070 = vsel %vm600, %v2066, %v2069
    %v2071 = vrot.slane %v1835, 4
    %v2072 = vrot.slane %v1831, 5
    %v2073 = vor.u32 %v2071, %v2072
    %v2074 = vsel %vm600, %v2069, %v2073
    %v2075 = vrot.slane %v1905, 4
    %v2076 = vrot.slane %v1839, 5
    %v2077 = vor.u32 %v2075, %v2076
    %v2078 = vsel %vm600, %v2073, %v2077
    %vm2085 = vcmask 1042432
    %v2086 = vrot.slane %v1779, 5
    %v2087 = vrot.slane %v1780, 5
    %v2088 = vsel %vm2085, %v2086, %v2087
    %v2089 = vrot.slane %v1781, 5
    %v2090 = vsel %vm2085, %v2087, %v2089
    %v2091 = vrot.slane %v1782, 5
    %v2092 = vsel %vm2085, %v2089, %v2091
    %v2093 = vrot.slane %v1783, 5
    %v2094 = vrot.slane %v1784, 5
    %v2095 = vsel %vm2085, %v2093, %v2094
    %v2096 = vrot.slane %v1785, 5
    %v2097 = vsel %vm2085, %v2094, %v2096
    %v2098 = vrot.slane %v1786, 5
    %v2099 = vsel %vm2085, %v2096, %v2098
    %vm2106 = vsmask.f32 2304
    %v2107 = vrot.slane %v1788, 5
    %v2108 = vrot.slane %v1790, 6
    %v2109 = vor.u32 %v2107, %v2108
    %v2110 = vrot.slane %v1799, 5
    %v2111 = vrot.slane %v1795, 6
    %v2112 = vor.u32 %v2110, %v2111
    %v2113 = vsel %vm2106, %v2109, %v2112
    %v2114 = vrot.slane %v1807, 5
    %v2115 = vrot.slane %v1803, 6
    %v2116 = vor.u32 %v2114, %v2115
    %v2117 = vsel %vm2106, %v2112, %v2116
    %v2118 = vrot.slane %v1888, 5
    %v2119 = vrot.slane %v1811, 6
    %v2120 = vor.u32 %v2118, %v2119
    %v2121 = vsel %vm2106, %v2116, %v2120
    %v2122 = vrot.slane %v1816, 5
    %v2123 = vrot.slane %v1818, 6
    %v2124 = vor.u32 %v2122, %v2123
    %v2125 = vrot.slane %v1827, 5
    %v2126 = vrot.slane %v1823, 6
    %v2127 = vor.u32 %v2125, %v2126
    %v2128 = vsel %vm2106, %v2124, %v2127
    %v2129 = vrot.slane %v1835, 5
    %v2130 = vrot.slane %v1831, 6
    %v2131 = vor.u32 %v2129, %v2130
    %v2132 = vsel %vm2106, %v2127, %v2131
    %v2133 = vrot.slane %v1905, 5
    %v2134 = vrot.slane %v1839, 6
    %v2135 = vor.u32 %v2133, %v2134
    %v2136 = vsel %vm2106, %v2131, %v2135
    %vm2143 = vcmask 1041408
    %v2144 = vrot.slane %v1779, 6
    %v2145 = vrot.slane %v1780, 6
    %v2146 = vsel %vm2143, %v2144, %v2145
    %v2147 = vrot.slane %v1781, 6
    %v2148 = vsel %vm2143, %v2145, %v2147
    %v2149 = vrot.slane %v1782, 6
    %v2150 = vsel %vm2143, %v2147, %v2149
    %v2151 = vrot.slane %v1783, 6
    %v2152 = vrot.slane %v1784, 6
    %v2153 = vsel %vm2143, %v2151, %v2152
    %v2154 = vrot.slane %v1785, 6
    %v2155 = vsel %vm2143, %v2152, %v2154
    %v2156 = vrot.slane %v1786, 6
    %v2157 = vsel %vm2143, %v2154, %v2156
    %vm2164 = vsmask.f32 1280
    %v2165 = vrot.slane %v1788, 6
    %v2166 = vrot.slane %v1790, 7
    %v2167 = vor.u32 %v2165, %v2166
    %v2168 = vrot.slane %v1799, 6
    %v2169 = vrot.slane %v1795, 7
    %v2170 = vor.u32 %v2168, %v2169
    %v2171 = vsel %vm2164, %v2167, %v2170
    %v2172 = vrot.slane %v1807, 6
    %v2173 = vrot.slane %v1803, 7
    %v2174 = vor.u32 %v2172, %v2173
    %v2175 = vsel %vm2164, %v2170, %v2174
    %v2176 = vrot.slane %v1888, 6
    %v2177 = vrot.slane %v1811, 7
    %v2178 = vor.u32 %v2176, %v2177
    %v2179 = vsel %vm2164, %v2174, %v2178
    %v2180 = vrot.slane %v1816, 6
    %v2181 = vrot.slane %v1818, 7
    %v2182 = vor.u32 %v2180, %v2181
    %v2183 = vrot.slane %v1827, 6
    %v2184 = vrot.slane %v1823, 7
    %v2185 = vor.u32 %v2183, %v2184
    %v2186 = vsel %vm2164, %v2182, %v2185
    %v2187 = vrot.slane %v1835, 6
    %v2188 = vrot.slane %v1831, 7
    %v2189 = vor.u32 %v2187, %v2188
    %v2190 = vsel %vm2164, %v2185, %v2189
    %v2191 = vrot.slane %v1905, 6
    %v2192 = vrot.slane %v1839, 7
    %v2193 = vor.u32 %v2191, %v2192
    %v2194 = vsel %vm2164, %v2189, %v2193
    %vm2201 = vcmask 1040384
    %v2202 = vrot.slane %v1779, 7
    %v2203 = vrot.slane %v1780, 7
    %v2204 = vsel %vm2201, %v2202, %v2203
    %v2205 = vrot.slane %v1781, 7
    %v2206 = vsel %vm2201, %v2203, %v2205
    %v2207 = vrot.slane %v1782, 7
    %v2208 = vsel %vm2201, %v2205, %v2207
    %v2209 = vrot.slane %v1783, 7
    %v2210 = vrot.slane %v1784, 7
    %v2211 = vsel %vm2201, %v2209, %v2210
    %v2212 = vrot.slane %v1785, 7
    %v2213 = vsel %vm2201, %v2210, %v2212
    %v2214 = vrot.slane %v1786, 7
    %v2215 = vsel %vm2201, %v2212, %v2214
    %v2222 = vld [vmem:[#allocation5] sm:$0xf]
    %v2223 = vld [vmem:[#allocation5 + $0x4] sm:$0xf]
    %v2224 = vld [vmem:[#allocation5 + $0x8] sm:$0xf]
    %v2225 = vld [vmem:[#allocation5 + $0xc] sm:$0xf]
    %v2226 = vld [vmem:[#allocation5 + $0x10] sm:$0xf]
    %v2227 = vld [vmem:[#allocation5 + $0x14] sm:$0xf]
    %v2228 = vld [vmem:[#allocation5 + $0x18] sm:$0xf]
    %v2229 = vld [vmem:[#allocation5 + $0x1c] sm:$0xf]
    %v2230 = vld [vmem:[#allocation5 + $0x20] sm:$0xf]
    %v2231 = vld [vmem:[#allocation5 + $0x24] sm:$0xf]
    %v2232 = vld [vmem:[#allocation5 + $0x28] sm:$0xf]
    %v2233 = vld [vmem:[#allocation5 + $0x2c] sm:$0xf]
    %v2234 = vld [vmem:[#allocation5 + $0x30] sm:$0xf]
    %v2235 = vld [vmem:[#allocation5 + $0x34] sm:$0xf]
    %v2236 = vld [vmem:[#allocation5 + $0x38] sm:$0xf]
    %v2237 = vld [vmem:[#allocation5 + $0x3c] sm:$0xf]
    %v2238 = vld [vmem:[#allocation5 + $0x40] sm:$0xf]
    %v2239 = vld [vmem:[#allocation5 + $0x44] sm:$0xf]
    %v2240 = vld [vmem:[#allocation5 + $0x48] sm:$0xf]
    %v2241 = vld [vmem:[#allocation5 + $0x4c] sm:$0xf]
    %v2242 = vld [vmem:[#allocation5 + $0x50] sm:$0xf]
    %v2243 = vld [vmem:[#allocation5 + $0x54] sm:$0xf]
    %v2244 = vld [vmem:[#allocation5 + $0x58] sm:$0xf]
    %v2245 = vld [vmem:[#allocation5 + $0x5c] sm:$0xf]
    %v2246 = vld [vmem:[#allocation5 + $0x60] sm:$0xf]
    %v2247 = vld [vmem:[#allocation5 + $0x64] sm:$0xf]
    %v2248 = vld [vmem:[#allocation5 + $0x68] sm:$0xf]
    %v2249 = vld [vmem:[#allocation5 + $0x6c] sm:$0xf]
    %v2250 = vld [vmem:[#allocation5 + $0x70] sm:$0xf]
    %v2251 = vld [vmem:[#allocation5 + $0x74] sm:$0xf]
    %v2252 = vld [vmem:[#allocation5 + $0x78] sm:$0xf]
    %v2253 = vld [vmem:[#allocation5 + $0x7c] sm:$0xf]
    %v2254 = vld [vmem:[#allocation5 + $0x80] sm:$0xf]
    %v2255 = vld [vmem:[#allocation5 + $0x84] sm:$0xf]
    %v2256 = vld [vmem:[#allocation5 + $0x88] sm:$0xf]
    %v2257 = vld [vmem:[#allocation5 + $0x8c] sm:$0xf]
    %v2258 = vld [vmem:[#allocation5 + $0x90] sm:$0xf]
    %v2259 = vld [vmem:[#allocation5 + $0x94] sm:$0xf]
    %v2260 = vld [vmem:[#allocation5 + $0x98] sm:$0xf]
    %v2261 = vld [vmem:[#allocation5 + $0x9c] sm:$0xf]
    %v2262 = vld [vmem:[#allocation5 + $0xa0] sm:$0xf]
    %v2263 = vld [vmem:[#allocation5 + $0xa4] sm:$0xf]
    %v2264 = vld [vmem:[#allocation5 + $0xa8] sm:$0xf]
    %v2265 = vld [vmem:[#allocation5 + $0xac] sm:$0xf]
    %v2266 = vld [vmem:[#allocation5 + $0xb0] sm:$0xf]
    %v2267 = vld [vmem:[#allocation5 + $0xb4] sm:$0xf]
    %v2268 = vld [vmem:[#allocation5 + $0xb8] sm:$0xf]
    %v2269 = vld [vmem:[#allocation5 + $0xbc] sm:$0xf]
    %v2270 = vld [vmem:[#allocation5 + $0xc0] sm:$0xf]
    %v2271 = vld [vmem:[#allocation5 + $0xc4] sm:$0xf]
    %v2272 = vld [vmem:[#allocation5 + $0xc8] sm:$0xf]
    %v2273 = vld [vmem:[#allocation5 + $0xcc] sm:$0xf]
    %v2274 = vld [vmem:[#allocation5 + $0xd0] sm:$0xf]
    %v2275 = vld [vmem:[#allocation5 + $0xd4] sm:$0xf]
    %v2276 = vld [vmem:[#allocation5 + $0xd8] sm:$0xf]
    %v2277 = vld [vmem:[#allocation5 + $0xdc] sm:$0xf]
    %v2278 = vld [vmem:[#allocation5 + $0xe0] sm:$0xf]
    %v2279 = vld [vmem:[#allocation5 + $0xe4] sm:$0xf]
    %v2280 = vld [vmem:[#allocation5 + $0xe8] sm:$0xf]
    %v2281 = vld [vmem:[#allocation5 + $0xec] sm:$0xf]
    %v2282 = vld [vmem:[#allocation5 + $0xf0] sm:$0xf]
    %v2283 = vld [vmem:[#allocation5 + $0xf4] sm:$0xf]
    %v2284 = vld [vmem:[#allocation5 + $0xf8] sm:$0xf]
    %v2285 = vld [vmem:[#allocation5 + $0xfc] sm:$0xf]
    %v2286 = vld [vmem:[#allocation5 + $0x100] sm:$0xf]
    %v2287 = vld [vmem:[#allocation5 + $0x104] sm:$0xf]
    %v2288 = vld [vmem:[#allocation5 + $0x108] sm:$0xf]
    %v2289 = vld [vmem:[#allocation5 + $0x10c] sm:$0xf]
    %v2290 = vld [vmem:[#allocation5 + $0x110] sm:$0xf]
    %v2291 = vld [vmem:[#allocation5 + $0x114] sm:$0xf]
    %v2292 = vld [vmem:[#allocation5 + $0x118] sm:$0xf]
    %v2293 = vld [vmem:[#allocation5 + $0x11c] sm:$0xf]
    %v2294 = vld [vmem:[#allocation5 + $0x120] sm:$0xf]
    %v2295 = vld [vmem:[#allocation5 + $0x124] sm:$0xf]
    %v2296 = vld [vmem:[#allocation5 + $0x128] sm:$0xf]
    %v2297 = vld [vmem:[#allocation5 + $0x12c] sm:$0xf]
    %v2298 = vld [vmem:[#allocation5 + $0x130] sm:$0xf]
    %v2299 = vld [vmem:[#allocation5 + $0x134] sm:$0xf]
    %v2300 = vld [vmem:[#allocation5 + $0x138] sm:$0xf]
    %v2301 = vld [vmem:[#allocation5 + $0x13c] sm:$0xf]
    %v2302 = vld [vmem:[#allocation5 + $0x140] sm:$0xf]
    %v2303 = vld [vmem:[#allocation5 + $0x144] sm:$0xf]
    %v2304 = vld [vmem:[#allocation5 + $0x148] sm:$0xf]
    %v2305 = vld [vmem:[#allocation5 + $0x14c] sm:$0xf]
    %v2306 = vld [vmem:[#allocation5 + $0x150] sm:$0xf]
    %v2307 = vld [vmem:[#allocation5 + $0x154] sm:$0xf]
    %v2308 = vld [vmem:[#allocation5 + $0x158] sm:$0xf]
    %v2309 = vld [vmem:[#allocation5 + $0x15c] sm:$0xf]
    %v2310 = vld [vmem:[#allocation5 + $0x160] sm:$0xf]
    %v2311 = vld [vmem:[#allocation5 + $0x164] sm:$0xf]
    %v2312 = vld [vmem:[#allocation5 + $0x168] sm:$0xf]
    %v2313 = vld [vmem:[#allocation5 + $0x16c] sm:$0xf]
    %v2314 = vld [vmem:[#allocation5 + $0x170] sm:$0xf]
    %v2315 = vld [vmem:[#allocation5 + $0x174] sm:$0xf]
    %v2316 = vld [vmem:[#allocation5 + $0x178] sm:$0xf]
    %v2317 = vld [vmem:[#allocation5 + $0x17c] sm:$0xf]
    %v2318 = vld [vmem:[#allocation5 + $0x180] sm:$0xf]
    %v2319 = vld [vmem:[#allocation5 + $0x184] sm:$0xf]
    %v2320 = vld [vmem:[#allocation5 + $0x188] sm:$0xf]
    %v2321 = vld [vmem:[#allocation5 + $0x18c] sm:$0xf]
    %v2322 = vld [vmem:[#allocation5 + $0x190] sm:$0xf]
    %v2323 = vld [vmem:[#allocation5 + $0x194] sm:$0xf]
    %v2324 = vld [vmem:[#allocation5 + $0x198] sm:$0xf]
    %v2325 = vld [vmem:[#allocation5 + $0x19c] sm:$0xf]
    %v2326 = vld [vmem:[#allocation5 + $0x1a0] sm:$0xf]
    %v2327 = vld [vmem:[#allocation5 + $0x1a4] sm:$0xf]
    %v2328 = vld [vmem:[#allocation5 + $0x1a8] sm:$0xf]
    %v2329 = vld [vmem:[#allocation5 + $0x1ac] sm:$0xf]
    %v2330 = vld [vmem:[#allocation5 + $0x1b0] sm:$0xf]
    %v2331 = vld [vmem:[#allocation5 + $0x1b4] sm:$0xf]
    %v2332 = vld [vmem:[#allocation5 + $0x1b8] sm:$0xf]
    %v2333 = vld [vmem:[#allocation5 + $0x1bc] sm:$0xf]
    %v2334 = vld [vmem:[#allocation5 + $0x1c0] sm:$0xf]
    %v2335 = vld [vmem:[#allocation5 + $0x1c4] sm:$0xf]
    %v2336 = vld [vmem:[#allocation5 + $0x1c8] sm:$0xf]
    %v2337 = vld [vmem:[#allocation5 + $0x1cc] sm:$0xf]
    %v2338 = vld [vmem:[#allocation5 + $0x1d0] sm:$0xf]
    %v2339 = vld [vmem:[#allocation5 + $0x1d4] sm:$0xf]
    %v2340 = vld [vmem:[#allocation5 + $0x1d8] sm:$0xf]
    %v2341 = vld [vmem:[#allocation5 + $0x1dc] sm:$0xf]
    %v2342 = vld [vmem:[#allocation5 + $0x1e0] sm:$0xf]
    %v2343 = vld [vmem:[#allocation5 + $0x1e4] sm:$0xf]
    %v2344 = vld [vmem:[#allocation5 + $0x1e8] sm:$0xf]
    %v2345 = vld [vmem:[#allocation5 + $0x1ec] sm:$0xf]
    %v2346 = vld [vmem:[#allocation5 + $0x1f0] sm:$0xf]
    %v2347 = vld [vmem:[#allocation5 + $0x1f4] sm:$0xf]
    %v2348 = vld [vmem:[#allocation5 + $0x1f8] sm:$0xf]
    %v2349 = vld [vmem:[#allocation5 + $0x1fc] sm:$0xf]
    %v2350 = vld [vmem:[#allocation5 + $0x200] sm:$0xf]
    %v2351 = vld [vmem:[#allocation5 + $0x204] sm:$0xf]
    %v2352 = vld [vmem:[#allocation5 + $0x208] sm:$0xf]
    %v2353 = vld [vmem:[#allocation5 + $0x20c] sm:$0xf]
    %v2354 = vld [vmem:[#allocation5 + $0x210] sm:$0xf]
    %v2355 = vld [vmem:[#allocation5 + $0x214] sm:$0xf]
    %v2356 = vld [vmem:[#allocation5 + $0x218] sm:$0xf]
    %v2357 = vld [vmem:[#allocation5 + $0x21c] sm:$0xf]
    %v2358 = vld [vmem:[#allocation5 + $0x220] sm:$0xf]
    %v2359 = vld [vmem:[#allocation5 + $0x224] sm:$0xf]
    %v2360 = vld [vmem:[#allocation5 + $0x228] sm:$0xf]
    %v2361 = vld [vmem:[#allocation5 + $0x22c] sm:$0xf]
    %v2362 = vld [vmem:[#allocation5 + $0x230] sm:$0xf]
    %v2363 = vld [vmem:[#allocation5 + $0x234] sm:$0xf]
    %v2364 = vld [vmem:[#allocation5 + $0x238] sm:$0xf]
    %v2365 = vld [vmem:[#allocation5 + $0x23c] sm:$0xf]
    %v2366 = vld [vmem:[#allocation5 + $0x240] sm:$0xf]
    %v2367 = vld [vmem:[#allocation5 + $0x244] sm:$0xf]
    %v2368 = vld [vmem:[#allocation5 + $0x248] sm:$0xf]
    %v2369 = vld [vmem:[#allocation5 + $0x24c] sm:$0xf]
    %v2370 = vld [vmem:[#allocation5 + $0x250] sm:$0xf]
    %v2371 = vld [vmem:[#allocation5 + $0x254] sm:$0xf]
    %v2372 = vld [vmem:[#allocation5 + $0x258] sm:$0xf]
    %v2373 = vld [vmem:[#allocation5 + $0x25c] sm:$0xf]
    %v2374 = vld [vmem:[#allocation5 + $0x260] sm:$0xf]
    %v2375 = vld [vmem:[#allocation5 + $0x264] sm:$0xf]
    %v2376 = vld [vmem:[#allocation5 + $0x268] sm:$0xf]
    %v2377 = vld [vmem:[#allocation5 + $0x26c] sm:$0xf]
    %v2378 = vld [vmem:[#allocation5 + $0x270] sm:$0xf]
    %v2379 = vld [vmem:[#allocation5 + $0x274] sm:$0xf]
    %v2380 = vld [vmem:[#allocation5 + $0x278] sm:$0xf]
    %v2381 = vld [vmem:[#allocation5 + $0x27c] sm:$0xf]
    %v2382 = vld [vmem:[#allocation5 + $0x280] sm:$0xf]
    %v2383 = vld [vmem:[#allocation5 + $0x284] sm:$0xf]
    %v2384 = vld [vmem:[#allocation5 + $0x288] sm:$0xf]
    %v2385 = vld [vmem:[#allocation5 + $0x28c] sm:$0xf]
    %v2386 = vld [vmem:[#allocation5 + $0x290] sm:$0xf]
    %v2387 = vld [vmem:[#allocation5 + $0x294] sm:$0xf]
    %v2388 = vld [vmem:[#allocation5 + $0x298] sm:$0xf]
    %v2389 = vld [vmem:[#allocation5 + $0x29c] sm:$0xf]
    %v2390 = vld [vmem:[#allocation5 + $0x2a0] sm:$0xf]
    %v2391 = vld [vmem:[#allocation5 + $0x2a4] sm:$0xf]
    %v2392 = vld [vmem:[#allocation5 + $0x2a8] sm:$0xf]
    %v2393 = vld [vmem:[#allocation5 + $0x2ac] sm:$0xf]
    %v2394 = vld [vmem:[#allocation5 + $0x2b0] sm:$0xf]
    %v2395 = vld [vmem:[#allocation5 + $0x2b4] sm:$0xf]
    %v2396 = vld [vmem:[#allocation5 + $0x2b8] sm:$0xf]
    %v2397 = vld [vmem:[#allocation5 + $0x2bc] sm:$0xf]
    %v2398 = vld [vmem:[#allocation5 + $0x2c0] sm:$0xf]
    %v2399 = vld [vmem:[#allocation5 + $0x2c4] sm:$0xf]
    %v2400 = vld [vmem:[#allocation5 + $0x2c8] sm:$0xf]
    %v2401 = vld [vmem:[#allocation5 + $0x2cc] sm:$0xf]
    %v2402 = vld [vmem:[#allocation5 + $0x2d0] sm:$0xf]
    %v2403 = vld [vmem:[#allocation5 + $0x2d4] sm:$0xf]
    %v2404 = vld [vmem:[#allocation5 + $0x2d8] sm:$0xf]
    %v2405 = vld [vmem:[#allocation5 + $0x2dc] sm:$0xf]
    %v2406 = vld [vmem:[#allocation5 + $0x2e0] sm:$0xf]
    %v2407 = vld [vmem:[#allocation5 + $0x2e4] sm:$0xf]
    %v2408 = vld [vmem:[#allocation5 + $0x2e8] sm:$0xf]
    %v2409 = vld [vmem:[#allocation5 + $0x2ec] sm:$0xf]
    %v2410 = vld [vmem:[#allocation5 + $0x2f0] sm:$0xf]
    %v2411 = vld [vmem:[#allocation5 + $0x2f4] sm:$0xf]
    %v2412 = vld [vmem:[#allocation5 + $0x2f8] sm:$0xf]
    %v2413 = vld [vmem:[#allocation5 + $0x2fc] sm:$0xf]
    %v2414 = vld [vmem:[#allocation5 + $0x300] sm:$0xf]
    %v2415 = vld [vmem:[#allocation5 + $0x304] sm:$0xf]
    %v2416 = vld [vmem:[#allocation5 + $0x308] sm:$0xf]
    %v2417 = vld [vmem:[#allocation5 + $0x30c] sm:$0xf]
    %v2418 = vld [vmem:[#allocation5 + $0x310] sm:$0xf]
    %v2419 = vld [vmem:[#allocation5 + $0x314] sm:$0xf]
    %v2420 = vld [vmem:[#allocation5 + $0x318] sm:$0xf]
    %v2421 = vld [vmem:[#allocation5 + $0x31c] sm:$0xf]
    %v2422 = vld [vmem:[#allocation5 + $0x320] sm:$0xf]
    %v2423 = vld [vmem:[#allocation5 + $0x324] sm:$0xf]
    %v2424 = vld [vmem:[#allocation5 + $0x328] sm:$0xf]
    %v2425 = vld [vmem:[#allocation5 + $0x32c] sm:$0xf]
    %v2426 = vld [vmem:[#allocation5 + $0x330] sm:$0xf]
    %v2427 = vld [vmem:[#allocation5 + $0x334] sm:$0xf]
    %v2428 = vld [vmem:[#allocation5 + $0x338] sm:$0xf]
    %v2429 = vld [vmem:[#allocation5 + $0x33c] sm:$0xf]
    %v2430 = vld [vmem:[#allocation5 + $0x340] sm:$0xf]
    %v2431 = vld [vmem:[#allocation5 + $0x344] sm:$0xf]
    %v2432 = vld [vmem:[#allocation5 + $0x348] sm:$0xf]
    %v2433 = vld [vmem:[#allocation5 + $0x34c] sm:$0xf]
    %v2434 = vld [vmem:[#allocation5 + $0x350] sm:$0xf]
    %v2435 = vld [vmem:[#allocation5 + $0x354] sm:$0xf]
    %v2436 = vld [vmem:[#allocation5 + $0x358] sm:$0xf]
    %v2437 = vld [vmem:[#allocation5 + $0x35c] sm:$0xf]
    %v2438 = vld [vmem:[#allocation5 + $0x360] sm:$0xf]
    %v2439 = vld [vmem:[#allocation5 + $0x364] sm:$0xf]
    %v2440 = vld [vmem:[#allocation5 + $0x368] sm:$0xf]
    %v2441 = vld [vmem:[#allocation5 + $0x36c] sm:$0xf]
    %v2442 = vld [vmem:[#allocation5 + $0x370] sm:$0xf]
    %v2443 = vld [vmem:[#allocation5 + $0x374] sm:$0xf]
    %v2444 = vld [vmem:[#allocation5 + $0x378] sm:$0xf]
    %v2445 = vld [vmem:[#allocation5 + $0x37c] sm:$0xf]
    %v2446 = vld [vmem:[#allocation5 + $0x380] sm:$0xf]
    %v2447 = vld [vmem:[#allocation5 + $0x384] sm:$0xf]
    %v2448 = vld [vmem:[#allocation5 + $0x388] sm:$0xf]
    %v2449 = vld [vmem:[#allocation5 + $0x38c] sm:$0xf]
    %v2450 = vld [vmem:[#allocation5 + $0x390] sm:$0xf]
    %v2451 = vld [vmem:[#allocation5 + $0x394] sm:$0xf]
    %v2452 = vld [vmem:[#allocation5 + $0x398] sm:$0xf]
    %v2453 = vld [vmem:[#allocation5 + $0x39c] sm:$0xf]
    %v2454 = vld [vmem:[#allocation5 + $0x3a0] sm:$0xf]
    %v2455 = vld [vmem:[#allocation5 + $0x3a4] sm:$0xf]
    %v2456 = vld [vmem:[#allocation5 + $0x3a8] sm:$0xf]
    %v2457 = vld [vmem:[#allocation5 + $0x3ac] sm:$0xf]
    %v2458 = vld [vmem:[#allocation5 + $0x3b0] sm:$0xf]
    %v2459 = vld [vmem:[#allocation5 + $0x3b4] sm:$0xf]
    %v2460 = vld [vmem:[#allocation5 + $0x3b8] sm:$0xf]
    %v2461 = vld [vmem:[#allocation5 + $0x3bc] sm:$0xf]
    %v2462 = vld [vmem:[%s4] sm:$0x1]
    %v2464 = vlaneseq
    %v2465 = vshrl.u32 %v2464, 7
    %v2466 = vsub.s32 0, %v2465
    %v2467 = vrot.slane %v2462, %v2466
    %v2709 = vunpack.c.l.b16 %v2222
    %v2710 = vunpack.c.l.b16 %v2223
    %v2711 = vunpack.c.l.b16 %v2224
    %v2712 = vunpack.c.l.b16 %v2225
    %v2713 = vunpack.c.l.b16 %v2226
    %v2714 = vunpack.c.l.b16 %v2227
    %v2715 = vunpack.c.l.b16 %v2228
    %v2716 = vunpack.c.l.b16 %v2229
    %v2717 = vunpack.c.l.b16 %v2230
    %v2718 = vunpack.c.l.b16 %v2231
    %v2719 = vunpack.c.l.b16 %v2232
    %v2720 = vunpack.c.l.b16 %v2233
    %v2721 = vunpack.c.l.b16 %v2234
    %v2722 = vunpack.c.l.b16 %v2235
    %v2723 = vunpack.c.l.b16 %v2236
    %v2724 = vunpack.c.l.b16 %v2237
    %v2725 = vunpack.c.l.b16 %v2238
    %v2726 = vunpack.c.l.b16 %v2239
    %v2727 = vunpack.c.l.b16 %v2240
    %v2728 = vunpack.c.l.b16 %v2241
    %v2729 = vunpack.c.l.b16 %v2242
    %v2730 = vunpack.c.l.b16 %v2243
    %v2731 = vunpack.c.l.b16 %v2244
    %v2732 = vunpack.c.l.b16 %v2245
    %v2733 = vunpack.c.l.b16 %v2246
    %v2734 = vunpack.c.l.b16 %v2247
    %v2735 = vunpack.c.l.b16 %v2248
    %v2736 = vunpack.c.l.b16 %v2249
    %v2737 = vunpack.c.l.b16 %v2250
    %v2738 = vunpack.c.l.b16 %v2251
    %v2739 = vunpack.c.l.b16 %v2252
    %v2740 = vunpack.c.l.b16 %v2253
    %v2741 = vunpack.c.l.b16 %v2254
    %v2742 = vunpack.c.l.b16 %v2255
    %v2743 = vunpack.c.l.b16 %v2256
    %v2744 = vunpack.c.l.b16 %v2257
    %v2745 = vunpack.c.l.b16 %v2258
    %v2746 = vunpack.c.l.b16 %v2259
    %v2747 = vunpack.c.l.b16 %v2260
    %v2748 = vunpack.c.l.b16 %v2261
    %v2749 = vunpack.c.l.b16 %v2262
    %v2750 = vunpack.c.l.b16 %v2263
    %v2751 = vunpack.c.l.b16 %v2264
    %v2752 = vunpack.c.l.b16 %v2265
    %v2753 = vunpack.c.l.b16 %v2266
    %v2754 = vunpack.c.l.b16 %v2267
    %v2755 = vunpack.c.l.b16 %v2268
    %v2756 = vunpack.c.l.b16 %v2269
    %v2757 = vunpack.c.l.b16 %v2270
    %v2758 = vunpack.c.l.b16 %v2271
    %v2759 = vunpack.c.l.b16 %v2272
    %v2760 = vunpack.c.l.b16 %v2273
    %v2761 = vunpack.c.l.b16 %v2274
    %v2762 = vunpack.c.l.b16 %v2275
    %v2763 = vunpack.c.l.b16 %v2276
    %v2764 = vunpack.c.l.b16 %v2277
    %v2765 = vunpack.c.l.b16 %v2278
    %v2766 = vunpack.c.l.b16 %v2279
    %v2767 = vunpack.c.l.b16 %v2280
    %v2768 = vunpack.c.l.b16 %v2281
    %v2769 = vunpack.c.l.b16 %v2282
    %v2770 = vunpack.c.l.b16 %v2283
    %v2771 = vunpack.c.l.b16 %v2284
    %v2772 = vunpack.c.l.b16 %v2285
    %v2773 = vunpack.c.l.b16 %v2286
    %v2774 = vunpack.c.l.b16 %v2287
    %v2775 = vunpack.c.l.b16 %v2288
    %v2776 = vunpack.c.l.b16 %v2289
    %v2777 = vunpack.c.l.b16 %v2290
    %v2778 = vunpack.c.l.b16 %v2291
    %v2779 = vunpack.c.l.b16 %v2292
    %v2780 = vunpack.c.l.b16 %v2293
    %v2781 = vunpack.c.l.b16 %v2294
    %v2782 = vunpack.c.l.b16 %v2295
    %v2783 = vunpack.c.l.b16 %v2296
    %v2784 = vunpack.c.l.b16 %v2297
    %v2785 = vunpack.c.l.b16 %v2298
    %v2786 = vunpack.c.l.b16 %v2299
    %v2787 = vunpack.c.l.b16 %v2300
    %v2788 = vunpack.c.l.b16 %v2301
    %v2789 = vunpack.c.l.b16 %v2302
    %v2790 = vunpack.c.l.b16 %v2303
    %v2791 = vunpack.c.l.b16 %v2304
    %v2792 = vunpack.c.l.b16 %v2305
    %v2793 = vunpack.c.l.b16 %v2306
    %v2794 = vunpack.c.l.b16 %v2307
    %v2795 = vunpack.c.l.b16 %v2308
    %v2796 = vunpack.c.l.b16 %v2309
    %v2797 = vunpack.c.l.b16 %v2310
    %v2798 = vunpack.c.l.b16 %v2311
    %v2799 = vunpack.c.l.b16 %v2312
    %v2800 = vunpack.c.l.b16 %v2313
    %v2801 = vunpack.c.l.b16 %v2314
    %v2802 = vunpack.c.l.b16 %v2315
    %v2803 = vunpack.c.l.b16 %v2316
    %v2804 = vunpack.c.l.b16 %v2317
    %v2805 = vunpack.c.l.b16 %v2318
    %v2806 = vunpack.c.l.b16 %v2319
    %v2807 = vunpack.c.l.b16 %v2320
    %v2808 = vunpack.c.l.b16 %v2321
    %v2809 = vunpack.c.l.b16 %v2322
    %v2810 = vunpack.c.l.b16 %v2323
    %v2811 = vunpack.c.l.b16 %v2324
    %v2812 = vunpack.c.l.b16 %v2325
    %v2813 = vunpack.c.l.b16 %v2326
    %v2814 = vunpack.c.l.b16 %v2327
    %v2815 = vunpack.c.l.b16 %v2328
    %v2816 = vunpack.c.l.b16 %v2329
    %v2817 = vunpack.c.l.b16 %v2330
    %v2818 = vunpack.c.l.b16 %v2331
    %v2819 = vunpack.c.l.b16 %v2332
    %v2820 = vunpack.c.l.b16 %v2333
    %v2821 = vunpack.c.l.b16 %v2334
    %v2822 = vunpack.c.l.b16 %v2335
    %v2823 = vunpack.c.l.b16 %v2336
    %v2824 = vunpack.c.l.b16 %v2337
    %v2825 = vunpack.c.l.b16 %v2338
    %v2826 = vunpack.c.l.b16 %v2339
    %v2827 = vunpack.c.l.b16 %v2340
    %v2828 = vunpack.c.l.b16 %v2341
    %v2829 = vunpack.c.l.b16 %v2342
    %v2830 = vunpack.c.l.b16 %v2343
    %v2831 = vunpack.c.l.b16 %v2344
    %v2832 = vunpack.c.l.b16 %v2345
    %v2833 = vunpack.c.l.b16 %v2346
    %v2834 = vunpack.c.l.b16 %v2347
    %v2835 = vunpack.c.l.b16 %v2348
    %v2836 = vunpack.c.l.b16 %v2349
    %v2837 = vunpack.c.l.b16 %v2350
    %v2838 = vunpack.c.l.b16 %v2351
    %v2839 = vunpack.c.l.b16 %v2352
    %v2840 = vunpack.c.l.b16 %v2353
    %v2841 = vunpack.c.l.b16 %v2354
    %v2842 = vunpack.c.l.b16 %v2355
    %v2843 = vunpack.c.l.b16 %v2356
    %v2844 = vunpack.c.l.b16 %v2357
    %v2845 = vunpack.c.l.b16 %v2358
    %v2846 = vunpack.c.l.b16 %v2359
    %v2847 = vunpack.c.l.b16 %v2360
    %v2848 = vunpack.c.l.b16 %v2361
    %v2849 = vunpack.c.l.b16 %v2362
    %v2850 = vunpack.c.l.b16 %v2363
    %v2851 = vunpack.c.l.b16 %v2364
    %v2852 = vunpack.c.l.b16 %v2365
    %v2853 = vunpack.c.l.b16 %v2366
    %v2854 = vunpack.c.l.b16 %v2367
    %v2855 = vunpack.c.l.b16 %v2368
    %v2856 = vunpack.c.l.b16 %v2369
    %v2857 = vunpack.c.l.b16 %v2370
    %v2858 = vunpack.c.l.b16 %v2371
    %v2859 = vunpack.c.l.b16 %v2372
    %v2860 = vunpack.c.l.b16 %v2373
    %v2861 = vunpack.c.l.b16 %v2374
    %v2862 = vunpack.c.l.b16 %v2375
    %v2863 = vunpack.c.l.b16 %v2376
    %v2864 = vunpack.c.l.b16 %v2377
    %v2865 = vunpack.c.l.b16 %v2378
    %v2866 = vunpack.c.l.b16 %v2379
    %v2867 = vunpack.c.l.b16 %v2380
    %v2868 = vunpack.c.l.b16 %v2381
    %v2869 = vunpack.c.l.b16 %v2382
    %v2870 = vunpack.c.l.b16 %v2383
    %v2871 = vunpack.c.l.b16 %v2384
    %v2872 = vunpack.c.l.b16 %v2385
    %v2873 = vunpack.c.l.b16 %v2386
    %v2874 = vunpack.c.l.b16 %v2387
    %v2875 = vunpack.c.l.b16 %v2388
    %v2876 = vunpack.c.l.b16 %v2389
    %v2877 = vunpack.c.l.b16 %v2390
    %v2878 = vunpack.c.l.b16 %v2391
    %v2879 = vunpack.c.l.b16 %v2392
    %v2880 = vunpack.c.l.b16 %v2393
    %v2881 = vunpack.c.l.b16 %v2394
    %v2882 = vunpack.c.l.b16 %v2395
    %v2883 = vunpack.c.l.b16 %v2396
    %v2884 = vunpack.c.l.b16 %v2397
    %v2885 = vunpack.c.l.b16 %v2398
    %v2886 = vunpack.c.l.b16 %v2399
    %v2887 = vunpack.c.l.b16 %v2400
    %v2888 = vunpack.c.l.b16 %v2401
    %v2889 = vunpack.c.l.b16 %v2402
    %v2890 = vunpack.c.l.b16 %v2403
    %v2891 = vunpack.c.l.b16 %v2404
    %v2892 = vunpack.c.l.b16 %v2405
    %v2893 = vunpack.c.l.b16 %v2406
    %v2894 = vunpack.c.l.b16 %v2407
    %v2895 = vunpack.c.l.b16 %v2408
    %v2896 = vunpack.c.l.b16 %v2409
    %v2897 = vunpack.c.l.b16 %v2410
    %v2898 = vunpack.c.l.b16 %v2411
    %v2899 = vunpack.c.l.b16 %v2412
    %v2900 = vunpack.c.l.b16 %v2413
    %v2901 = vunpack.c.l.b16 %v2414
    %v2902 = vunpack.c.l.b16 %v2415
    %v2903 = vunpack.c.l.b16 %v2416
    %v2904 = vunpack.c.l.b16 %v2417
    %v2905 = vunpack.c.l.b16 %v2418
    %v2906 = vunpack.c.l.b16 %v2419
    %v2907 = vunpack.c.l.b16 %v2420
    %v2908 = vunpack.c.l.b16 %v2421
    %v2909 = vunpack.c.l.b16 %v2422
    %v2910 = vunpack.c.l.b16 %v2423
    %v2911 = vunpack.c.l.b16 %v2424
    %v2912 = vunpack.c.l.b16 %v2425
    %v2913 = vunpack.c.l.b16 %v2426
    %v2914 = vunpack.c.l.b16 %v2427
    %v2915 = vunpack.c.l.b16 %v2428
    %v2916 = vunpack.c.l.b16 %v2429
    %v2917 = vunpack.c.l.b16 %v2430
    %v2918 = vunpack.c.l.b16 %v2431
    %v2919 = vunpack.c.l.b16 %v2432
    %v2920 = vunpack.c.l.b16 %v2433
    %v2921 = vunpack.c.l.b16 %v2434
    %v2922 = vunpack.c.l.b16 %v2435
    %v2923 = vunpack.c.l.b16 %v2436
    %v2924 = vunpack.c.l.b16 %v2437
    %v2925 = vunpack.c.l.b16 %v2438
    %v2926 = vunpack.c.l.b16 %v2439
    %v2927 = vunpack.c.l.b16 %v2440
    %v2928 = vunpack.c.l.b16 %v2441
    %v2929 = vunpack.c.l.b16 %v2442
    %v2930 = vunpack.c.l.b16 %v2443
    %v2931 = vunpack.c.l.b16 %v2444
    %v2932 = vunpack.c.l.b16 %v2445
    %v2933 = vunpack.c.l.b16 %v2446
    %v2934 = vunpack.c.l.b16 %v2447
    %v2935 = vunpack.c.l.b16 %v2448
    %v2936 = vunpack.c.l.b16 %v2449
    %v2937 = vunpack.c.l.b16 %v2450
    %v2938 = vunpack.c.l.b16 %v2451
    %v2939 = vunpack.c.l.b16 %v2452
    %v2940 = vunpack.c.l.b16 %v2453
    %v2941 = vunpack.c.l.b16 %v2454
    %v2942 = vunpack.c.l.b16 %v2455
    %v2943 = vunpack.c.l.b16 %v2456
    %v2944 = vunpack.c.l.b16 %v2457
    %v2945 = vunpack.c.l.b16 %v2458
    %v2946 = vunpack.c.l.b16 %v2459
    %v2947 = vunpack.c.l.b16 %v2460
    %v2948 = vunpack.c.l.b16 %v2461
    %v2949 = vpack.c.b16 %v2710, %v2709
    %v2950 = vpack.c.b16 %v2712, %v2711
    %v2951 = vpack.c.b16 %v2714, %v2713
    %v2952 = vpack.c.b16 %v2716, %v2715
    %v2953 = vpack.c.b16 %v2718, %v2717
    %v2954 = vpack.c.b16 %v2720, %v2719
    %v2955 = vpack.c.b16 %v2722, %v2721
    %v2956 = vpack.c.b16 %v2724, %v2723
    %v2957 = vpack.c.b16 %v2726, %v2725
    %v2958 = vpack.c.b16 %v2728, %v2727
    %v2959 = vpack.c.b16 %v2730, %v2729
    %v2960 = vpack.c.b16 %v2732, %v2731
    %v2961 = vpack.c.b16 %v2734, %v2733
    %v2962 = vpack.c.b16 %v2736, %v2735
    %v2963 = vpack.c.b16 %v2738, %v2737
    %v2964 = vpack.c.b16 %v2740, %v2739
    %v2965 = vpack.c.b16 %v2742, %v2741
    %v2966 = vpack.c.b16 %v2744, %v2743
    %v2967 = vpack.c.b16 %v2746, %v2745
    %v2968 = vpack.c.b16 %v2748, %v2747
    %v2969 = vpack.c.b16 %v2750, %v2749
    %v2970 = vpack.c.b16 %v2752, %v2751
    %v2971 = vpack.c.b16 %v2754, %v2753
    %v2972 = vpack.c.b16 %v2756, %v2755
    %v2973 = vpack.c.b16 %v2758, %v2757
    %v2974 = vpack.c.b16 %v2760, %v2759
    %v2975 = vpack.c.b16 %v2762, %v2761
    %v2976 = vpack.c.b16 %v2764, %v2763
    %v2977 = vpack.c.b16 %v2766, %v2765
    %v2978 = vpack.c.b16 %v2768, %v2767
    %v2979 = vpack.c.b16 %v2770, %v2769
    %v2980 = vpack.c.b16 %v2772, %v2771
    %v2981 = vpack.c.b16 %v2774, %v2773
    %v2982 = vpack.c.b16 %v2776, %v2775
    %v2983 = vpack.c.b16 %v2778, %v2777
    %v2984 = vpack.c.b16 %v2780, %v2779
    %v2985 = vpack.c.b16 %v2782, %v2781
    %v2986 = vpack.c.b16 %v2784, %v2783
    %v2987 = vpack.c.b16 %v2786, %v2785
    %v2988 = vpack.c.b16 %v2788, %v2787
    %v2989 = vpack.c.b16 %v2790, %v2789
    %v2990 = vpack.c.b16 %v2792, %v2791
    %v2991 = vpack.c.b16 %v2794, %v2793
    %v2992 = vpack.c.b16 %v2796, %v2795
    %v2993 = vpack.c.b16 %v2798, %v2797
    %v2994 = vpack.c.b16 %v2800, %v2799
    %v2995 = vpack.c.b16 %v2802, %v2801
    %v2996 = vpack.c.b16 %v2804, %v2803
    %v2997 = vpack.c.b16 %v2806, %v2805
    %v2998 = vpack.c.b16 %v2808, %v2807
    %v2999 = vpack.c.b16 %v2810, %v2809
    %v3000 = vpack.c.b16 %v2812, %v2811
    %v3001 = vpack.c.b16 %v2814, %v2813
    %v3002 = vpack.c.b16 %v2816, %v2815
    %v3003 = vpack.c.b16 %v2818, %v2817
    %v3004 = vpack.c.b16 %v2820, %v2819
    %v3005 = vpack.c.b16 %v2822, %v2821
    %v3006 = vpack.c.b16 %v2824, %v2823
    %v3007 = vpack.c.b16 %v2826, %v2825
    %v3008 = vpack.c.b16 %v2828, %v2827
    %v3009 = vpack.c.b16 %v2830, %v2829
    %v3010 = vpack.c.b16 %v2832, %v2831
    %v3011 = vpack.c.b16 %v2834, %v2833
    %v3012 = vpack.c.b16 %v2836, %v2835
    %v3013 = vpack.c.b16 %v2838, %v2837
    %v3014 = vpack.c.b16 %v2840, %v2839
    %v3015 = vpack.c.b16 %v2842, %v2841
    %v3016 = vpack.c.b16 %v2844, %v2843
    %v3017 = vpack.c.b16 %v2846, %v2845
    %v3018 = vpack.c.b16 %v2848, %v2847
    %v3019 = vpack.c.b16 %v2850, %v2849
    %v3020 = vpack.c.b16 %v2852, %v2851
    %v3021 = vpack.c.b16 %v2854, %v2853
    %v3022 = vpack.c.b16 %v2856, %v2855
    %v3023 = vpack.c.b16 %v2858, %v2857
    %v3024 = vpack.c.b16 %v2860, %v2859
    %v3025 = vpack.c.b16 %v2862, %v2861
    %v3026 = vpack.c.b16 %v2864, %v2863
    %v3027 = vpack.c.b16 %v2866, %v2865
    %v3028 = vpack.c.b16 %v2868, %v2867
    %v3029 = vpack.c.b16 %v2870, %v2869
    %v3030 = vpack.c.b16 %v2872, %v2871
    %v3031 = vpack.c.b16 %v2874, %v2873
    %v3032 = vpack.c.b16 %v2876, %v2875
    %v3033 = vpack.c.b16 %v2878, %v2877
    %v3034 = vpack.c.b16 %v2880, %v2879
    %v3035 = vpack.c.b16 %v2882, %v2881
    %v3036 = vpack.c.b16 %v2884, %v2883
    %v3037 = vpack.c.b16 %v2886, %v2885
    %v3038 = vpack.c.b16 %v2888, %v2887
    %v3039 = vpack.c.b16 %v2890, %v2889
    %v3040 = vpack.c.b16 %v2892, %v2891
    %v3041 = vpack.c.b16 %v2894, %v2893
    %v3042 = vpack.c.b16 %v2896, %v2895
    %v3043 = vpack.c.b16 %v2898, %v2897
    %v3044 = vpack.c.b16 %v2900, %v2899
    %v3045 = vpack.c.b16 %v2902, %v2901
    %v3046 = vpack.c.b16 %v2904, %v2903
    %v3047 = vpack.c.b16 %v2906, %v2905
    %v3048 = vpack.c.b16 %v2908, %v2907
    %v3049 = vpack.c.b16 %v2910, %v2909
    %v3050 = vpack.c.b16 %v2912, %v2911
    %v3051 = vpack.c.b16 %v2914, %v2913
    %v3052 = vpack.c.b16 %v2916, %v2915
    %v3053 = vpack.c.b16 %v2918, %v2917
    %v3054 = vpack.c.b16 %v2920, %v2919
    %v3055 = vpack.c.b16 %v2922, %v2921
    %v3056 = vpack.c.b16 %v2924, %v2923
    %v3057 = vpack.c.b16 %v2926, %v2925
    %v3058 = vpack.c.b16 %v2928, %v2927
    %v3059 = vpack.c.b16 %v2930, %v2929
    %v3060 = vpack.c.b16 %v2932, %v2931
    %v3061 = vpack.c.b16 %v2934, %v2933
    %v3062 = vpack.c.b16 %v2936, %v2935
    %v3063 = vpack.c.b16 %v2938, %v2937
    %v3064 = vpack.c.b16 %v2940, %v2939
    %v3065 = vpack.c.b16 %v2942, %v2941
    %v3066 = vpack.c.b16 %v2944, %v2943
    %v3067 = vpack.c.b16 %v2946, %v2945
    %v3068 = vpack.c.b16 %v2948, %v2947
    %3189 = vmatprep.subr.bf16.mxu0 0
    %3190 = vmatpush1.bf16.msra.mxu0 %v2956
    %3191 = vmatprep.subr.bf16.mxu0 0
    %3192 = vmatpush1.bf16.msra.mxu0 %v2955
    %3193 = vmatprep.subr.bf16.mxu0 0
    %3194 = vmatpush1.bf16.msra.mxu0 %v2954
    %3195 = vmatprep.subr.bf16.mxu0 0
    %3196 = vmatpush1.bf16.msra.mxu0 %v2953
    %3197 = vmatprep.subr.bf16.mxu0 0
    %3198 = vmatpush1.bf16.msra.mxu0 %v2952
    %3199 = vmatprep.subr.bf16.mxu0 0
    %3200 = vmatpush1.bf16.msra.mxu0 %v2951
    %3201 = vmatprep.subr.bf16.mxu0 0
    %3202 = vmatpush1.bf16.msra.mxu0 %v2950
    %3203 = vmatprep.subr.bf16.mxu0 0
    %3204 = vmatpush1.bf16.msra.mxu0 %v2949
    %3205 = vmatprep.subr.bf16.mxu0 0
    %3206 = vmatpush2.bf16.msra.mxu0 %v2964
    %3207 = vmatprep.subr.bf16.mxu0 0
    %3208 = vmatpush2.bf16.msra.mxu0 %v2963
    %3209 = vmatprep.subr.bf16.mxu0 0
    %3210 = vmatpush2.bf16.msra.mxu0 %v2962
    %3211 = vmatprep.subr.bf16.mxu0 0
    %3212 = vmatpush2.bf16.msra.mxu0 %v2961
    %3213 = vmatprep.subr.bf16.mxu0 0
    %3214 = vmatpush2.bf16.msra.mxu0 %v2960
    %3215 = vmatprep.subr.bf16.mxu0 0
    %3216 = vmatpush2.bf16.msra.mxu0 %v2959
    %3217 = vmatprep.subr.bf16.mxu0 0
    %3218 = vmatpush2.bf16.msra.mxu0 %v2958
    %3219 = vmatprep.subr.bf16.mxu0 0
    %3220 = vmatpush2.bf16.msra.mxu0 %v2957
    %3221 = vmatprep.mubr.bf16.mxu0 %v1798
    %3222 = vmatmul.mubr.bf16.gmra.mxu0 %v1779
    %v3223 = vpop.f32.mrf.mxu0
    %v3224 = vadd.f32 %v2467, %v3223
    %v3225 = vpop.f32.mrf.mxu0
    %v3226 = vpop.f32.mrf.mxu0
    %v3227 = vadd.f32 %v2467, %v3226
    %v3228 = vpop.f32.mrf.mxu0
    %3229 = vmatprep.mubr.bf16.mxu0 %v1806
    %3230 = vmatmul.mubr.bf16.gmra.mxu0 %v1780
    %v3231 = vpop.f32.mrf.mxu0
    %v3232 = vadd.f32 %v2467, %v3231
    %v3233 = vpop.f32.mrf.mxu0
    %v3234 = vpop.f32.mrf.mxu0
    %v3235 = vadd.f32 %v2467, %v3234
    %v3236 = vpop.f32.mrf.mxu0
    %3237 = vmatprep.mubr.bf16.mxu0 %v1814
    %3238 = vmatmul.mubr.bf16.gmra.mxu0 %v1781
    %v3239 = vpop.f32.mrf.mxu0
    %v3240 = vadd.f32 %v2467, %v3239
    %v3241 = vpop.f32.mrf.mxu0
    %v3242 = vpop.f32.mrf.mxu0
    %v3243 = vadd.f32 %v2467, %v3242
    %v3244 = vpop.f32.mrf.mxu0
    %3245 = vmatprep.mubr.bf16.mxu0 %v1826
    %3246 = vmatmul.mubr.bf16.gmra.mxu0 %v1783
    %v3247 = vpop.f32.mrf.mxu0
    %v3248 = vadd.f32 %v2467, %v3247
    %v3249 = vpop.f32.mrf.mxu0
    %v3250 = vpop.f32.mrf.mxu0
    %v3251 = vadd.f32 %v2467, %v3250
    %v3252 = vpop.f32.mrf.mxu0
    %3253 = vmatprep.mubr.bf16.mxu0 %v1834
    %3254 = vmatmul.mubr.bf16.gmra.mxu0 %v1784
    %v3255 = vpop.f32.mrf.mxu0
    %v3256 = vadd.f32 %v2467, %v3255
    %v3257 = vpop.f32.mrf.mxu0
    %v3258 = vpop.f32.mrf.mxu0
    %v3259 = vadd.f32 %v2467, %v3258
    %v3260 = vpop.f32.mrf.mxu0
    %3261 = vmatprep.mubr.bf16.mxu0 %v1842
    %3262 = vmatmul.mubr.bf16.gmra.mxu0 %v1785
    %v3263 = vpop.f32.mrf.mxu0
    %v3264 = vadd.f32 %v2467, %v3263
    %v3265 = vpop.f32.mrf.mxu0
    %v3266 = vpop.f32.mrf.mxu0
    %v3267 = vadd.f32 %v2467, %v3266
    %v3268 = vpop.f32.mrf.mxu0
    %3269 = vdwg.mxu0
    %3270 = vmatprep.subr.bf16.mxu0 0
    %3271 = vmatpush1.bf16.msra.mxu0 %v2972
    %3272 = vmatprep.subr.bf16.mxu0 0
    %3273 = vmatpush1.bf16.msra.mxu0 %v2971
    %3274 = vmatprep.subr.bf16.mxu0 0
    %3275 = vmatpush1.bf16.msra.mxu0 %v2970
    %3276 = vmatprep.subr.bf16.mxu0 0
    %3277 = vmatpush1.bf16.msra.mxu0 %v2969
    %3278 = vmatprep.subr.bf16.mxu0 0
    %3279 = vmatpush1.bf16.msra.mxu0 %v2968
    %3280 = vmatprep.subr.bf16.mxu0 0
    %3281 = vmatpush1.bf16.msra.mxu0 %v2967
    %3282 = vmatprep.subr.bf16.mxu0 0
    %3283 = vmatpush1.bf16.msra.mxu0 %v2966
    %3284 = vmatprep.subr.bf16.mxu0 0
    %3285 = vmatpush1.bf16.msra.mxu0 %v2965
    %3286 = vmatprep.subr.bf16.mxu0 0
    %3287 = vmatpush2.bf16.msra.mxu0 %v2980
    %3288 = vmatprep.subr.bf16.mxu0 0
    %3289 = vmatpush2.bf16.msra.mxu0 %v2979
    %3290 = vmatprep.subr.bf16.mxu0 0
    %3291 = vmatpush2.bf16.msra.mxu0 %v2978
    %3292 = vmatprep.subr.bf16.mxu0 0
    %3293 = vmatpush2.bf16.msra.mxu0 %v2977
    %3294 = vmatprep.subr.bf16.mxu0 0
    %3295 = vmatpush2.bf16.msra.mxu0 %v2976
    %3296 = vmatprep.subr.bf16.mxu0 0
    %3297 = vmatpush2.bf16.msra.mxu0 %v2975
    %3298 = vmatprep.subr.bf16.mxu0 0
    %3299 = vmatpush2.bf16.msra.mxu0 %v2974
    %3300 = vmatprep.subr.bf16.mxu0 0
    %3301 = vmatpush2.bf16.msra.mxu0 %v2973
    %3302 = vmatprep.mubr.bf16.mxu0 %v1883
    %3303 = vmatmul.mubr.bf16.gmra.mxu0 %v1859
    %v3304 = vpop.f32.mrf.mxu0
    %v3305 = vadd.f32 %v3224, %v3304
    %v3306 = vpop.f32.mrf.mxu0
    %v3307 = vpop.f32.mrf.mxu0
    %v3308 = vadd.f32 %v3227, %v3307
    %v3309 = vpop.f32.mrf.mxu0
    %3310 = vmatprep.mubr.bf16.mxu0 %v1887
    %3311 = vmatmul.mubr.bf16.gmra.mxu0 %v1861
    %v3312 = vpop.f32.mrf.mxu0
    %v3313 = vadd.f32 %v3232, %v3312
    %v3314 = vpop.f32.mrf.mxu0
    %v3315 = vpop.f32.mrf.mxu0
    %v3316 = vadd.f32 %v3235, %v3315
    %v3317 = vpop.f32.mrf.mxu0
    %3318 = vmatprep.mubr.bf16.mxu0 %v1893
    %3319 = vmatmul.mubr.bf16.gmra.mxu0 %v1863
    %v3320 = vpop.f32.mrf.mxu0
    %v3321 = vadd.f32 %v3240, %v3320
    %v3322 = vpop.f32.mrf.mxu0
    %v3323 = vpop.f32.mrf.mxu0
    %v3324 = vadd.f32 %v3243, %v3323
    %v3325 = vpop.f32.mrf.mxu0
    %3326 = vmatprep.mubr.bf16.mxu0 %v1900
    %3327 = vmatmul.mubr.bf16.gmra.mxu0 %v1866
    %v3328 = vpop.f32.mrf.mxu0
    %v3329 = vadd.f32 %v3248, %v3328
    %v3330 = vpop.f32.mrf.mxu0
    %v3331 = vpop.f32.mrf.mxu0
    %v3332 = vadd.f32 %v3251, %v3331
    %v3333 = vpop.f32.mrf.mxu0
    %3334 = vmatprep.mubr.bf16.mxu0 %v1904
    %3335 = vmatmul.mubr.bf16.gmra.mxu0 %v1868
    %v3336 = vpop.f32.mrf.mxu0
    %v3337 = vadd.f32 %v3256, %v3336
    %v3338 = vpop.f32.mrf.mxu0
    %v3339 = vpop.f32.mrf.mxu0
    %v3340 = vadd.f32 %v3259, %v3339
    %v3341 = vpop.f32.mrf.mxu0
    %3342 = vmatprep.mubr.bf16.mxu0 %v1910
    %3343 = vmatmul.mubr.bf16.gmra.mxu0 %v1870
    %v3344 = vpop.f32.mrf.mxu0
    %v3345 = vadd.f32 %v3264, %v3344
    %v3346 = vpop.f32.mrf.mxu0
    %v3347 = vpop.f32.mrf.mxu0
    %v3348 = vadd.f32 %v3267, %v3347
    %v3349 = vpop.f32.mrf.mxu0
    %3350 = vdwg.mxu0
    %3351 = vmatprep.subr.bf16.mxu0 0
    %3352 = vmatpush1.bf16.msra.mxu0 %v2988
    %3353 = vmatprep.subr.bf16.mxu0 0
    %3354 = vmatpush1.bf16.msra.mxu0 %v2987
    %3355 = vmatprep.subr.bf16.mxu0 0
    %3356 = vmatpush1.bf16.msra.mxu0 %v2986
    %3357 = vmatprep.subr.bf16.mxu0 0
    %3358 = vmatpush1.bf16.msra.mxu0 %v2985
    %3359 = vmatprep.subr.bf16.mxu0 0
    %3360 = vmatpush1.bf16.msra.mxu0 %v2984
    %3361 = vmatprep.subr.bf16.mxu0 0
    %3362 = vmatpush1.bf16.msra.mxu0 %v2983
    %3363 = vmatprep.subr.bf16.mxu0 0
    %3364 = vmatpush1.bf16.msra.mxu0 %v2982
    %3365 = vmatprep.subr.bf16.mxu0 0
    %3366 = vmatpush1.bf16.msra.mxu0 %v2981
    %3367 = vmatprep.subr.bf16.mxu0 0
    %3368 = vmatpush2.bf16.msra.mxu0 %v2996
    %3369 = vmatprep.subr.bf16.mxu0 0
    %3370 = vmatpush2.bf16.msra.mxu0 %v2995
    %3371 = vmatprep.subr.bf16.mxu0 0
    %3372 = vmatpush2.bf16.msra.mxu0 %v2994
    %3373 = vmatprep.subr.bf16.mxu0 0
    %3374 = vmatpush2.bf16.msra.mxu0 %v2993
    %3375 = vmatprep.subr.bf16.mxu0 0
    %3376 = vmatpush2.bf16.msra.mxu0 %v2992
    %3377 = vmatprep.subr.bf16.mxu0 0
    %3378 = vmatpush2.bf16.msra.mxu0 %v2991
    %3379 = vmatprep.subr.bf16.mxu0 0
    %3380 = vmatpush2.bf16.msra.mxu0 %v2990
    %3381 = vmatprep.subr.bf16.mxu0 0
    %3382 = vmatpush2.bf16.msra.mxu0 %v2989
    %3383 = vmatprep.mubr.bf16.mxu0 %v1943
    %3384 = vmatmul.mubr.bf16.gmra.mxu0 %v1919
    %v3385 = vpop.f32.mrf.mxu0
    %v3386 = vadd.f32 %v3305, %v3385
    %v3387 = vpop.f32.mrf.mxu0
    %v3388 = vpop.f32.mrf.mxu0
    %v3389 = vadd.f32 %v3308, %v3388
    %v3390 = vpop.f32.mrf.mxu0
    %3391 = vmatprep.mubr.bf16.mxu0 %v1947
    %3392 = vmatmul.mubr.bf16.gmra.mxu0 %v1921
    %v3393 = vpop.f32.mrf.mxu0
    %v3394 = vadd.f32 %v3313, %v3393
    %v3395 = vpop.f32.mrf.mxu0
    %v3396 = vpop.f32.mrf.mxu0
    %v3397 = vadd.f32 %v3316, %v3396
    %v3398 = vpop.f32.mrf.mxu0
    %3399 = vmatprep.mubr.bf16.mxu0 %v1951
    %3400 = vmatmul.mubr.bf16.gmra.mxu0 %v1923
    %v3401 = vpop.f32.mrf.mxu0
    %v3402 = vadd.f32 %v3321, %v3401
    %v3403 = vpop.f32.mrf.mxu0
    %v3404 = vpop.f32.mrf.mxu0
    %v3405 = vadd.f32 %v3324, %v3404
    %v3406 = vpop.f32.mrf.mxu0
    %3407 = vmatprep.mubr.bf16.mxu0 %v1958
    %3408 = vmatmul.mubr.bf16.gmra.mxu0 %v1926
    %v3409 = vpop.f32.mrf.mxu0
    %v3410 = vadd.f32 %v3329, %v3409
    %v3411 = vpop.f32.mrf.mxu0
    %v3412 = vpop.f32.mrf.mxu0
    %v3413 = vadd.f32 %v3332, %v3412
    %v3414 = vpop.f32.mrf.mxu0
    %3415 = vmatprep.mubr.bf16.mxu0 %v1962
    %3416 = vmatmul.mubr.bf16.gmra.mxu0 %v1928
    %v3417 = vpop.f32.mrf.mxu0
    %v3418 = vadd.f32 %v3337, %v3417
    %v3419 = vpop.f32.mrf.mxu0
    %v3420 = vpop.f32.mrf.mxu0
    %v3421 = vadd.f32 %v3340, %v3420
    %v3422 = vpop.f32.mrf.mxu0
    %3423 = vmatprep.mubr.bf16.mxu0 %v1966
    %3424 = vmatmul.mubr.bf16.gmra.mxu0 %v1930
    %v3425 = vpop.f32.mrf.mxu0
    %v3426 = vadd.f32 %v3345, %v3425
    %v3427 = vpop.f32.mrf.mxu0
    %v3428 = vpop.f32.mrf.mxu0
    %v3429 = vadd.f32 %v3348, %v3428
    %v3430 = vpop.f32.mrf.mxu0
    %3431 = vdwg.mxu0
    %3432 = vmatprep.subr.bf16.mxu0 0
    %3433 = vmatpush1.bf16.msra.mxu0 %v3004
    %3434 = vmatprep.subr.bf16.mxu0 0
    %3435 = vmatpush1.bf16.msra.mxu0 %v3003
    %3436 = vmatprep.subr.bf16.mxu0 0
    %3437 = vmatpush1.bf16.msra.mxu0 %v3002
    %3438 = vmatprep.subr.bf16.mxu0 0
    %3439 = vmatpush1.bf16.msra.mxu0 %v3001
    %3440 = vmatprep.subr.bf16.mxu0 0
    %3441 = vmatpush1.bf16.msra.mxu0 %v3000
    %3442 = vmatprep.subr.bf16.mxu0 0
    %3443 = vmatpush1.bf16.msra.mxu0 %v2999
    %3444 = vmatprep.subr.bf16.mxu0 0
    %3445 = vmatpush1.bf16.msra.mxu0 %v2998
    %3446 = vmatprep.subr.bf16.mxu0 0
    %3447 = vmatpush1.bf16.msra.mxu0 %v2997
    %3448 = vmatprep.subr.bf16.mxu0 0
    %3449 = vmatpush2.bf16.msra.mxu0 %v3012
    %3450 = vmatprep.subr.bf16.mxu0 0
    %3451 = vmatpush2.bf16.msra.mxu0 %v3011
    %3452 = vmatprep.subr.bf16.mxu0 0
    %3453 = vmatpush2.bf16.msra.mxu0 %v3010
    %3454 = vmatprep.subr.bf16.mxu0 0
    %3455 = vmatpush2.bf16.msra.mxu0 %v3009
    %3456 = vmatprep.subr.bf16.mxu0 0
    %3457 = vmatpush2.bf16.msra.mxu0 %v3008
    %3458 = vmatprep.subr.bf16.mxu0 0
    %3459 = vmatpush2.bf16.msra.mxu0 %v3007
    %3460 = vmatprep.subr.bf16.mxu0 0
    %3461 = vmatpush2.bf16.msra.mxu0 %v3006
    %3462 = vmatprep.subr.bf16.mxu0 0
    %3463 = vmatpush2.bf16.msra.mxu0 %v3005
    %3464 = vmatprep.mubr.bf16.mxu0 %v1999
    %3465 = vmatmul.mubr.bf16.gmra.mxu0 %v1975
    %v3466 = vpop.f32.mrf.mxu0
    %v3467 = vadd.f32 %v3386, %v3466
    %v3468 = vpop.f32.mrf.mxu0
    %v3469 = vpop.f32.mrf.mxu0
    %v3470 = vadd.f32 %v3389, %v3469
    %v3471 = vpop.f32.mrf.mxu0
    %3472 = vmatprep.mubr.bf16.mxu0 %v2003
    %3473 = vmatmul.mubr.bf16.gmra.mxu0 %v1977
    %v3474 = vpop.f32.mrf.mxu0
    %v3475 = vadd.f32 %v3394, %v3474
    %v3476 = vpop.f32.mrf.mxu0
    %v3477 = vpop.f32.mrf.mxu0
    %v3478 = vadd.f32 %v3397, %v3477
    %v3479 = vpop.f32.mrf.mxu0
    %3480 = vmatprep.mubr.bf16.mxu0 %v2007
    %3481 = vmatmul.mubr.bf16.gmra.mxu0 %v1979
    %v3482 = vpop.f32.mrf.mxu0
    %v3483 = vadd.f32 %v3402, %v3482
    %v3484 = vpop.f32.mrf.mxu0
    %v3485 = vpop.f32.mrf.mxu0
    %v3486 = vadd.f32 %v3405, %v3485
    %v3487 = vpop.f32.mrf.mxu0
    %3488 = vmatprep.mubr.bf16.mxu0 %v2014
    %3489 = vmatmul.mubr.bf16.gmra.mxu0 %v1982
    %v3490 = vpop.f32.mrf.mxu0
    %v3491 = vadd.f32 %v3410, %v3490
    %v3492 = vpop.f32.mrf.mxu0
    %v3493 = vpop.f32.mrf.mxu0
    %v3494 = vadd.f32 %v3413, %v3493
    %v3495 = vpop.f32.mrf.mxu0
    %3496 = vmatprep.mubr.bf16.mxu0 %v2018
    %3497 = vmatmul.mubr.bf16.gmra.mxu0 %v1984
    %v3498 = vpop.f32.mrf.mxu0
    %v3499 = vadd.f32 %v3418, %v3498
    %v3500 = vpop.f32.mrf.mxu0
    %v3501 = vpop.f32.mrf.mxu0
    %v3502 = vadd.f32 %v3421, %v3501
    %v3503 = vpop.f32.mrf.mxu0
    %3504 = vmatprep.mubr.bf16.mxu0 %v2022
    %3505 = vmatmul.mubr.bf16.gmra.mxu0 %v1986
    %v3506 = vpop.f32.mrf.mxu0
    %v3507 = vadd.f32 %v3426, %v3506
    %v3508 = vpop.f32.mrf.mxu0
    %v3509 = vpop.f32.mrf.mxu0
    %v3510 = vadd.f32 %v3429, %v3509
    %v3511 = vpop.f32.mrf.mxu0
    %3512 = vdwg.mxu0
    %3513 = vmatprep.subr.bf16.mxu0 0
    %3514 = vmatpush1.bf16.msra.mxu0 %v3020
    %3515 = vmatprep.subr.bf16.mxu0 0
    %3516 = vmatpush1.bf16.msra.mxu0 %v3019
    %3517 = vmatprep.subr.bf16.mxu0 0
    %3518 = vmatpush1.bf16.msra.mxu0 %v3018
    %3519 = vmatprep.subr.bf16.mxu0 0
    %3520 = vmatpush1.bf16.msra.mxu0 %v3017
    %3521 = vmatprep.subr.bf16.mxu0 0
    %3522 = vmatpush1.bf16.msra.mxu0 %v3016
    %3523 = vmatprep.subr.bf16.mxu0 0
    %3524 = vmatpush1.bf16.msra.mxu0 %v3015
    %3525 = vmatprep.subr.bf16.mxu0 0
    %3526 = vmatpush1.bf16.msra.mxu0 %v3014
    %3527 = vmatprep.subr.bf16.mxu0 0
    %3528 = vmatpush1.bf16.msra.mxu0 %v3013
    %3529 = vmatprep.subr.bf16.mxu0 0
    %3530 = vmatpush2.bf16.msra.mxu0 %v3028
    %3531 = vmatprep.subr.bf16.mxu0 0
    %3532 = vmatpush2.bf16.msra.mxu0 %v3027
    %3533 = vmatprep.subr.bf16.mxu0 0
    %3534 = vmatpush2.bf16.msra.mxu0 %v3026
    %3535 = vmatprep.subr.bf16.mxu0 0
    %3536 = vmatpush2.bf16.msra.mxu0 %v3025
    %3537 = vmatprep.subr.bf16.mxu0 0
    %3538 = vmatpush2.bf16.msra.mxu0 %v3024
    %3539 = vmatprep.subr.bf16.mxu0 0
    %3540 = vmatpush2.bf16.msra.mxu0 %v3023
    %3541 = vmatprep.subr.bf16.mxu0 0
    %3542 = vmatpush2.bf16.msra.mxu0 %v3022
    %3543 = vmatprep.subr.bf16.mxu0 0
    %3544 = vmatpush2.bf16.msra.mxu0 %v3021
    %3545 = vmatprep.mubr.bf16.mxu0 %v2055
    %3546 = vmatmul.mubr.bf16.gmra.mxu0 %v2031
    %v3547 = vpop.f32.mrf.mxu0
    %v3548 = vadd.f32 %v3467, %v3547
    %v3549 = vpop.f32.mrf.mxu0
    %v3550 = vpop.f32.mrf.mxu0
    %v3551 = vadd.f32 %v3470, %v3550
    %v3552 = vpop.f32.mrf.mxu0
    %3553 = vmatprep.mubr.bf16.mxu0 %v2059
    %3554 = vmatmul.mubr.bf16.gmra.mxu0 %v2033
    %v3555 = vpop.f32.mrf.mxu0
    %v3556 = vadd.f32 %v3475, %v3555
    %v3557 = vpop.f32.mrf.mxu0
    %v3558 = vpop.f32.mrf.mxu0
    %v3559 = vadd.f32 %v3478, %v3558
    %v3560 = vpop.f32.mrf.mxu0
    %3561 = vmatprep.mubr.bf16.mxu0 %v2063
    %3562 = vmatmul.mubr.bf16.gmra.mxu0 %v2035
    %v3563 = vpop.f32.mrf.mxu0
    %v3564 = vadd.f32 %v3483, %v3563
    %v3565 = vpop.f32.mrf.mxu0
    %v3566 = vpop.f32.mrf.mxu0
    %v3567 = vadd.f32 %v3486, %v3566
    %v3568 = vpop.f32.mrf.mxu0
    %3569 = vmatprep.mubr.bf16.mxu0 %v2070
    %3570 = vmatmul.mubr.bf16.gmra.mxu0 %v2038
    %v3571 = vpop.f32.mrf.mxu0
    %v3572 = vadd.f32 %v3491, %v3571
    %v3573 = vpop.f32.mrf.mxu0
    %v3574 = vpop.f32.mrf.mxu0
    %v3575 = vadd.f32 %v3494, %v3574
    %v3576 = vpop.f32.mrf.mxu0
    %3577 = vmatprep.mubr.bf16.mxu0 %v2074
    %3578 = vmatmul.mubr.bf16.gmra.mxu0 %v2040
    %v3579 = vpop.f32.mrf.mxu0
    %v3580 = vadd.f32 %v3499, %v3579
    %v3581 = vpop.f32.mrf.mxu0
    %v3582 = vpop.f32.mrf.mxu0
    %v3583 = vadd.f32 %v3502, %v3582
    %v3584 = vpop.f32.mrf.mxu0
    %3585 = vmatprep.mubr.bf16.mxu0 %v2078
    %3586 = vmatmul.mubr.bf16.gmra.mxu0 %v2042
    %v3587 = vpop.f32.mrf.mxu0
    %v3588 = vadd.f32 %v3507, %v3587
    %v3589 = vpop.f32.mrf.mxu0
    %v3590 = vpop.f32.mrf.mxu0
    %v3591 = vadd.f32 %v3510, %v3590
    %v3592 = vpop.f32.mrf.mxu0
    %3593 = vdwg.mxu0
    %3594 = vmatprep.subr.bf16.mxu0 0
    %3595 = vmatpush1.bf16.msra.mxu0 %v3036
    %3596 = vmatprep.subr.bf16.mxu0 0
    %3597 = vmatpush1.bf16.msra.mxu0 %v3035
    %3598 = vmatprep.subr.bf16.mxu0 0
    %3599 = vmatpush1.bf16.msra.mxu0 %v3034
    %3600 = vmatprep.subr.bf16.mxu0 0
    %3601 = vmatpush1.bf16.msra.mxu0 %v3033
    %3602 = vmatprep.subr.bf16.mxu0 0
    %3603 = vmatpush1.bf16.msra.mxu0 %v3032
    %3604 = vmatprep.subr.bf16.mxu0 0
    %3605 = vmatpush1.bf16.msra.mxu0 %v3031
    %3606 = vmatprep.subr.bf16.mxu0 0
    %3607 = vmatpush1.bf16.msra.mxu0 %v3030
    %3608 = vmatprep.subr.bf16.mxu0 0
    %3609 = vmatpush1.bf16.msra.mxu0 %v3029
    %3610 = vmatprep.subr.bf16.mxu0 0
    %3611 = vmatpush2.bf16.msra.mxu0 %v3044
    %3612 = vmatprep.subr.bf16.mxu0 0
    %3613 = vmatpush2.bf16.msra.mxu0 %v3043
    %3614 = vmatprep.subr.bf16.mxu0 0
    %3615 = vmatpush2.bf16.msra.mxu0 %v3042
    %3616 = vmatprep.subr.bf16.mxu0 0
    %3617 = vmatpush2.bf16.msra.mxu0 %v3041
    %3618 = vmatprep.subr.bf16.mxu0 0
    %3619 = vmatpush2.bf16.msra.mxu0 %v3040
    %3620 = vmatprep.subr.bf16.mxu0 0
    %3621 = vmatpush2.bf16.msra.mxu0 %v3039
    %3622 = vmatprep.subr.bf16.mxu0 0
    %3623 = vmatpush2.bf16.msra.mxu0 %v3038
    %3624 = vmatprep.subr.bf16.mxu0 0
    %3625 = vmatpush2.bf16.msra.mxu0 %v3037
    %3626 = vmatprep.mubr.bf16.mxu0 %v2113
    %3627 = vmatmul.mubr.bf16.gmra.mxu0 %v2088
    %v3628 = vpop.f32.mrf.mxu0
    %v3629 = vadd.f32 %v3548, %v3628
    %v3630 = vpop.f32.mrf.mxu0
    %v3631 = vpop.f32.mrf.mxu0
    %v3632 = vadd.f32 %v3551, %v3631
    %v3633 = vpop.f32.mrf.mxu0
    %3634 = vmatprep.mubr.bf16.mxu0 %v2117
    %3635 = vmatmul.mubr.bf16.gmra.mxu0 %v2090
    %v3636 = vpop.f32.mrf.mxu0
    %v3637 = vadd.f32 %v3556, %v3636
    %v3638 = vpop.f32.mrf.mxu0
    %v3639 = vpop.f32.mrf.mxu0
    %v3640 = vadd.f32 %v3559, %v3639
    %v3641 = vpop.f32.mrf.mxu0
    %3642 = vmatprep.mubr.bf16.mxu0 %v2121
    %3643 = vmatmul.mubr.bf16.gmra.mxu0 %v2092
    %v3644 = vpop.f32.mrf.mxu0
    %v3645 = vadd.f32 %v3564, %v3644
    %v3646 = vpop.f32.mrf.mxu0
    %v3647 = vpop.f32.mrf.mxu0
    %v3648 = vadd.f32 %v3567, %v3647
    %v3649 = vpop.f32.mrf.mxu0
    %3650 = vmatprep.mubr.bf16.mxu0 %v2128
    %3651 = vmatmul.mubr.bf16.gmra.mxu0 %v2095
    %v3652 = vpop.f32.mrf.mxu0
    %v3653 = vadd.f32 %v3572, %v3652
    %v3654 = vpop.f32.mrf.mxu0
    %v3655 = vpop.f32.mrf.mxu0
    %v3656 = vadd.f32 %v3575, %v3655
    %v3657 = vpop.f32.mrf.mxu0
    %3658 = vmatprep.mubr.bf16.mxu0 %v2132
    %3659 = vmatmul.mubr.bf16.gmra.mxu0 %v2097
    %v3660 = vpop.f32.mrf.mxu0
    %v3661 = vadd.f32 %v3580, %v3660
    %v3662 = vpop.f32.mrf.mxu0
    %v3663 = vpop.f32.mrf.mxu0
    %v3664 = vadd.f32 %v3583, %v3663
    %v3665 = vpop.f32.mrf.mxu0
    %3666 = vmatprep.mubr.bf16.mxu0 %v2136
    %3667 = vmatmul.mubr.bf16.gmra.mxu0 %v2099
    %v3668 = vpop.f32.mrf.mxu0
    %v3669 = vadd.f32 %v3588, %v3668
    %v3670 = vpop.f32.mrf.mxu0
    %v3671 = vpop.f32.mrf.mxu0
    %v3672 = vadd.f32 %v3591, %v3671
    %v3673 = vpop.f32.mrf.mxu0
    %3674 = vdwg.mxu0
    %3675 = vmatprep.subr.bf16.mxu0 0
    %3676 = vmatpush1.bf16.msra.mxu0 %v3052
    %3677 = vmatprep.subr.bf16.mxu0 0
    %3678 = vmatpush1.bf16.msra.mxu0 %v3051
    %3679 = vmatprep.subr.bf16.mxu0 0
    %3680 = vmatpush1.bf16.msra.mxu0 %v3050
    %3681 = vmatprep.subr.bf16.mxu0 0
    %3682 = vmatpush1.bf16.msra.mxu0 %v3049
    %3683 = vmatprep.subr.bf16.mxu0 0
    %3684 = vmatpush1.bf16.msra.mxu0 %v3048
    %3685 = vmatprep.subr.bf16.mxu0 0
    %3686 = vmatpush1.bf16.msra.mxu0 %v3047
    %3687 = vmatprep.subr.bf16.mxu0 0
    %3688 = vmatpush1.bf16.msra.mxu0 %v3046
    %3689 = vmatprep.subr.bf16.mxu0 0
    %3690 = vmatpush1.bf16.msra.mxu0 %v3045
    %3691 = vmatprep.subr.bf16.mxu0 0
    %3692 = vmatpush2.bf16.msra.mxu0 %v3060
    %3693 = vmatprep.subr.bf16.mxu0 0
    %3694 = vmatpush2.bf16.msra.mxu0 %v3059
    %3695 = vmatprep.subr.bf16.mxu0 0
    %3696 = vmatpush2.bf16.msra.mxu0 %v3058
    %3697 = vmatprep.subr.bf16.mxu0 0
    %3698 = vmatpush2.bf16.msra.mxu0 %v3057
    %3699 = vmatprep.subr.bf16.mxu0 0
    %3700 = vmatpush2.bf16.msra.mxu0 %v3056
    %3701 = vmatprep.subr.bf16.mxu0 0
    %3702 = vmatpush2.bf16.msra.mxu0 %v3055
    %3703 = vmatprep.subr.bf16.mxu0 0
    %3704 = vmatpush2.bf16.msra.mxu0 %v3054
    %3705 = vmatprep.subr.bf16.mxu0 0
    %3706 = vmatpush2.bf16.msra.mxu0 %v3053
    %3707 = vmatprep.mubr.bf16.mxu0 %v2171
    %3708 = vmatmul.mubr.bf16.gmra.mxu0 %v2146
    %v3709 = vpop.f32.mrf.mxu0
    %v3710 = vadd.f32 %v3629, %v3709
    %v3711 = vpop.f32.mrf.mxu0
    %v3712 = vpop.f32.mrf.mxu0
    %v3713 = vadd.f32 %v3632, %v3712
    %v3714 = vpop.f32.mrf.mxu0
    %3715 = vmatprep.mubr.bf16.mxu0 %v2175
    %3716 = vmatmul.mubr.bf16.gmra.mxu0 %v2148
    %v3717 = vpop.f32.mrf.mxu0
    %v3718 = vadd.f32 %v3637, %v3717
    %v3719 = vpop.f32.mrf.mxu0
    %v3720 = vpop.f32.mrf.mxu0
    %v3721 = vadd.f32 %v3640, %v3720
    %v3722 = vpop.f32.mrf.mxu0
    %3723 = vmatprep.mubr.bf16.mxu0 %v2179
    %3724 = vmatmul.mubr.bf16.gmra.mxu0 %v2150
    %v3725 = vpop.f32.mrf.mxu0
    %v3726 = vadd.f32 %v3645, %v3725
    %v3727 = vpop.f32.mrf.mxu0
    %v3728 = vpop.f32.mrf.mxu0
    %v3729 = vadd.f32 %v3648, %v3728
    %v3730 = vpop.f32.mrf.mxu0
    %3731 = vmatprep.mubr.bf16.mxu0 %v2186
    %3732 = vmatmul.mubr.bf16.gmra.mxu0 %v2153
    %v3733 = vpop.f32.mrf.mxu0
    %v3734 = vadd.f32 %v3653, %v3733
    %v3735 = vpop.f32.mrf.mxu0
    %v3736 = vpop.f32.mrf.mxu0
    %v3737 = vadd.f32 %v3656, %v3736
    %v3738 = vpop.f32.mrf.mxu0
    %3739 = vmatprep.mubr.bf16.mxu0 %v2190
    %3740 = vmatmul.mubr.bf16.gmra.mxu0 %v2155
    %v3741 = vpop.f32.mrf.mxu0
    %v3742 = vadd.f32 %v3661, %v3741
    %v3743 = vpop.f32.mrf.mxu0
    %v3744 = vpop.f32.mrf.mxu0
    %v3745 = vadd.f32 %v3664, %v3744
    %v3746 = vpop.f32.mrf.mxu0
    %3747 = vmatprep.mubr.bf16.mxu0 %v2194
    %3748 = vmatmul.mubr.bf16.gmra.mxu0 %v2157
    %v3749 = vpop.f32.mrf.mxu0
    %v3750 = vadd.f32 %v3669, %v3749
    %v3751 = vpop.f32.mrf.mxu0
    %v3752 = vpop.f32.mrf.mxu0
    %v3753 = vadd.f32 %v3672, %v3752
    %v3754 = vpop.f32.mrf.mxu0
    %3755 = vdwg.mxu0
    %3756 = vmatprep.subr.bf16.mxu0 0
    %3757 = vmatpush1.bf16.msra.mxu0 %v3068
    %3758 = vmatprep.subr.bf16.mxu0 0
    %3759 = vmatpush1.bf16.msra.mxu0 %v3067
    %3760 = vmatprep.subr.bf16.mxu0 0
    %3761 = vmatpush1.bf16.msra.mxu0 %v3066
    %3762 = vmatprep.subr.bf16.mxu0 0
    %3763 = vmatpush1.bf16.msra.mxu0 %v3065
    %3764 = vmatprep.subr.bf16.mxu0 0
    %3765 = vmatpush1.bf16.msra.mxu0 %v3064
    %3766 = vmatprep.subr.bf16.mxu0 0
    %3767 = vmatpush1.bf16.msra.mxu0 %v3063
    %3768 = vmatprep.subr.bf16.mxu0 0
    %3769 = vmatpush1.bf16.msra.mxu0 %v3062
    %3770 = vmatprep.subr.bf16.mxu0 0
    %3771 = vmatpush1.bf16.msra.mxu0 %v3061
    %3772 = vmatprep.subr.bf16.mxu0 0
    %3773 = vmatpush2.bf16.msra.mxu0 0
    %3774 = vmatprep.subr.bf16.mxu0 0
    %3775 = vmatpush2.bf16.msra.mxu0 0
    %3776 = vmatprep.subr.bf16.mxu0 0
    %3777 = vmatpush2.bf16.msra.mxu0 0
    %3778 = vmatprep.subr.bf16.mxu0 0
    %3779 = vmatpush2.bf16.msra.mxu0 0
    %3780 = vmatprep.subr.bf16.mxu0 0
    %3781 = vmatpush2.bf16.msra.mxu0 0
    %3782 = vmatprep.subr.bf16.mxu0 0
    %3783 = vmatpush2.bf16.msra.mxu0 0
    %3784 = vmatprep.subr.bf16.mxu0 0
    %3785 = vmatpush2.bf16.msra.mxu0 0
    %3786 = vmatprep.subr.bf16.mxu0 0
    %3787 = vmatpush2.bf16.msra.mxu0 0
    %3788 = vmatprep.mubr.bf16.mxu0 0
    %3789 = vmatmul.mubr.bf16.gmra.mxu0 %v2204
    %v3790 = vpop.f32.mrf.mxu0
    %v3791 = vadd.f32 %v3710, %v3790
    %v3792 = vpop.f32.mrf.mxu0
    %v3793 = vpop.f32.mrf.mxu0
    %v3794 = vadd.f32 %v3713, %v3793
    %v3795 = vpop.f32.mrf.mxu0
    %3796 = vmatprep.mubr.bf16.mxu0 0
    %3797 = vmatmul.mubr.bf16.gmra.mxu0 %v2206
    %v3798 = vpop.f32.mrf.mxu0
    %v3799 = vadd.f32 %v3718, %v3798
    %v3800 = vpop.f32.mrf.mxu0
    %v3801 = vpop.f32.mrf.mxu0
    %v3802 = vadd.f32 %v3721, %v3801
    %v3803 = vpop.f32.mrf.mxu0
    %3804 = vmatprep.mubr.bf16.mxu0 0
    %3805 = vmatmul.mubr.bf16.gmra.mxu0 %v2208
    %v3806 = vpop.f32.mrf.mxu0
    %v3807 = vadd.f32 %v3726, %v3806
    %v3808 = vpop.f32.mrf.mxu0
    %v3809 = vpop.f32.mrf.mxu0
    %v3810 = vadd.f32 %v3729, %v3809
    %v3811 = vpop.f32.mrf.mxu0
    %3812 = vmatprep.mubr.bf16.mxu0 0
    %3813 = vmatmul.mubr.bf16.gmra.mxu0 %v2211
    %v3814 = vpop.f32.mrf.mxu0
    %v3815 = vadd.f32 %v3734, %v3814
    %v3816 = vpop.f32.mrf.mxu0
    %v3817 = vpop.f32.mrf.mxu0
    %v3818 = vadd.f32 %v3737, %v3817
    %v3819 = vpop.f32.mrf.mxu0
    %3820 = vmatprep.mubr.bf16.mxu0 0
    %3821 = vmatmul.mubr.bf16.gmra.mxu0 %v2213
    %v3822 = vpop.f32.mrf.mxu0
    %v3823 = vadd.f32 %v3742, %v3822
    %v3824 = vpop.f32.mrf.mxu0
    %v3825 = vpop.f32.mrf.mxu0
    %v3826 = vadd.f32 %v3745, %v3825
    %v3827 = vpop.f32.mrf.mxu0
    %3828 = vmatprep.mubr.bf16.mxu0 0
    %3829 = vmatmul.mubr.bf16.gmra.mxu0 %v2215
    %v3830 = vpop.f32.mrf.mxu0
    %v3831 = vadd.f32 %v3750, %v3830
    %v3832 = vpop.f32.mrf.mxu0
    %v3833 = vpop.f32.mrf.mxu0
    %v3834 = vadd.f32 %v3753, %v3833
    %v3835 = vpop.f32.mrf.mxu0
    %3836 = vdwg.mxu0
    %v3837 = vlaneseq
    %v3838 = vshrl.u32 %v3837, 7
    %v3839 = vadd.s32 %v3838, 8
    %v3840 = vadd.s32 %v3838, 16
    %v3841 = vadd.s32 %v3838, 24
    %v3842 = vadd.s32 %v3838, 32
    %v3843 = vadd.s32 %v3838, 40
    %vm3844 = vcmp.lt.s32.totalorder %v3838, 41
    %vm3845 = vcmp.lt.s32.totalorder %v3839, 41
    %vm3846 = vcmp.lt.s32.totalorder %v3840, 41
    %vm3847 = vcmp.lt.s32.totalorder %v3841, 41
    %vm3848 = vcmp.lt.s32.totalorder %v3842, 41
    %vm3849 = vcmp.lt.s32.totalorder %v3843, 41
    %v3850 = vsel %vm3844, 1, 0
    %v3851 = vsel %vm3845, 1, 0
    %v3852 = vsel %vm3846, 1, 0
    %v3853 = vsel %vm3847, 1, 0
    %v3854 = vsel %vm3848, 1, 0
    %v3855 = vsel %vm3849, 1, 0
    %vm3856 = vcmp.eq.s32.totalorder %v3850, 1
    %vm3857 = vcmp.eq.s32.totalorder %v3851, 1
    %vm3858 = vcmp.eq.s32.totalorder %v3852, 1
    %vm3859 = vcmp.eq.s32.totalorder %v3853, 1
    %vm3860 = vcmp.eq.s32.totalorder %v3854, 1
    %vm3861 = vcmp.eq.s32.totalorder %v3855, 1
    %v3862 = vsel %vm3856, %v3791, 0.0
    %v3863 = vsel %vm3857, %v3794, 0.0
    %v3864 = vsel %vm3858, %v3799, 0.0
    %v3865 = vsel %vm3859, %v3802, 0.0
    %v3866 = vsel %vm3860, %v3807, 0.0
    %v3867 = vsel %vm3861, %v3810, 0.0
    %v3868 = vsel %vm3856, %v3815, 0.0
    %v3869 = vsel %vm3857, %v3818, 0.0
    %v3870 = vsel %vm3858, %v3823, 0.0
    %v3871 = vsel %vm3859, %v3826, 0.0
    %v3872 = vsel %vm3860, %v3831, 0.0
    %v3873 = vsel %vm3861, %v3834, 0.0
    %v3874 = vmul.f32 %v3862, %v3862
    %v3875 = vmul.f32 %v3863, %v3863
    %v3876 = vmul.f32 %v3864, %v3864
    %v3877 = vmul.f32 %v3865, %v3865
    %v3878 = vmul.f32 %v3866, %v3866
    %v3879 = vmul.f32 %v3867, %v3867
    %v3880 = vmul.f32 %v3868, %v3868
    %v3881 = vmul.f32 %v3869, %v3869
    %v3882 = vmul.f32 %v3870, %v3870
    %v3883 = vmul.f32 %v3871, %v3871
    %v3884 = vmul.f32 %v3872, %v3872
    %v3885 = vmul.f32 %v3873, %v3873
    %v3886 = vadd.f32 %v3874, %v3875
    %v3887 = vadd.f32 %v3886, %v3876
    %v3888 = vadd.f32 %v3887, %v3877
    %v3889 = vadd.f32 %v3888, %v3878
    %v3890 = vadd.f32 %v3889, %v3879
    %v3891 = vrot.slane %v3890, 4
    %v3892 = vadd.f32 %v3890, %v3891
    %v3893 = vrot.slane %v3892, 2
    %v3894 = vadd.f32 %v3892, %v3893
    %v3895 = vrot.slane %v3894, 1
    %v3896 = vadd.f32 %v3894, %v3895
    %v3897 = vadd.f32 %v3880, %v3881
    %v3898 = vadd.f32 %v3897, %v3882
    %v3899 = vadd.f32 %v3898, %v3883
    %v3900 = vadd.f32 %v3899, %v3884
    %v3901 = vadd.f32 %v3900, %v3885
    %v3902 = vrot.slane %v3901, 4
    %v3903 = vadd.f32 %v3901, %v3902
    %v3904 = vrot.slane %v3903, 2
    %v3905 = vadd.f32 %v3903, %v3904
    %v3906 = vrot.slane %v3905, 1
    %v3907 = vadd.f32 %v3905, %v3906
    %v3908 = vpack.c.bf16 %v3863, %v3862
    %v3909 = vpack.c.bf16 %v3865, %v3864
    %v3910 = vpack.c.bf16 %v3867, %v3866
    %v3911 = vpack.c.bf16 %v3869, %v3868
    %v3912 = vpack.c.bf16 %v3871, %v3870
    %v3913 = vpack.c.bf16 %v3873, %v3872
    %3914 = vxpose.xlu0.c.b16.start [1/8] %v3908, 128
    %3915 = vxpose.xlu0.c.b16.cont [2/8] %v3909, 128
    %3916 = vxpose.xlu0.c.b16.cont [3/8] %v3910, 128
    %3917 = vxpose.xlu0.c.b16.cont [4/8] 0, 128
    %3918 = vxpose.xlu0.c.b16.cont [5/8] 0, 128
    %3919 = vxpose.xlu0.c.b16.cont [6/8] 0, 128
    %3920 = vxpose.xlu0.c.b16.cont [7/8] 0, 128
    %3921 = vxpose.xlu0.c.b16.end [8/8] 0, 128
    %v3922 = vpop.trf.xlu0
    %v3923 = vpop.trf.xlu0
    %v3924 = vpop.trf.xlu0
    %v3925 = vpop.trf.xlu0
    %v3926 = vpop.trf.xlu0
    %v3927 = vpop.trf.xlu0
    %v3928 = vpop.trf.xlu0
    %v3929 = vpop.trf.xlu0
    %vm3930 = vcmask 392192
    %v3932 = vsel %vm3930, %v3922, 0
    %v3935 = vsel %vm3930, %v3923, 0
    %v3938 = vsel %vm3930, %v3924, 0
    %v3941 = vsel %vm3930, %v3925, 0
    %v3944 = vsel %vm3930, %v3926, 0
    %v3947 = vsel %vm3930, %v3927, 0
    %v3950 = vsel %vm3930, %v3928, 0
    %v3953 = vsel %vm3930, %v3929, 0
    %3955 = vmatprep.subr.bf16.mxu0 0
    %3956 = vmatpush1.bf16.msra.mxu0 0
    %3957 = vmatprep.subr.bf16.mxu0 0
    %3958 = vmatpush1.bf16.msra.mxu0 0
    %3959 = vmatprep.subr.bf16.mxu0 0
    %3960 = vmatpush1.bf16.msra.mxu0 0
    %3961 = vmatprep.subr.bf16.mxu0 0
    %3962 = vmatpush1.bf16.msra.mxu0 0
    %3963 = vmatprep.subr.bf16.mxu0 0
    %3964 = vmatpush1.bf16.msra.mxu0 0
    %3965 = vmatprep.subr.bf16.mxu0 0
    %3966 = vmatpush1.bf16.msra.mxu0 %v3910
    %3967 = vmatprep.subr.bf16.mxu0 0
    %3968 = vmatpush1.bf16.msra.mxu0 %v3909
    %3969 = vmatprep.subr.bf16.mxu0 0
    %3970 = vmatpush1.bf16.msra.mxu0 %v3908
    %3971 = vmatprep.subr.bf16.mxu0 0
    %3972 = vmatpush2.bf16.msra.mxu0 0
    %3973 = vmatprep.subr.bf16.mxu0 0
    %3974 = vmatpush2.bf16.msra.mxu0 0
    %3975 = vmatprep.subr.bf16.mxu0 0
    %3976 = vmatpush2.bf16.msra.mxu0 0
    %3977 = vmatprep.subr.bf16.mxu0 0
    %3978 = vmatpush2.bf16.msra.mxu0 0
    %3979 = vmatprep.subr.bf16.mxu0 0
    %3980 = vmatpush2.bf16.msra.mxu0 0
    %3981 = vmatprep.subr.bf16.mxu0 0
    %3982 = vmatpush2.bf16.msra.mxu0 0
    %3983 = vmatprep.subr.bf16.mxu0 0
    %3984 = vmatpush2.bf16.msra.mxu0 0
    %3985 = vmatprep.subr.bf16.mxu0 0
    %3986 = vmatpush2.bf16.msra.mxu0 0
    %3987 = vmatprep.mubr.bf16.mxu0 0
    %3988 = vmatmul.mubr.bf16.gmra.mxu0 %v3932
    %v3989 = vpop.f32.mrf.mxu0
    %v3990 = vadd.f32 0.0, %v3989
    %v3991 = vpop.f32.mrf.mxu0
    %v3992 = vpop.f32.mrf.mxu0
    %v3993 = vadd.f32 0.0, %v3992
    %v3994 = vpop.f32.mrf.mxu0
    %3995 = vmatprep.mubr.bf16.mxu0 0
    %3996 = vmatmul.mubr.bf16.gmra.mxu0 %v3935
    %v3997 = vpop.f32.mrf.mxu0
    %v3998 = vadd.f32 0.0, %v3997
    %v3999 = vpop.f32.mrf.mxu0
    %v4000 = vpop.f32.mrf.mxu0
    %v4001 = vadd.f32 0.0, %v4000
    %v4002 = vpop.f32.mrf.mxu0
    %4003 = vmatprep.mubr.bf16.mxu0 0
    %4004 = vmatmul.mubr.bf16.gmra.mxu0 %v3938
    %v4005 = vpop.f32.mrf.mxu0
    %v4006 = vadd.f32 0.0, %v4005
    %v4007 = vpop.f32.mrf.mxu0
    %v4008 = vpop.f32.mrf.mxu0
    %v4009 = vadd.f32 0.0, %v4008
    %v4010 = vpop.f32.mrf.mxu0
    %4011 = vmatprep.mubr.bf16.mxu0 0
    %4012 = vmatmul.mubr.bf16.gmra.mxu0 %v3941
    %v4013 = vpop.f32.mrf.mxu0
    %v4014 = vadd.f32 0.0, %v4013
    %v4015 = vpop.f32.mrf.mxu0
    %v4016 = vpop.f32.mrf.mxu0
    %v4017 = vadd.f32 0.0, %v4016
    %v4018 = vpop.f32.mrf.mxu0
    %4019 = vmatprep.mubr.bf16.mxu0 0
    %4020 = vmatmul.mubr.bf16.gmra.mxu0 %v3944
    %v4021 = vpop.f32.mrf.mxu0
    %v4022 = vadd.f32 0.0, %v4021
    %v4023 = vpop.f32.mrf.mxu0
    %v4024 = vpop.f32.mrf.mxu0
    %v4025 = vadd.f32 0.0, %v4024
    %v4026 = vpop.f32.mrf.mxu0
    %4027 = vmatprep.mubr.bf16.mxu0 0
    %4028 = vmatmul.mubr.bf16.gmra.mxu0 %v3947
    %v4029 = vpop.f32.mrf.mxu0
    %v4030 = vadd.f32 0.0, %v4029
    %v4031 = vpop.f32.mrf.mxu0
    %v4032 = vpop.f32.mrf.mxu0
    %v4033 = vadd.f32 0.0, %v4032
    %v4034 = vpop.f32.mrf.mxu0
    %4035 = vmatprep.mubr.bf16.mxu0 0
    %4036 = vmatmul.mubr.bf16.gmra.mxu0 %v3950
    %v4037 = vpop.f32.mrf.mxu0
    %v4038 = vadd.f32 0.0, %v4037
    %v4039 = vpop.f32.mrf.mxu0
    %v4040 = vpop.f32.mrf.mxu0
    %v4041 = vadd.f32 0.0, %v4040
    %v4042 = vpop.f32.mrf.mxu0
    %4043 = vmatprep.mubr.bf16.mxu0 0
    %4044 = vmatmul.mubr.bf16.gmra.mxu0 %v3953
    %v4045 = vpop.f32.mrf.mxu0
    %v4046 = vadd.f32 0.0, %v4045
    %v4047 = vpop.f32.mrf.mxu0
    %v4048 = vpop.f32.mrf.mxu0
    %v4049 = vadd.f32 0.0, %v4048
    %v4050 = vpop.f32.mrf.mxu0
    %4051 = vdwg.mxu0
    %4052 = vxpose.xlu0.c.b16.start [1/8] %v3911, 128
    %4053 = vxpose.xlu0.c.b16.cont [2/8] %v3912, 128
    %4054 = vxpose.xlu0.c.b16.cont [3/8] %v3913, 128
    %4055 = vxpose.xlu0.c.b16.cont [4/8] 0, 128
    %4056 = vxpose.xlu0.c.b16.cont [5/8] 0, 128
    %4057 = vxpose.xlu0.c.b16.cont [6/8] 0, 128
    %4058 = vxpose.xlu0.c.b16.cont [7/8] 0, 128
    %4059 = vxpose.xlu0.c.b16.end [8/8] 0, 128
    %v4060 = vpop.trf.xlu0
    %v4061 = vpop.trf.xlu0
    %v4062 = vpop.trf.xlu0
    %v4063 = vpop.trf.xlu0
    %v4064 = vpop.trf.xlu0
    %v4065 = vpop.trf.xlu0
    %v4066 = vpop.trf.xlu0
    %v4067 = vpop.trf.xlu0
    %v4069 = vsel %vm3930, %v4060, 0
    %v4072 = vsel %vm3930, %v4061, 0
    %v4075 = vsel %vm3930, %v4062, 0
    %v4078 = vsel %vm3930, %v4063, 0
    %v4081 = vsel %vm3930, %v4064, 0
    %v4084 = vsel %vm3930, %v4065, 0
    %v4087 = vsel %vm3930, %v4066, 0
    %v4090 = vsel %vm3930, %v4067, 0
    %4092 = vmatprep.subr.bf16.mxu0 0
    %4093 = vmatpush1.bf16.msra.mxu0 0
    %4094 = vmatprep.subr.bf16.mxu0 0
    %4095 = vmatpush1.bf16.msra.mxu0 0
    %4096 = vmatprep.subr.bf16.mxu0 0
    %4097 = vmatpush1.bf16.msra.mxu0 0
    %4098 = vmatprep.subr.bf16.mxu0 0
    %4099 = vmatpush1.bf16.msra.mxu0 0
    %4100 = vmatprep.subr.bf16.mxu0 0
    %4101 = vmatpush1.bf16.msra.mxu0 0
    %4102 = vmatprep.subr.bf16.mxu0 0
    %4103 = vmatpush1.bf16.msra.mxu0 %v3913
    %4104 = vmatprep.subr.bf16.mxu0 0
    %4105 = vmatpush1.bf16.msra.mxu0 %v3912
    %4106 = vmatprep.subr.bf16.mxu0 0
    %4107 = vmatpush1.bf16.msra.mxu0 %v3911
    %4108 = vmatprep.subr.bf16.mxu0 0
    %4109 = vmatpush2.bf16.msra.mxu0 0
    %4110 = vmatprep.subr.bf16.mxu0 0
    %4111 = vmatpush2.bf16.msra.mxu0 0
    %4112 = vmatprep.subr.bf16.mxu0 0
    %4113 = vmatpush2.bf16.msra.mxu0 0
    %4114 = vmatprep.subr.bf16.mxu0 0
    %4115 = vmatpush2.bf16.msra.mxu0 0
    %4116 = vmatprep.subr.bf16.mxu0 0
    %4117 = vmatpush2.bf16.msra.mxu0 0
    %4118 = vmatprep.subr.bf16.mxu0 0
    %4119 = vmatpush2.bf16.msra.mxu0 0
    %4120 = vmatprep.subr.bf16.mxu0 0
    %4121 = vmatpush2.bf16.msra.mxu0 0
    %4122 = vmatprep.subr.bf16.mxu0 0
    %4123 = vmatpush2.bf16.msra.mxu0 0
    %4124 = vmatprep.mubr.bf16.mxu0 0
    %4125 = vmatmul.mubr.bf16.gmra.mxu0 %v4069
    %v4126 = vpop.f32.mrf.mxu0
    %v4127 = vadd.f32 0.0, %v4126
    %v4128 = vpop.f32.mrf.mxu0
    %v4129 = vpop.f32.mrf.mxu0
    %v4130 = vadd.f32 0.0, %v4129
    %v4131 = vpop.f32.mrf.mxu0
    %4132 = vmatprep.mubr.bf16.mxu0 0
    %4133 = vmatmul.mubr.bf16.gmra.mxu0 %v4072
    %v4134 = vpop.f32.mrf.mxu0
    %v4135 = vadd.f32 0.0, %v4134
    %v4136 = vpop.f32.mrf.mxu0
    %v4137 = vpop.f32.mrf.mxu0
    %v4138 = vadd.f32 0.0, %v4137
    %v4139 = vpop.f32.mrf.mxu0
    %4140 = vmatprep.mubr.bf16.mxu0 0
    %4141 = vmatmul.mubr.bf16.gmra.mxu0 %v4075
    %v4142 = vpop.f32.mrf.mxu0
    %v4143 = vadd.f32 0.0, %v4142
    %v4144 = vpop.f32.mrf.mxu0
    %v4145 = vpop.f32.mrf.mxu0
    %v4146 = vadd.f32 0.0, %v4145
    %v4147 = vpop.f32.mrf.mxu0
    %4148 = vmatprep.mubr.bf16.mxu0 0
    %4149 = vmatmul.mubr.bf16.gmra.mxu0 %v4078
    %v4150 = vpop.f32.mrf.mxu0
    %v4151 = vadd.f32 0.0, %v4150
    %v4152 = vpop.f32.mrf.mxu0
    %v4153 = vpop.f32.mrf.mxu0
    %v4154 = vadd.f32 0.0, %v4153
    %v4155 = vpop.f32.mrf.mxu0
    %4156 = vmatprep.mubr.bf16.mxu0 0
    %4157 = vmatmul.mubr.bf16.gmra.mxu0 %v4081
    %v4158 = vpop.f32.mrf.mxu0
    %v4159 = vadd.f32 0.0, %v4158
    %v4160 = vpop.f32.mrf.mxu0
    %v4161 = vpop.f32.mrf.mxu0
    %v4162 = vadd.f32 0.0, %v4161
    %v4163 = vpop.f32.mrf.mxu0
    %4164 = vmatprep.mubr.bf16.mxu0 0
    %4165 = vmatmul.mubr.bf16.gmra.mxu0 %v4084
    %v4166 = vpop.f32.mrf.mxu0
    %v4167 = vadd.f32 0.0, %v4166
    %v4168 = vpop.f32.mrf.mxu0
    %v4169 = vpop.f32.mrf.mxu0
    %v4170 = vadd.f32 0.0, %v4169
    %v4171 = vpop.f32.mrf.mxu0
    %4172 = vmatprep.mubr.bf16.mxu0 0
    %4173 = vmatmul.mubr.bf16.gmra.mxu0 %v4087
    %v4174 = vpop.f32.mrf.mxu0
    %v4175 = vadd.f32 0.0, %v4174
    %v4176 = vpop.f32.mrf.mxu0
    %v4177 = vpop.f32.mrf.mxu0
    %v4178 = vadd.f32 0.0, %v4177
    %v4179 = vpop.f32.mrf.mxu0
    %4180 = vmatprep.mubr.bf16.mxu0 0
    %4181 = vmatmul.mubr.bf16.gmra.mxu0 %v4090
    %v4182 = vpop.f32.mrf.mxu0
    %v4183 = vadd.f32 0.0, %v4182
    %v4184 = vpop.f32.mrf.mxu0
    %v4185 = vpop.f32.mrf.mxu0
    %v4186 = vadd.f32 0.0, %v4185
    %v4187 = vpop.f32.mrf.mxu0
    %4188 = vdwg.mxu0
    %vm4189 = vcmp.gt.f32.partialorder %v3896, 0.0
    %vm4190 = vcmp.gt.f32.partialorder %v3907, 0.0
    %v4191 = vrsqrt.pop %v3896
    %v4192 = vrsqrt.pop %v3907
    %v4193 = vsel %vm4189, %v4191, 0.0
    %v4194 = vsel %vm4190, %v4192, 0.0
    %4196 = vbcast.lane.b32.xlu0 %v4193, 256
    %v4197 = vpop.permute.xlu0 %4196
    %s4199 = sor.u32 256, 8
    %4200 = vbcast.lane.b32.xlu0 %v4193, %s4199
    %v4201 = vpop.permute.xlu0 %4200
    %s4203 = sor.u32 256, 16
    %4204 = vbcast.lane.b32.xlu0 %v4193, %s4203
    %v4205 = vpop.permute.xlu0 %4204
    %s4207 = sor.u32 256, 24
    %4208 = vbcast.lane.b32.xlu0 %v4193, %s4207
    %v4209 = vpop.permute.xlu0 %4208
    %s4211 = sor.u32 256, 32
    %4212 = vbcast.lane.b32.xlu0 %v4193, %s4211
    %v4213 = vpop.permute.xlu0 %4212
    %s4215 = sor.u32 256, 40
    %4216 = vbcast.lane.b32.xlu0 %v4193, %s4215
    %v4217 = vpop.permute.xlu0 %4216
    %s4219 = sor.u32 256, 48
    %4220 = vbcast.lane.b32.xlu0 %v4193, %s4219
    %v4221 = vpop.permute.xlu0 %4220
    %s4223 = sor.u32 256, 56
    %4224 = vbcast.lane.b32.xlu0 %v4193, %s4223
    %v4225 = vpop.permute.xlu0 %4224
    %s4227 = sor.u32 256, 64
    %4228 = vbcast.lane.b32.xlu0 %v4193, %s4227
    %v4229 = vpop.permute.xlu0 %4228
    %s4231 = sor.u32 256, 72
    %4232 = vbcast.lane.b32.xlu0 %v4193, %s4231
    %v4233 = vpop.permute.xlu0 %4232
    %s4235 = sor.u32 256, 80
    %4236 = vbcast.lane.b32.xlu0 %v4193, %s4235
    %v4237 = vpop.permute.xlu0 %4236
    %s4239 = sor.u32 256, 88
    %4240 = vbcast.lane.b32.xlu0 %v4193, %s4239
    %v4241 = vpop.permute.xlu0 %4240
    %s4243 = sor.u32 256, 96
    %4244 = vbcast.lane.b32.xlu0 %v4193, %s4243
    %v4245 = vpop.permute.xlu0 %4244
    %s4247 = sor.u32 256, 104
    %4248 = vbcast.lane.b32.xlu0 %v4193, %s4247
    %v4249 = vpop.permute.xlu0 %4248
    %s4251 = sor.u32 256, 112
    %4252 = vbcast.lane.b32.xlu0 %v4193, %s4251
    %v4253 = vpop.permute.xlu0 %4252
    %s4255 = sor.u32 256, 120
    %4256 = vbcast.lane.b32.xlu0 %v4193, %s4255
    %v4257 = vpop.permute.xlu0 %4256
    %4259 = vbcast.lane.b32.xlu0 %v4194, 256
    %v4260 = vpop.permute.xlu0 %4259
    %s4262 = sor.u32 256, 8
    %4263 = vbcast.lane.b32.xlu0 %v4194, %s4262
    %v4264 = vpop.permute.xlu0 %4263
    %s4266 = sor.u32 256, 16
    %4267 = vbcast.lane.b32.xlu0 %v4194, %s4266
    %v4268 = vpop.permute.xlu0 %4267
    %s4270 = sor.u32 256, 24
    %4271 = vbcast.lane.b32.xlu0 %v4194, %s4270
    %v4272 = vpop.permute.xlu0 %4271
    %s4274 = sor.u32 256, 32
    %4275 = vbcast.lane.b32.xlu0 %v4194, %s4274
    %v4276 = vpop.permute.xlu0 %4275
    %s4278 = sor.u32 256, 40
    %4279 = vbcast.lane.b32.xlu0 %v4194, %s4278
    %v4280 = vpop.permute.xlu0 %4279
    %s4282 = sor.u32 256, 48
    %4283 = vbcast.lane.b32.xlu0 %v4194, %s4282
    %v4284 = vpop.permute.xlu0 %4283
    %s4286 = sor.u32 256, 56
    %4287 = vbcast.lane.b32.xlu0 %v4194, %s4286
    %v4288 = vpop.permute.xlu0 %4287
    %s4290 = sor.u32 256, 64
    %4291 = vbcast.lane.b32.xlu0 %v4194, %s4290
    %v4292 = vpop.permute.xlu0 %4291
    %s4294 = sor.u32 256, 72
    %4295 = vbcast.lane.b32.xlu0 %v4194, %s4294
    %v4296 = vpop.permute.xlu0 %4295
    %s4298 = sor.u32 256, 80
    %4299 = vbcast.lane.b32.xlu0 %v4194, %s4298
    %v4300 = vpop.permute.xlu0 %4299
    %s4302 = sor.u32 256, 88
    %4303 = vbcast.lane.b32.xlu0 %v4194, %s4302
    %v4304 = vpop.permute.xlu0 %4303
    %s4306 = sor.u32 256, 96
    %4307 = vbcast.lane.b32.xlu0 %v4194, %s4306
    %v4308 = vpop.permute.xlu0 %4307
    %s4310 = sor.u32 256, 104
    %4311 = vbcast.lane.b32.xlu0 %v4194, %s4310
    %v4312 = vpop.permute.xlu0 %4311
    %s4314 = sor.u32 256, 112
    %4315 = vbcast.lane.b32.xlu0 %v4194, %s4314
    %v4316 = vpop.permute.xlu0 %4315
    %s4318 = sor.u32 256, 120
    %4319 = vbcast.lane.b32.xlu0 %v4194, %s4318
    %v4320 = vpop.permute.xlu0 %4319
    %v4321 = vmul.f32 %v3990, %v4197
    %v4322 = vmul.f32 %v3993, %v4201
    %v4323 = vmul.f32 %v3998, %v4205
    %v4324 = vmul.f32 %v4001, %v4209
    %v4325 = vmul.f32 %v4006, %v4213
    %v4326 = vmul.f32 %v4009, %v4217
    %v4327 = vmul.f32 %v4014, %v4221
    %v4328 = vmul.f32 %v4017, %v4225
    %v4329 = vmul.f32 %v4022, %v4229
    %v4330 = vmul.f32 %v4025, %v4233
    %v4331 = vmul.f32 %v4030, %v4237
    %v4332 = vmul.f32 %v4033, %v4241
    %v4333 = vmul.f32 %v4038, %v4245
    %v4334 = vmul.f32 %v4041, %v4249
    %v4335 = vmul.f32 %v4046, %v4253
    %v4336 = vmul.f32 %v4049, %v4257
    %v4337 = vmul.f32 %v4127, %v4260
    %v4338 = vmul.f32 %v4130, %v4264
    %v4339 = vmul.f32 %v4135, %v4268
    %v4340 = vmul.f32 %v4138, %v4272
    %v4341 = vmul.f32 %v4143, %v4276
    %v4342 = vmul.f32 %v4146, %v4280
    %v4343 = vmul.f32 %v4151, %v4284
    %v4344 = vmul.f32 %v4154, %v4288
    %v4345 = vmul.f32 %v4159, %v4292
    %v4346 = vmul.f32 %v4162, %v4296
    %v4347 = vmul.f32 %v4167, %v4300
    %v4348 = vmul.f32 %v4170, %v4304
    %v4349 = vmul.f32 %v4175, %v4308
    %v4350 = vmul.f32 %v4178, %v4312
    %v4351 = vmul.f32 %v4183, %v4316
    %v4352 = vmul.f32 %v4186, %v4320
    %v4353 = vmul.f32 %v4321, %v4193
    %v4354 = vmul.f32 %v4322, %v4193
    %v4355 = vmul.f32 %v4323, %v4193
    %v4356 = vmul.f32 %v4324, %v4193
    %v4357 = vmul.f32 %v4325, %v4193
    %v4358 = vmul.f32 %v4326, %v4193
    %v4359 = vmul.f32 %v4327, %v4193
    %v4360 = vmul.f32 %v4328, %v4193
    %v4361 = vmul.f32 %v4329, %v4193
    %v4362 = vmul.f32 %v4330, %v4193
    %v4363 = vmul.f32 %v4331, %v4193
    %v4364 = vmul.f32 %v4332, %v4193
    %v4365 = vmul.f32 %v4333, %v4193
    %v4366 = vmul.f32 %v4334, %v4193
    %v4367 = vmul.f32 %v4335, %v4193
    %v4368 = vmul.f32 %v4336, %v4193
    %v4369 = vmul.f32 %v4337, %v4194
    %v4370 = vmul.f32 %v4338, %v4194
    %v4371 = vmul.f32 %v4339, %v4194
    %v4372 = vmul.f32 %v4340, %v4194
    %v4373 = vmul.f32 %v4341, %v4194
    %v4374 = vmul.f32 %v4342, %v4194
    %v4375 = vmul.f32 %v4343, %v4194
    %v4376 = vmul.f32 %v4344, %v4194
    %v4377 = vmul.f32 %v4345, %v4194
    %v4378 = vmul.f32 %v4346, %v4194
    %v4379 = vmul.f32 %v4347, %v4194
    %v4380 = vmul.f32 %v4348, %v4194
    %v4381 = vmul.f32 %v4349, %v4194
    %v4382 = vmul.f32 %v4350, %v4194
    %v4383 = vmul.f32 %v4351, %v4194
    %v4384 = vmul.f32 %v4352, %v4194
    %v4385 = vld [vmem:[%s7] sm:$0xff]
    %v4386 = vld [vmem:[%s7 + $0x8] sm:$0xff]
    %v4387 = vld [vmem:[%s7 + $0x10] sm:$0xff]
    %v4388 = vld [vmem:[%s7 + $0x18] sm:$0xff]
    %v4389 = vld [vmem:[%s7 + $0x20] sm:$0xff]
    %v4390 = vld [vmem:[%s7 + $0x28] sm:$0xff]
    %v4391 = vld [vmem:[%s7 + $0x30] sm:$0xff]
    %v4392 = vld [vmem:[%s7 + $0x38] sm:$0xff]
    %v4393 = vld [vmem:[%s7 + $0x40] sm:$0xff]
    %v4394 = vld [vmem:[%s7 + $0x48] sm:$0xff]
    %v4395 = vld [vmem:[%s7 + $0x50] sm:$0xff]
    %v4396 = vld [vmem:[%s7 + $0x58] sm:$0xff]
    %v4397 = vld [vmem:[%s7 + $0x60] sm:$0xff]
    %v4398 = vld [vmem:[%s7 + $0x68] sm:$0xff]
    %v4399 = vld [vmem:[%s7 + $0x70] sm:$0xff]
    %v4400 = vld [vmem:[%s7 + $0x78] sm:$0xff]
    %4401 = vadd.xlane.f32.xlu0 %v4385
    %v4402 = vpop.xlane.xlu0 %4401
    %4403 = vadd.xlane.f32.xlu0 %v4386
    %v4404 = vpop.xlane.xlu0 %4403
    %4405 = vadd.xlane.f32.xlu0 %v4387
    %v4406 = vpop.xlane.xlu0 %4405
    %4407 = vadd.xlane.f32.xlu0 %v4388
    %v4408 = vpop.xlane.xlu0 %4407
    %4409 = vadd.xlane.f32.xlu0 %v4389
    %v4410 = vpop.xlane.xlu0 %4409
    %4411 = vadd.xlane.f32.xlu0 %v4390
    %v4412 = vpop.xlane.xlu0 %4411
    %4413 = vadd.xlane.f32.xlu0 %v4391
    %v4414 = vpop.xlane.xlu0 %4413
    %4415 = vadd.xlane.f32.xlu0 %v4392
    %v4416 = vpop.xlane.xlu0 %4415
    %4417 = vadd.xlane.f32.xlu0 %v4393
    %v4418 = vpop.xlane.xlu0 %4417
    %4419 = vadd.xlane.f32.xlu0 %v4394
    %v4420 = vpop.xlane.xlu0 %4419
    %4421 = vadd.xlane.f32.xlu0 %v4395
    %v4422 = vpop.xlane.xlu0 %4421
    %4423 = vadd.xlane.f32.xlu0 %v4396
    %v4424 = vpop.xlane.xlu0 %4423
    %4425 = vadd.xlane.f32.xlu0 %v4397
    %v4426 = vpop.xlane.xlu0 %4425
    %4427 = vadd.xlane.f32.xlu0 %v4398
    %v4428 = vpop.xlane.xlu0 %4427
    %4429 = vadd.xlane.f32.xlu0 %v4399
    %v4430 = vpop.xlane.xlu0 %4429
    %4431 = vadd.xlane.f32.xlu0 %v4400
    %v4432 = vpop.xlane.xlu0 %4431
    %v4433 = vrsqrt.pop %v4402
    %v4434 = vrsqrt.pop %v4404
    %v4435 = vrsqrt.pop %v4406
    %v4436 = vrsqrt.pop %v4408
    %v4437 = vrsqrt.pop %v4410
    %v4438 = vrsqrt.pop %v4412
    %v4439 = vrsqrt.pop %v4414
    %v4440 = vrsqrt.pop %v4416
    %v4441 = vrsqrt.pop %v4418
    %v4442 = vrsqrt.pop %v4420
    %v4443 = vrsqrt.pop %v4422
    %v4444 = vrsqrt.pop %v4424
    %v4445 = vrsqrt.pop %v4426
    %v4446 = vrsqrt.pop %v4428
    %v4447 = vrsqrt.pop %v4430
    %v4448 = vrsqrt.pop %v4432
    %v4449 = vand.u32 2147483647, %v4433
    %v4450 = vand.u32 2147483647, %v4434
    %v4451 = vand.u32 2147483647, %v4435
    %v4452 = vand.u32 2147483647, %v4436
    %v4453 = vand.u32 2147483647, %v4437
    %v4454 = vand.u32 2147483647, %v4438
    %v4455 = vand.u32 2147483647, %v4439
    %v4456 = vand.u32 2147483647, %v4440
    %v4457 = vand.u32 2147483647, %v4441
    %v4458 = vand.u32 2147483647, %v4442
    %v4459 = vand.u32 2147483647, %v4443
    %v4460 = vand.u32 2147483647, %v4444
    %v4461 = vand.u32 2147483647, %v4445
    %v4462 = vand.u32 2147483647, %v4446
    %v4463 = vand.u32 2147483647, %v4447
    %v4464 = vand.u32 2147483647, %v4448
    %vm4465 = vcmp.eq.f32.partialorder %v4449, inf
    %vm4466 = vcmp.eq.f32.partialorder %v4450, inf
    %vm4467 = vcmp.eq.f32.partialorder %v4451, inf
    %vm4468 = vcmp.eq.f32.partialorder %v4452, inf
    %vm4469 = vcmp.eq.f32.partialorder %v4453, inf
    %vm4470 = vcmp.eq.f32.partialorder %v4454, inf
    %vm4471 = vcmp.eq.f32.partialorder %v4455, inf
    %vm4472 = vcmp.eq.f32.partialorder %v4456, inf
    %vm4473 = vcmp.eq.f32.partialorder %v4457, inf
    %vm4474 = vcmp.eq.f32.partialorder %v4458, inf
    %vm4475 = vcmp.eq.f32.partialorder %v4459, inf
    %vm4476 = vcmp.eq.f32.partialorder %v4460, inf
    %vm4477 = vcmp.eq.f32.partialorder %v4461, inf
    %vm4478 = vcmp.eq.f32.partialorder %v4462, inf
    %vm4479 = vcmp.eq.f32.partialorder %v4463, inf
    %vm4480 = vcmp.eq.f32.partialorder %v4464, inf
    %v4481 = vsel %vm4465, 0.0, %v4433
    %v4482 = vsel %vm4466, 0.0, %v4434
    %v4483 = vsel %vm4467, 0.0, %v4435
    %v4484 = vsel %vm4468, 0.0, %v4436
    %v4485 = vsel %vm4469, 0.0, %v4437
    %v4486 = vsel %vm4470, 0.0, %v4438
    %v4487 = vsel %vm4471, 0.0, %v4439
    %v4488 = vsel %vm4472, 0.0, %v4440
    %v4489 = vsel %vm4473, 0.0, %v4441
    %v4490 = vsel %vm4474, 0.0, %v4442
    %v4491 = vsel %vm4475, 0.0, %v4443
    %v4492 = vsel %vm4476, 0.0, %v4444
    %v4493 = vsel %vm4477, 0.0, %v4445
    %v4494 = vsel %vm4478, 0.0, %v4446
    %v4495 = vsel %vm4479, 0.0, %v4447
    %v4496 = vsel %vm4480, 0.0, %v4448
    %v4497 = vmul.f32 %v4481, %v4385
    %v4498 = vmul.f32 %v4482, %v4386
    %v4499 = vmul.f32 %v4483, %v4387
    %v4500 = vmul.f32 %v4484, %v4388
    %v4501 = vmul.f32 %v4485, %v4389
    %v4502 = vmul.f32 %v4486, %v4390
    %v4503 = vmul.f32 %v4487, %v4391
    %v4504 = vmul.f32 %v4488, %v4392
    %v4505 = vmul.f32 %v4489, %v4393
    %v4506 = vmul.f32 %v4490, %v4394
    %v4507 = vmul.f32 %v4491, %v4395
    %v4508 = vmul.f32 %v4492, %v4396
    %v4509 = vmul.f32 %v4493, %v4397
    %v4510 = vmul.f32 %v4494, %v4398
    %v4511 = vmul.f32 %v4495, %v4399
    %v4512 = vmul.f32 %v4496, %v4400
    %4513 = vxpose.xlu0.b32.start [1/16] %v4481, 128
    %4514 = vxpose.xlu0.b32.cont [2/16] %v4482, 128
    %4515 = vxpose.xlu0.b32.cont [3/16] %v4483, 128
    %4516 = vxpose.xlu0.b32.cont [4/16] %v4484, 128
    %4517 = vxpose.xlu0.b32.cont [5/16] %v4485, 128
    %4518 = vxpose.xlu0.b32.cont [6/16] %v4486, 128
    %4519 = vxpose.xlu0.b32.cont [7/16] %v4487, 128
    %4520 = vxpose.xlu0.b32.cont [8/16] %v4488, 128
    %4521 = vxpose.xlu0.b32.cont [9/16] %v4489, 128
    %4522 = vxpose.xlu0.b32.cont [10/16] %v4490, 128
    %4523 = vxpose.xlu0.b32.cont [11/16] %v4491, 128
    %4524 = vxpose.xlu0.b32.cont [12/16] %v4492, 128
    %4525 = vxpose.xlu0.b32.cont [13/16] %v4493, 128
    %4526 = vxpose.xlu0.b32.cont [14/16] %v4494, 128
    %4527 = vxpose.xlu0.b32.cont [15/16] %v4495, 128
    %4528 = vxpose.xlu0.b32.end [16/16] %v4496, 128
    %v4529 = vpop.trf.xlu0
    %v4530 = vpop.trf.xlu0
    %v4531 = vpop.trf.xlu0
    %v4532 = vpop.trf.xlu0
    %v4533 = vpop.trf.xlu0
    %v4534 = vpop.trf.xlu0
    %v4535 = vpop.trf.xlu0
    %v4536 = vpop.trf.xlu0
    %v4537 = vpop.trf.xlu0
    %v4538 = vpop.trf.xlu0
    %v4539 = vpop.trf.xlu0
    %v4540 = vpop.trf.xlu0
    %v4541 = vpop.trf.xlu0
    %v4542 = vpop.trf.xlu0
    %v4543 = vpop.trf.xlu0
    %v4544 = vpop.trf.xlu0
    %v4545 = vlaneseq
    %v4546 = vshrl.u32 %v4545, 7
    %v4547 = vsub.s32 0, %v4546
    %v4548 = vrot.slane %v4529, %v4547
    %v4549 = vmul.f32 %v4497, %v4548
    %v4550 = vmul.f32 %v4498, %v4548
    %v4551 = vmul.f32 %v4499, %v4548
    %v4552 = vmul.f32 %v4500, %v4548
    %v4553 = vmul.f32 %v4501, %v4548
    %v4554 = vmul.f32 %v4502, %v4548
    %v4555 = vmul.f32 %v4503, %v4548
    %v4556 = vmul.f32 %v4504, %v4548
    %v4557 = vmul.f32 %v4505, %v4548
    %v4558 = vmul.f32 %v4506, %v4548
    %v4559 = vmul.f32 %v4507, %v4548
    %v4560 = vmul.f32 %v4508, %v4548
    %v4561 = vmul.f32 %v4509, %v4548
    %v4562 = vmul.f32 %v4510, %v4548
    %v4563 = vmul.f32 %v4511, %v4548
    %v4564 = vmul.f32 %v4512, %v4548
    %v4565 = vadd.s32 %v3838, 48
    %v4566 = vadd.s32 %v3838, 56
    %v4567 = vadd.s32 %v3838, 64
    %v4568 = vadd.s32 %v3838, 72
    %v4569 = vadd.s32 %v3838, 80
    %v4570 = vadd.s32 %v3838, 88
    %v4571 = vadd.s32 %v3838, 96
    %v4572 = vadd.s32 %v3838, 104
    %v4573 = vadd.s32 %v3838, 112
    %v4574 = vadd.s32 %v3838, 120
    %vm4575 = vcmp.lt.s32.totalorder %v3838, 116
    %vm4576 = vcmp.lt.s32.totalorder %v3839, 116
    %vm4577 = vcmp.lt.s32.totalorder %v3840, 116
    %vm4578 = vcmp.lt.s32.totalorder %v3841, 116
    %vm4579 = vcmp.lt.s32.totalorder %v3842, 116
    %vm4580 = vcmp.lt.s32.totalorder %v3843, 116
    %vm4581 = vcmp.lt.s32.totalorder %v4565, 116
    %vm4582 = vcmp.lt.s32.totalorder %v4566, 116
    %vm4583 = vcmp.lt.s32.totalorder %v4567, 116
    %vm4584 = vcmp.lt.s32.totalorder %v4568, 116
    %vm4585 = vcmp.lt.s32.totalorder %v4569, 116
    %vm4586 = vcmp.lt.s32.totalorder %v4570, 116
    %vm4587 = vcmp.lt.s32.totalorder %v4571, 116
    %vm4588 = vcmp.lt.s32.totalorder %v4572, 116
    %vm4589 = vcmp.lt.s32.totalorder %v4573, 116
    %vm4590 = vcmp.lt.s32.totalorder %v4574, 116
    %v4591 = vsel %vm4575, 1, 0
    %v4592 = vsel %vm4576, 1, 0
    %v4593 = vsel %vm4577, 1, 0
    %v4594 = vsel %vm4578, 1, 0
    %v4595 = vsel %vm4579, 1, 0
    %v4596 = vsel %vm4580, 1, 0
    %v4597 = vsel %vm4581, 1, 0
    %v4598 = vsel %vm4582, 1, 0
    %v4599 = vsel %vm4583, 1, 0
    %v4600 = vsel %vm4584, 1, 0
    %v4601 = vsel %vm4585, 1, 0
    %v4602 = vsel %vm4586, 1, 0
    %v4603 = vsel %vm4587, 1, 0
    %v4604 = vsel %vm4588, 1, 0
    %v4605 = vsel %vm4589, 1, 0
    %v4606 = vsel %vm4590, 1, 0
    %v4607 = vcvt.s32.f32 %v4591
    %v4608 = vcvt.s32.f32 %v4592
    %v4609 = vcvt.s32.f32 %v4593
    %v4610 = vcvt.s32.f32 %v4594
    %v4611 = vcvt.s32.f32 %v4595
    %v4612 = vcvt.s32.f32 %v4596
    %v4613 = vcvt.s32.f32 %v4597
    %v4614 = vcvt.s32.f32 %v4598
    %v4615 = vcvt.s32.f32 %v4599
    %v4616 = vcvt.s32.f32 %v4600
    %v4617 = vcvt.s32.f32 %v4601
    %v4618 = vcvt.s32.f32 %v4602
    %v4619 = vcvt.s32.f32 %v4603
    %v4620 = vcvt.s32.f32 %v4604
    %v4621 = vcvt.s32.f32 %v4605
    %v4622 = vcvt.s32.f32 %v4606
    %v4623 = vadd.f32 %v4549, %v4550
    %v4624 = vadd.f32 %v4623, %v4551
    %v4625 = vadd.f32 %v4624, %v4552
    %v4626 = vadd.f32 %v4625, %v4553
    %v4627 = vadd.f32 %v4626, %v4554
    %v4628 = vadd.f32 %v4627, %v4555
    %v4629 = vadd.f32 %v4628, %v4556
    %v4630 = vadd.f32 %v4629, %v4557
    %v4631 = vadd.f32 %v4630, %v4558
    %v4632 = vadd.f32 %v4631, %v4559
    %v4633 = vadd.f32 %v4632, %v4560
    %v4634 = vadd.f32 %v4633, %v4561
    %v4635 = vadd.f32 %v4634, %v4562
    %v4636 = vadd.f32 %v4635, %v4563
    %v4637 = vadd.f32 %v4636, %v4564
    %v4638 = vrot.slane %v4637, 4
    %v4639 = vadd.f32 %v4637, %v4638
    %v4640 = vrot.slane %v4639, 2
    %v4641 = vadd.f32 %v4639, %v4640
    %v4642 = vrot.slane %v4641, 1
    %v4643 = vadd.f32 %v4641, %v4642
    %v4644 = vmul.f32 %v4643, 0.00862069
    %v4645 = vsub.f32 %v4549, %v4644
    %v4646 = vsub.f32 %v4550, %v4644
    %v4647 = vsub.f32 %v4551, %v4644
    %v4648 = vsub.f32 %v4552, %v4644
    %v4649 = vsub.f32 %v4553, %v4644
    %v4650 = vsub.f32 %v4554, %v4644
    %v4651 = vsub.f32 %v4555, %v4644
    %v4652 = vsub.f32 %v4556, %v4644
    %v4653 = vsub.f32 %v4557, %v4644
    %v4654 = vsub.f32 %v4558, %v4644
    %v4655 = vsub.f32 %v4559, %v4644
    %v4656 = vsub.f32 %v4560, %v4644
    %v4657 = vsub.f32 %v4561, %v4644
    %v4658 = vsub.f32 %v4562, %v4644
    %v4659 = vsub.f32 %v4563, %v4644
    %v4660 = vsub.f32 %v4564, %v4644
    %v4661 = vmul.f32 %v4645, %v4645
    %v4662 = vmul.f32 %v4646, %v4646
    %v4663 = vmul.f32 %v4647, %v4647
    %v4664 = vmul.f32 %v4648, %v4648
    %v4665 = vmul.f32 %v4649, %v4649
    %v4666 = vmul.f32 %v4650, %v4650
    %v4667 = vmul.f32 %v4651, %v4651
    %v4668 = vmul.f32 %v4652, %v4652
    %v4669 = vmul.f32 %v4653, %v4653
    %v4670 = vmul.f32 %v4654, %v4654
    %v4671 = vmul.f32 %v4655, %v4655
    %v4672 = vmul.f32 %v4656, %v4656
    %v4673 = vmul.f32 %v4657, %v4657
    %v4674 = vmul.f32 %v4658, %v4658
    %v4675 = vmul.f32 %v4659, %v4659
    %v4676 = vmul.f32 %v4660, %v4660
    %v4677 = vmul.f32 %v4661, %v4607
    %v4678 = vmul.f32 %v4662, %v4608
    %v4679 = vmul.f32 %v4663, %v4609
    %v4680 = vmul.f32 %v4664, %v4610
    %v4681 = vmul.f32 %v4665, %v4611
    %v4682 = vmul.f32 %v4666, %v4612
    %v4683 = vmul.f32 %v4667, %v4613
    %v4684 = vmul.f32 %v4668, %v4614
    %v4685 = vmul.f32 %v4669, %v4615
    %v4686 = vmul.f32 %v4670, %v4616
    %v4687 = vmul.f32 %v4671, %v4617
    %v4688 = vmul.f32 %v4672, %v4618
    %v4689 = vmul.f32 %v4673, %v4619
    %v4690 = vmul.f32 %v4674, %v4620
    %v4691 = vmul.f32 %v4675, %v4621
    %v4692 = vmul.f32 %v4676, %v4622
    %v4693 = vadd.f32 %v4677, %v4678
    %v4694 = vadd.f32 %v4693, %v4679
    %v4695 = vadd.f32 %v4694, %v4680
    %v4696 = vadd.f32 %v4695, %v4681
    %v4697 = vadd.f32 %v4696, %v4682
    %v4698 = vadd.f32 %v4697, %v4683
    %v4699 = vadd.f32 %v4698, %v4684
    %v4700 = vadd.f32 %v4699, %v4685
    %v4701 = vadd.f32 %v4700, %v4686
    %v4702 = vadd.f32 %v4701, %v4687
    %v4703 = vadd.f32 %v4702, %v4688
    %v4704 = vadd.f32 %v4703, %v4689
    %v4705 = vadd.f32 %v4704, %v4690
    %v4706 = vadd.f32 %v4705, %v4691
    %v4707 = vadd.f32 %v4706, %v4692
    %v4708 = vrot.slane %v4707, 4
    %v4709 = vadd.f32 %v4707, %v4708
    %v4710 = vrot.slane %v4709, 2
    %v4711 = vadd.f32 %v4709, %v4710
    %v4712 = vrot.slane %v4711, 1
    %v4713 = vadd.f32 %v4711, %v4712
    %v4714 = vmul.f32 %v4713, 0.00862069
    %v4715 = vadd.f32 %v4714, 1e-05
    %v4716 = vrsqrt.pop %v4715
    %v4717 = vmul.f32 %v4645, %v4716
    %v4718 = vmul.f32 %v4646, %v4716
    %v4719 = vmul.f32 %v4647, %v4716
    %v4720 = vmul.f32 %v4648, %v4716
    %v4721 = vmul.f32 %v4649, %v4716
    %v4722 = vmul.f32 %v4650, %v4716
    %v4723 = vmul.f32 %v4651, %v4716
    %v4724 = vmul.f32 %v4652, %v4716
    %v4725 = vmul.f32 %v4653, %v4716
    %v4726 = vmul.f32 %v4654, %v4716
    %v4727 = vmul.f32 %v4655, %v4716
    %v4728 = vmul.f32 %v4656, %v4716
    %v4729 = vmul.f32 %v4657, %v4716
    %v4730 = vmul.f32 %v4658, %v4716
    %v4731 = vmul.f32 %v4659, %v4716
    %v4732 = vmul.f32 %v4660, %v4716
    %v4733 = vld [vmem:[%s8] sm:$0x1]
    %v4735 = vlaneseq
    %v4736 = vshrl.u32 %v4735, 7
    %v4737 = vsub.s32 0, %v4736
    %v4738 = vrot.slane %v4733, %v4737
    %v4740 = vmul.f32 %v4717, %v4738
    %v4741 = vmul.f32 %v4718, %v4738
    %v4742 = vmul.f32 %v4719, %v4738
    %v4743 = vmul.f32 %v4720, %v4738
    %v4744 = vmul.f32 %v4721, %v4738
    %v4745 = vmul.f32 %v4722, %v4738
    %v4746 = vmul.f32 %v4723, %v4738
    %v4747 = vmul.f32 %v4724, %v4738
    %v4748 = vmul.f32 %v4725, %v4738
    %v4749 = vmul.f32 %v4726, %v4738
    %v4750 = vmul.f32 %v4727, %v4738
    %v4751 = vmul.f32 %v4728, %v4738
    %v4752 = vmul.f32 %v4729, %v4738
    %v4753 = vmul.f32 %v4730, %v4738
    %v4754 = vmul.f32 %v4731, %v4738
    %v4755 = vmul.f32 %v4732, %v4738
    %v4756 = vld [vmem:[%s9] sm:$0x1]
    %v4758 = vlaneseq
    %v4759 = vshrl.u32 %v4758, 7
    %v4760 = vsub.s32 0, %v4759
    %v4761 = vrot.slane %v4756, %v4760
    %v4763 = vadd.f32 %v4740, %v4761
    %v4764 = vadd.f32 %v4741, %v4761
    %v4765 = vadd.f32 %v4742, %v4761
    %v4766 = vadd.f32 %v4743, %v4761
    %v4767 = vadd.f32 %v4744, %v4761
    %v4768 = vadd.f32 %v4745, %v4761
    %v4769 = vadd.f32 %v4746, %v4761
    %v4770 = vadd.f32 %v4747, %v4761
    %v4771 = vadd.f32 %v4748, %v4761
    %v4772 = vadd.f32 %v4749, %v4761
    %v4773 = vadd.f32 %v4750, %v4761
    %v4774 = vadd.f32 %v4751, %v4761
    %v4775 = vadd.f32 %v4752, %v4761
    %v4776 = vadd.f32 %v4753, %v4761
    %v4777 = vadd.f32 %v4754, %v4761
    %v4778 = vadd.f32 %v4755, %v4761
    %v4779 = vmax.f32 %v4763, 0.0
    %v4780 = vmax.f32 %v4764, 0.0
    %v4781 = vmax.f32 %v4765, 0.0
    %v4782 = vmax.f32 %v4766, 0.0
    %v4783 = vmax.f32 %v4767, 0.0
    %v4784 = vmax.f32 %v4768, 0.0
    %v4785 = vmax.f32 %v4769, 0.0
    %v4786 = vmax.f32 %v4770, 0.0
    %v4787 = vmax.f32 %v4771, 0.0
    %v4788 = vmax.f32 %v4772, 0.0
    %v4789 = vmax.f32 %v4773, 0.0
    %v4790 = vmax.f32 %v4774, 0.0
    %v4791 = vmax.f32 %v4775, 0.0
    %v4792 = vmax.f32 %v4776, 0.0
    %v4793 = vmax.f32 %v4777, 0.0
    %v4794 = vmax.f32 %v4778, 0.0
    %v4795 = vmul.f32 %v4779, %v4607
    %v4796 = vmul.f32 %v4780, %v4608
    %v4797 = vmul.f32 %v4781, %v4609
    %v4798 = vmul.f32 %v4782, %v4610
    %v4799 = vmul.f32 %v4783, %v4611
    %v4800 = vmul.f32 %v4784, %v4612
    %v4801 = vmul.f32 %v4785, %v4613
    %v4802 = vmul.f32 %v4786, %v4614
    %v4803 = vmul.f32 %v4787, %v4615
    %v4804 = vmul.f32 %v4788, %v4616
    %v4805 = vmul.f32 %v4789, %v4617
    %v4806 = vmul.f32 %v4790, %v4618
    %v4807 = vmul.f32 %v4791, %v4619
    %v4808 = vmul.f32 %v4792, %v4620
    %v4809 = vmul.f32 %v4793, %v4621
    %v4810 = vmul.f32 %v4794, %v4622
    %4811 = vxpose.xlu0.b32.start [1/16] %v4795, 128
    %4812 = vxpose.xlu0.b32.cont [2/16] %v4796, 128
    %4813 = vxpose.xlu0.b32.cont [3/16] %v4797, 128
    %4814 = vxpose.xlu0.b32.cont [4/16] %v4798, 128
    %4815 = vxpose.xlu0.b32.cont [5/16] %v4799, 128
    %4816 = vxpose.xlu0.b32.cont [6/16] %v4800, 128
    %4817 = vxpose.xlu0.b32.cont [7/16] %v4801, 128
    %4818 = vxpose.xlu0.b32.cont [8/16] %v4802, 128
    %4819 = vxpose.xlu0.b32.cont [9/16] %v4803, 128
    %4820 = vxpose.xlu0.b32.cont [10/16] %v4804, 128
    %4821 = vxpose.xlu0.b32.cont [11/16] %v4805, 128
    %4822 = vxpose.xlu0.b32.cont [12/16] %v4806, 128
    %4823 = vxpose.xlu0.b32.cont [13/16] %v4807, 128
    %4824 = vxpose.xlu0.b32.cont [14/16] %v4808, 128
    %4825 = vxpose.xlu0.b32.cont [15/16] %v4809, 128
    %4826 = vxpose.xlu0.b32.end [16/16] %v4810, 128
    %v4827 = vpop.trf.xlu0
    %v4828 = vpop.trf.xlu0
    %v4829 = vpop.trf.xlu0
    %v4830 = vpop.trf.xlu0
    %v4831 = vpop.trf.xlu0
    %v4832 = vpop.trf.xlu0
    %v4833 = vpop.trf.xlu0
    %v4834 = vpop.trf.xlu0
    %v4835 = vpop.trf.xlu0
    %v4836 = vpop.trf.xlu0
    %v4837 = vpop.trf.xlu0
    %v4838 = vpop.trf.xlu0
    %v4839 = vpop.trf.xlu0
    %v4840 = vpop.trf.xlu0
    %v4841 = vpop.trf.xlu0
    %v4842 = vpop.trf.xlu0
    %v4843 = vadd.f32 %v4795, %v4827
    %v4844 = vadd.f32 %v4796, %v4828
    %v4845 = vadd.f32 %v4797, %v4829
    %v4846 = vadd.f32 %v4798, %v4830
    %v4847 = vadd.f32 %v4799, %v4831
    %v4848 = vadd.f32 %v4800, %v4832
    %v4849 = vadd.f32 %v4801, %v4833
    %v4850 = vadd.f32 %v4802, %v4834
    %v4851 = vadd.f32 %v4803, %v4835
    %v4852 = vadd.f32 %v4804, %v4836
    %v4853 = vadd.f32 %v4805, %v4837
    %v4854 = vadd.f32 %v4806, %v4838
    %v4855 = vadd.f32 %v4807, %v4839
    %v4856 = vadd.f32 %v4808, %v4840
    %v4857 = vadd.f32 %v4809, %v4841
    %v4858 = vadd.f32 %v4810, %v4842
    %v4859 = vmul.f32 %v4843, 0.5
    %v4860 = vmul.f32 %v4844, 0.5
    %v4861 = vmul.f32 %v4845, 0.5
    %v4862 = vmul.f32 %v4846, 0.5
    %v4863 = vmul.f32 %v4847, 0.5
    %v4864 = vmul.f32 %v4848, 0.5
    %v4865 = vmul.f32 %v4849, 0.5
    %v4866 = vmul.f32 %v4850, 0.5
    %v4867 = vmul.f32 %v4851, 0.5
    %v4868 = vmul.f32 %v4852, 0.5
    %v4869 = vmul.f32 %v4853, 0.5
    %v4870 = vmul.f32 %v4854, 0.5
    %v4871 = vmul.f32 %v4855, 0.5
    %v4872 = vmul.f32 %v4856, 0.5
    %v4873 = vmul.f32 %v4857, 0.5
    %v4874 = vmul.f32 %v4858, 0.5
    %v4875 = vand.u32 2147483647, %v4859
    %v4876 = vand.u32 2147483647, %v4860
    %v4877 = vand.u32 2147483647, %v4861
    %v4878 = vand.u32 2147483647, %v4862
    %v4879 = vand.u32 2147483647, %v4863
    %v4880 = vand.u32 2147483647, %v4864
    %v4881 = vand.u32 2147483647, %v4865
    %v4882 = vand.u32 2147483647, %v4866
    %v4883 = vand.u32 2147483647, %v4867
    %v4884 = vand.u32 2147483647, %v4868
    %v4885 = vand.u32 2147483647, %v4869
    %v4886 = vand.u32 2147483647, %v4870
    %v4887 = vand.u32 2147483647, %v4871
    %v4888 = vand.u32 2147483647, %v4872
    %v4889 = vand.u32 2147483647, %v4873
    %v4890 = vand.u32 2147483647, %v4874
    %4891 = vadd.xlane.f32.xlu0 %v4875
    %v4892 = vpop.xlane.xlu0 %4891
    %4893 = vadd.xlane.f32.xlu0 %v4876
    %v4894 = vpop.xlane.xlu0 %4893
    %4895 = vadd.xlane.f32.xlu0 %v4877
    %v4896 = vpop.xlane.xlu0 %4895
    %4897 = vadd.xlane.f32.xlu0 %v4878
    %v4898 = vpop.xlane.xlu0 %4897
    %4899 = vadd.xlane.f32.xlu0 %v4879
    %v4900 = vpop.xlane.xlu0 %4899
    %4901 = vadd.xlane.f32.xlu0 %v4880
    %v4902 = vpop.xlane.xlu0 %4901
    %4903 = vadd.xlane.f32.xlu0 %v4881
    %v4904 = vpop.xlane.xlu0 %4903
    %4905 = vadd.xlane.f32.xlu0 %v4882
    %v4906 = vpop.xlane.xlu0 %4905
    %4907 = vadd.xlane.f32.xlu0 %v4883
    %v4908 = vpop.xlane.xlu0 %4907
    %4909 = vadd.xlane.f32.xlu0 %v4884
    %v4910 = vpop.xlane.xlu0 %4909
    %4911 = vadd.xlane.f32.xlu0 %v4885
    %v4912 = vpop.xlane.xlu0 %4911
    %4913 = vadd.xlane.f32.xlu0 %v4886
    %v4914 = vpop.xlane.xlu0 %4913
    %4915 = vadd.xlane.f32.xlu0 %v4887
    %v4916 = vpop.xlane.xlu0 %4915
    %4917 = vadd.xlane.f32.xlu0 %v4888
    %v4918 = vpop.xlane.xlu0 %4917
    %4919 = vadd.xlane.f32.xlu0 %v4889
    %v4920 = vpop.xlane.xlu0 %4919
    %4921 = vadd.xlane.f32.xlu0 %v4890
    %v4922 = vpop.xlane.xlu0 %4921
    %v4923 = vadd.f32 %v4892, %v4894
    %v4924 = vadd.f32 %v4923, %v4896
    %v4925 = vadd.f32 %v4924, %v4898
    %v4926 = vadd.f32 %v4925, %v4900
    %v4927 = vadd.f32 %v4926, %v4902
    %v4928 = vadd.f32 %v4927, %v4904
    %v4929 = vadd.f32 %v4928, %v4906
    %v4930 = vadd.f32 %v4929, %v4908
    %v4931 = vadd.f32 %v4930, %v4910
    %v4932 = vadd.f32 %v4931, %v4912
    %v4933 = vadd.f32 %v4932, %v4914
    %v4934 = vadd.f32 %v4933, %v4916
    %v4935 = vadd.f32 %v4934, %v4918
    %v4936 = vadd.f32 %v4935, %v4920
    %v4937 = vadd.f32 %v4936, %v4922
    %v4938 = vrot.slane %v4937, 4
    %v4939 = vadd.f32 %v4937, %v4938
    %v4940 = vrot.slane %v4939, 2
    %v4941 = vadd.f32 %v4939, %v4940
    %v4942 = vrot.slane %v4941, 1
    %v4943 = vadd.f32 %v4941, %v4942
    %v4944 = vmul.f32 %v4943, 0.00862069
    %vm4945 = vcmask 0
    %4946 = vst.msk [vmem:[#allocation7] sm:$0x1] %vm4945, %v4944
    %v4947 = vmul.f32 %v4859, %v4353
    %v4948 = vmul.f32 %v4860, %v4354
    %v4949 = vmul.f32 %v4861, %v4355
    %v4950 = vmul.f32 %v4862, %v4356
    %v4951 = vmul.f32 %v4863, %v4357
    %v4952 = vmul.f32 %v4864, %v4358
    %v4953 = vmul.f32 %v4865, %v4359
    %v4954 = vmul.f32 %v4866, %v4360
    %v4955 = vmul.f32 %v4867, %v4361
    %v4956 = vmul.f32 %v4868, %v4362
    %v4957 = vmul.f32 %v4869, %v4363
    %v4958 = vmul.f32 %v4870, %v4364
    %v4959 = vmul.f32 %v4871, %v4365
    %v4960 = vmul.f32 %v4872, %v4366
    %v4961 = vmul.f32 %v4873, %v4367
    %v4962 = vmul.f32 %v4874, %v4368
    %v4963 = vmul.f32 %v4859, %v4369
    %v4964 = vmul.f32 %v4860, %v4370
    %v4965 = vmul.f32 %v4861, %v4371
    %v4966 = vmul.f32 %v4862, %v4372
    %v4967 = vmul.f32 %v4863, %v4373
    %v4968 = vmul.f32 %v4864, %v4374
    %v4969 = vmul.f32 %v4865, %v4375
    %v4970 = vmul.f32 %v4866, %v4376
    %v4971 = vmul.f32 %v4867, %v4377
    %v4972 = vmul.f32 %v4868, %v4378
    %v4973 = vmul.f32 %v4869, %v4379
    %v4974 = vmul.f32 %v4870, %v4380
    %v4975 = vmul.f32 %v4871, %v4381
    %v4976 = vmul.f32 %v4872, %v4382
    %v4977 = vmul.f32 %v4873, %v4383
    %v4978 = vmul.f32 %v4874, %v4384
    %4979 = vst [vmem:[%s10] sm:$0xff] %v4947
    %4980 = vst [vmem:[%s10 + $0x8] sm:$0xff] %v4948
    %4981 = vst [vmem:[%s10 + $0x10] sm:$0xff] %v4949
    %4982 = vst [vmem:[%s10 + $0x18] sm:$0xff] %v4950
    %4983 = vst [vmem:[%s10 + $0x20] sm:$0xff] %v4951
    %4984 = vst [vmem:[%s10 + $0x28] sm:$0xff] %v4952
    %4985 = vst [vmem:[%s10 + $0x30] sm:$0xff] %v4953
    %4986 = vst [vmem:[%s10 + $0x38] sm:$0xff] %v4954
    %4987 = vst [vmem:[%s10 + $0x40] sm:$0xff] %v4955
    %4988 = vst [vmem:[%s10 + $0x48] sm:$0xff] %v4956
    %4989 = vst [vmem:[%s10 + $0x50] sm:$0xff] %v4957
    %4990 = vst [vmem:[%s10 + $0x58] sm:$0xff] %v4958
    %4991 = vst [vmem:[%s10 + $0x60] sm:$0xff] %v4959
    %4992 = vst [vmem:[%s10 + $0x68] sm:$0xff] %v4960
    %4993 = vst [vmem:[%s10 + $0x70] sm:$0xff] %v4961
    %4994 = vst [vmem:[%s10 + $0x78] sm:$0xff] %v4962
    %4995 = vst [vmem:[%s10 + $0x80] sm:$0xff] %v4963
    %4996 = vst [vmem:[%s10 + $0x88] sm:$0xff] %v4964
    %4997 = vst [vmem:[%s10 + $0x90] sm:$0xff] %v4965
    %4998 = vst [vmem:[%s10 + $0x98] sm:$0xff] %v4966
    %4999 = vst [vmem:[%s10 + $0xa0] sm:$0xff] %v4967
    %5000 = vst [vmem:[%s10 + $0xa8] sm:$0xff] %v4968
    %5001 = vst [vmem:[%s10 + $0xb0] sm:$0xff] %v4969
    %5002 = vst [vmem:[%s10 + $0xb8] sm:$0xff] %v4970
    %5003 = vst [vmem:[%s10 + $0xc0] sm:$0xff] %v4971
    %5004 = vst [vmem:[%s10 + $0xc8] sm:$0xff] %v4972
    %5005 = vst [vmem:[%s10 + $0xd0] sm:$0xff] %v4973
    %5006 = vst [vmem:[%s10 + $0xd8] sm:$0xff] %v4974
    %5007 = vst [vmem:[%s10 + $0xe0] sm:$0xff] %v4975
    %5008 = vst [vmem:[%s10 + $0xe8] sm:$0xff] %v4976
    %5009 = vst [vmem:[%s10 + $0xf0] sm:$0xff] %v4977
    %5010 = vst [vmem:[%s10 + $0xf8] sm:$0xff] %v4978
    // Predicated region
    $region50: #{sigcnn_forward.1} parent=1 // pred_check
      _
    $region51: #{sigcnn_forward.1} parent=1 // pred_check_branch
      %5012 = sbr.rel (0) target = $region53
    $region52: #{sigcnn_forward.1} parent=1 // pred_region
      _
    $region53: #{sigcnn_forward.1} parent=1 // pred_fallthru
      _
    // Predicated region
    $region54: #{sigcnn_forward.1} parent=1 // pred_check
      _
    $region55: #{sigcnn_forward.1} parent=1 // pred_check_branch
      %5014 = sbr.rel (0) target = $region57
    $region56: #{sigcnn_forward.1} parent=1 // pred_region
      %s5016 = ssub.s32 16, 16
      %5017 = vsyncadd [#allocation4], %s5016
      %s5019 = sshll.u32 [#allocation7], 4
      %s5020 = int_to_ptr.vmem [resolvable:$true] %s5019
      %5022 = dma.vmem_to_hbm [thread:$0]  %s5020, 16, %s11, [#allocation4]
    $region57: #{sigcnn_forward.1} parent=1 // pred_fallthru
      _
    // Predicated region
    $region58: #{sigcnn_forward.1} parent=1 // pred_check
      _
    $region59: #{sigcnn_forward.1} parent=1 // pred_check_branch
      %5024 = sbr.rel (0) target = $region61
    $region60: #{sigcnn_forward.1} parent=1 // pred_region
      _
    $region61: #{sigcnn_forward.1} parent=1 // pred_fallthru
      _
    // Predicated region
    $region62: #{sigcnn_forward.1} parent=1 // pred_check
      _
    $region63: #{sigcnn_forward.1} parent=1 // pred_check_branch
      %5026 = sbr.rel (0) target = $region65
    $region64: #{sigcnn_forward.1} parent=1 // pred_region
      %5027 = dma.done [#allocation4], 16
    $region65: #{sigcnn_forward.1} parent=1 // pred_fallthru
      _
    %5028 = vsyncpa [#allocation3], 1
    %5029 = vsyncpa [#allocation6], 1
    %5030 = vsyncpa [#allocation4], 1

</llo_original>
